<compile_context>
chip_gen: v5e
topology: v5e:2x2
jax: 0.10.0
libtpu: 0.0.40
codegen_flags: <defaults>
</compile_context>

<pallas_src>
import functools
import math

import jax
import jax.numpy as jnp
from jax.experimental import pallas as pl
from jax.experimental.pallas import tpu as pltpu

EPS = 1e-5                      # torch.nn.LayerNorm default
MXU_DTYPE = jnp.bfloat16        # MXU operand dtype (f32 accumulation kept)


# ---------------------------------------------------------------------------
# Tile-size helpers (keep tiles modest so they also fit v7x's smaller VMEM,
# satisfy the (8, 128) block constraints, and leave K un-tiled unless it
# divides evenly -- partial K tiles would pollute the accumulator).
# ---------------------------------------------------------------------------

def _choose_tm(M, cap=256):
    return M if M <= cap else cap          # cap is a multiple of 8


def _choose_tn(N, cap=512):
    return N if N <= cap else cap          # cap is a multiple of 128


def _choose_tk(K, cap=512):
    if K <= cap:
        return K
    for tk in (512, 384, 256, 128):
        if K % tk == 0:
            return tk
    return K                               # fall back to whole-K resident


# ---------------------------------------------------------------------------
# Tiled linear (matmul + bias [+ GELU] [+ residual])
# ---------------------------------------------------------------------------

def _linear_kernel(*refs, activation, has_residual):
    if has_residual:
        x_ref, w_ref, b_ref, res_ref, o_ref, acc_ref = refs
    else:
        x_ref, w_ref, b_ref, o_ref, acc_ref = refs
        res_ref = None
    k = pl.program_id(2)

    @pl.when(k == 0)
    def _init():
        acc_ref[...] = jnp.zeros_like(acc_ref)

    acc_ref[...] += jnp.dot(x_ref[...].astype(MXU_DTYPE),
                            w_ref[...].astype(MXU_DTYPE),
                            preferred_element_type=jnp.float32)

    @pl.when(k == pl.num_programs(2) - 1)
    def _finish():
        y = acc_ref[...] + b_ref[...].astype(jnp.float32)
        if activation == "gelu":
            # exact (erf) GELU, matching torch.nn.GELU() default
            y = 0.5 * y * (1.0 + jax.lax.erf(y * (1.0 / math.sqrt(2.0))))
        if res_ref is not None:
            y = y + res_ref[...].astype(jnp.float32)
        o_ref[...] = y.astype(o_ref.dtype)


def linear(x2d, w, b=None, activation=None, residual=None):
    """y = activation(x2d @ w + b) [+ residual]; x2d: (M,K), w: (K,N)."""
    M, K = x2d.shape
    N = w.shape[1]
    if b is None:
        b = jnp.zeros((N,), x2d.dtype)
    TM, TN, TK = _choose_tm(M), _choose_tn(N), _choose_tk(K)
    grid = (pl.cdiv(M, TM), pl.cdiv(N, TN), K // TK)

    in_specs = [
        pl.BlockSpec((TM, TK), lambda i, j, k: (i, k)),
        pl.BlockSpec((TK, TN), lambda i, j, k: (k, j)),
        pl.BlockSpec((1, TN), lambda i, j, k: (0, j)),
    ]
    args = [x2d, w, b.reshape(1, N)]
    if residual is not None:
        in_specs.append(pl.BlockSpec((TM, TN), lambda i, j, k: (i, j)))
        args.append(residual)

    bytes_accessed = 4 * (M * K + K * N + M * N)
    if residual is not None:
        bytes_accessed += 4 * M * N

    return pl.pallas_call(
        functools.partial(_linear_kernel, activation=activation,
                          has_residual=residual is not None),
        grid=grid,
        in_specs=in_specs,
        out_specs=pl.BlockSpec((TM, TN), lambda i, j, k: (i, j)),
        out_shape=jax.ShapeDtypeStruct((M, N), x2d.dtype),
        scratch_shapes=[pltpu.VMEM((TM, TN), jnp.float32)],
        compiler_params=pltpu.CompilerParams(
            dimension_semantics=("parallel", "parallel", "arbitrary")),
        cost_estimate=pl.CostEstimate(
            flops=2 * M * K * N,
            transcendentals=(M * N if activation == "gelu" else 0),
            bytes_accessed=bytes_accessed),
    )(*args)


# ---------------------------------------------------------------------------
# Fused LayerNorm + linear (LN statistics in f32, feature dim resident)
# ---------------------------------------------------------------------------

def _ln_linear_kernel(x_ref, g_ref, b_ref, w_ref, bias_ref, o_ref, *, activation):
    x = x_ref[...].astype(jnp.float32)
    mean = jnp.mean(x, axis=-1, keepdims=True)
    var = jnp.mean(jnp.square(x - mean), axis=-1, keepdims=True)
    xn = (x - mean) * jax.lax.rsqrt(var + EPS)
    xn = xn * g_ref[...].astype(jnp.float32) + b_ref[...].astype(jnp.float32)
    y = jnp.dot(xn.astype(MXU_DTYPE), w_ref[...].astype(MXU_DTYPE),
                preferred_element_type=jnp.float32)
    y = y + bias_ref[...].astype(jnp.float32)
    if activation == "gelu":
        y = 0.5 * y * (1.0 + jax.lax.erf(y * (1.0 / math.sqrt(2.0))))
    o_ref[...] = y.astype(o_ref.dtype)


def ln_linear(x2d, g, b, w, bias=None, activation=None):
    """y = activation(LayerNorm(x2d) @ w + bias); x2d: (M,D), w: (D,N)."""
    M, D = x2d.shape
    N = w.shape[1]
    if bias is None:
        bias = jnp.zeros((N,), x2d.dtype)
    TM, TN = _choose_tm(M), _choose_tn(N)
    grid = (pl.cdiv(M, TM), pl.cdiv(N, TN))
    return pl.pallas_call(
        functools.partial(_ln_linear_kernel, activation=activation),
        grid=grid,
        in_specs=[
            pl.BlockSpec((TM, D), lambda i, j: (i, 0)),
            pl.BlockSpec((1, D), lambda i, j: (0, 0)),
            pl.BlockSpec((1, D), lambda i, j: (0, 0)),
            pl.BlockSpec((D, TN), lambda i, j: (0, j)),
            pl.BlockSpec((1, TN), lambda i, j: (0, j)),
        ],
        out_specs=pl.BlockSpec((TM, TN), lambda i, j: (i, j)),
        out_shape=jax.ShapeDtypeStruct((M, N), x2d.dtype),
        compiler_params=pltpu.CompilerParams(
            dimension_semantics=("parallel", "parallel")),
        cost_estimate=pl.CostEstimate(
            flops=2 * M * D * N,
            transcendentals=(M * N if activation == "gelu" else 0),
            bytes_accessed=4 * (M * D + D * N + M * N)),
    )(x2d, g.reshape(1, D), b.reshape(1, D), w, bias.reshape(1, N))


# ---------------------------------------------------------------------------
# Row-tiled LayerNorm (final transformer norm)
# ---------------------------------------------------------------------------

def _layernorm_kernel(x_ref, g_ref, b_ref, o_ref):
    x = x_ref[...].astype(jnp.float32)
    mean = jnp.mean(x, axis=-1, keepdims=True)
    var = jnp.mean(jnp.square(x - mean), axis=-1, keepdims=True)
    xn = (x - mean) * jax.lax.rsqrt(var + EPS)
    o_ref[...] = (xn * g_ref[...].astype(jnp.float32)
                  + b_ref[...].astype(jnp.float32)).astype(o_ref.dtype)


def layernorm(x2d, g, b):
    M, D = x2d.shape
    TM = M if M <= 1024 else 1024
    return pl.pallas_call(
        _layernorm_kernel,
        grid=(pl.cdiv(M, TM),),
        in_specs=[pl.BlockSpec((TM, D), lambda i: (i, 0)),
                  pl.BlockSpec((1, D), lambda i: (0, 0)),
                  pl.BlockSpec((1, D), lambda i: (0, 0))],
        out_specs=pl.BlockSpec((TM, D), lambda i: (i, 0)),
        out_shape=jax.ShapeDtypeStruct((M, D), x2d.dtype),
        compiler_params=pltpu.CompilerParams(dimension_semantics=("parallel",)),
    )(x2d, g.reshape(1, D), b.reshape(1, D))


# ---------------------------------------------------------------------------
# Fused multi-head attention core + output projection + residual
#   one grid step per (batch*frame); all heads handled inside the step.
# ---------------------------------------------------------------------------

def _attn_kernel(qkv_ref, wo_ref, bo_ref, res_ref, o_ref, *, heads, dim_head, scale):
    inner = heads * dim_head
    qkv = qkv_ref[0]                   # (N, 3*inner), layout [q|k|v] per head
    wo = wo_ref[...]                   # (heads, dim_head, D)
    # start the lane-dense accumulator with residual + output-proj bias
    y = res_ref[0].astype(jnp.float32) + bo_ref[...].astype(jnp.float32)  # (N, D)
    for h in range(heads):             # static unroll; all heads in one step
        q = qkv[:, h * dim_head:(h + 1) * dim_head].astype(jnp.float32) * scale
        k = qkv[:, inner + h * dim_head: inner + (h + 1) * dim_head]
        v = qkv[:, 2 * inner + h * dim_head: 2 * inner + (h + 1) * dim_head]
        # scores = (q*scale) @ k^T without materializing the transpose
        s = jax.lax.dot_general(q.astype(MXU_DTYPE), k.astype(MXU_DTYPE),
                                (((1,), (1,)), ((), ())),
                                preferred_element_type=jnp.float32)   # (N, N)
        s = s - jnp.max(s, axis=-1, keepdims=True)                    # stable
        p = jnp.exp(s)
        p = p * pl.reciprocal(jnp.sum(p, axis=-1, keepdims=True), approx=True)
        o_h = jnp.dot(p.astype(MXU_DTYPE), v.astype(MXU_DTYPE),
                      preferred_element_type=jnp.float32)             # (N, Dh)
        # fused output projection: out @ W_out == sum_h o_h @ W_out[h]
        y = y + jnp.dot(o_h.astype(MXU_DTYPE), wo[h].astype(MXU_DTYPE),
                        preferred_element_type=jnp.float32)           # (N, D)
    o_ref[0] = y.astype(o_ref.dtype)


def attention_fused(qkv, w_out, b_out, x_res, heads, dim_head):
    """qkv: (B, N, 3*inner); returns attention-block output incl. residual."""
    B, N, D = x_res.shape
    inner = heads * dim_head
    wo3 = w_out.reshape(heads, dim_head, D)          # free reshape (row-major)
    scale = dim_head ** -0.5
    return pl.pallas_call(
        functools.partial(_attn_kernel, heads=heads, dim_head=dim_head,
                          scale=scale),
        grid=(B,),
        in_specs=[
            pl.BlockSpec((1, N, 3 * inner), lambda bi: (bi, 0, 0)),
            pl.BlockSpec((heads, dim_head, D), lambda bi: (0, 0, 0)),
            pl.BlockSpec((1, D), lambda bi: (0, 0)),
            pl.BlockSpec((1, N, D), lambda bi: (bi, 0, 0)),
        ],
        out_specs=pl.BlockSpec((1, N, D), lambda bi: (bi, 0, 0)),
        out_shape=jax.ShapeDtypeStruct((B, N, D), x_res.dtype),
        compiler_params=pltpu.CompilerParams(dimension_semantics=("parallel",)),
        cost_estimate=pl.CostEstimate(
            flops=2 * B * heads * (2 * N * N * dim_head + N * dim_head * D),
            transcendentals=B * heads * N * N,
            bytes_accessed=4 * B * N * (3 * inner + 2 * D)),
    )(qkv, wo3, b_out.reshape(1, D), x_res)


# ---------------------------------------------------------------------------
# Transformer blocks (glue around the kernels)
# ---------------------------------------------------------------------------

def attention_block(x, p, heads, dim_head):
    B, N, D = x.shape
    inner = heads * dim_head
    # fused LN -> qkv projection (to_qkv has no bias)
    qkv = ln_linear(x.reshape(B * N, D), p["ln_g"], p["ln_b"], p["w_qkv"])
    # fused attention core + out-proj + bias + residual
    return attention_fused(qkv.reshape(B, N, 3 * inner),
                           p["w_out"], p["b_out"], x, heads, dim_head)


def ff_block(x, p):
    B, N, D = x.shape
    h = ln_linear(x.reshape(B * N, D), p["ln_g"], p["ln_b"], p["w1"], p["b1"],
                  activation="gelu")
    o = linear(h, p["w2"], p["b2"], residual=x.reshape(B * N, D))
    return o.reshape(B, N, D)


def transformer(x, params, heads, dim_head):
    for layer in params["layers"]:
        x = attention_block(x, layer["attn"], heads, dim_head)   # residual fused
        x = ff_block(x, layer["ff"])                             # residual fused
    B, N, D = x.shape
    return layernorm(x.reshape(B * N, D),
                     params["norm_g"], params["norm_b"]).reshape(B, N, D)


# ---------------------------------------------------------------------------
# ViViT
# ---------------------------------------------------------------------------

def patch_rearrange(x, p):
    # 'b t c (h p1) (w p2) -> b t (h w) (p1 p2 c)'
    b, t, c, H, W = x.shape
    h, w = H // p, W // p
    x = x.reshape(b, t, c, h, p, w, p)
    x = x.transpose(0, 1, 3, 5, 4, 6, 2)          # b t h w p1 p2 c
    return x.reshape(b, t, h * w, p * p * c)


def vivit_forward(x, params, cfg):
    b, t = x.shape[0], x.shape[1]
    D = cfg["dim"]
    xp = patch_rearrange(x, cfg["patch_size"])                 # (b, t, n, patch_dim)
    n = xp.shape[2]
    xe = linear(xp.reshape(-1, xp.shape[-1]),
                params["patch_w"], params["patch_b"]).reshape(b, t, n, D)

    cls_space = jnp.broadcast_to(params["space_token"].reshape(1, 1, 1, D),
                                 (b, t, 1, D))
    xe = jnp.concatenate([cls_space, xe], axis=2)
    xe = xe + params["pos_embedding"][:, :, : n + 1]
    # emb_dropout = 0.0 -> identity

    xs = xe.reshape(b * t, n + 1, D)
    xs = transformer(xs, params["space_tf"], cfg["heads"], cfg["dim_head"])

    xcls = xs[:, 0].reshape(b, t, D)
    cls_temp = jnp.broadcast_to(params["temporal_token"].reshape(1, 1, D), (b, 1, D))
    xt = jnp.concatenate([cls_temp, xcls], axis=1)
    xt = transformer(xt, params["temporal_tf"], cfg["heads"], cfg["dim_head"])

    pooled = jnp.mean(xt, axis=1) if cfg["pool"] == "mean" else xt[:, 0]   # (b, D)
    # mlp_head = LayerNorm + Linear, fused into one kernel
    return ln_linear(pooled, params["head_ln_g"], params["head_ln_b"],
                     params["head_w"], params["head_b"])                   # (b, classes)


# ---------------------------------------------------------------------------
# Deterministic parameter init (synthetic; not a checkpoint load)
# ---------------------------------------------------------------------------

def _init_transformer(key, dim, depth, heads, dim_head, mlp_dim):
    inner = heads * dim_head
    layers = []
    for _ in range(depth):
        key, k0, k1, k2, k3 = jax.random.split(key, 5)
        layers.append({
            "attn": {
                "ln_g": jnp.ones((dim,), jnp.float32),
                "ln_b": jnp.zeros((dim,), jnp.float32),
                "w_qkv": 0.02 * jax.random.normal(k0, (dim, inner * 3), jnp.float32),
                "w_out": 0.02 * jax.random.normal(k1, (inner, dim), jnp.float32),
                "b_out": jnp.zeros((dim,), jnp.float32),
            },
            "ff": {
                "ln_g": jnp.ones((dim,), jnp.float32),
                "ln_b": jnp.zeros((dim,), jnp.float32),
                "w1": 0.02 * jax.random.normal(k2, (dim, mlp_dim), jnp.float32),
                "b1": jnp.zeros((mlp_dim,), jnp.float32),
                "w2": 0.02 * jax.random.normal(k3, (mlp_dim, dim), jnp.float32),
                "b2": jnp.zeros((dim,), jnp.float32),
            },
        })
    tf = {"layers": layers,
          "norm_g": jnp.ones((dim,), jnp.float32),
          "norm_b": jnp.zeros((dim,), jnp.float32)}
    return tf, key


def init_vivit_params(key, cfg):
    dim = cfg["dim"]
    num_patches = (cfg["image_size"] // cfg["patch_size"]) ** 2
    patch_dim = cfg["in_channels"] * cfg["patch_size"] ** 2
    mlp_dim = dim * cfg["scale_dim"]

    key, k0, k1, k2, k3, k4 = jax.random.split(key, 6)
    space_tf, key = _init_transformer(key, dim, cfg["depth"], cfg["heads"],
                                      cfg["dim_head"], mlp_dim)
    temporal_tf, key = _init_transformer(key, dim, cfg["depth"], cfg["heads"],
                                         cfg["dim_head"], mlp_dim)
    return {
        "patch_w": 0.02 * jax.random.normal(k0, (patch_dim, dim), jnp.float32),
        "patch_b": jnp.zeros((dim,), jnp.float32),
        "pos_embedding": 0.02 * jax.random.normal(
            k1, (1, cfg["num_frames"], num_patches + 1, dim), jnp.float32),
        "space_token": 0.02 * jax.random.normal(k2, (1, 1, dim), jnp.float32),
        "temporal_token": 0.02 * jax.random.normal(k3, (1, 1, dim), jnp.float32),
        "space_tf": space_tf,
        "temporal_tf": temporal_tf,
        "head_ln_g": jnp.ones((dim,), jnp.float32),
        "head_ln_b": jnp.zeros((dim,), jnp.float32),
        "head_w": 0.02 * jax.random.normal(k4, (dim, cfg["num_classes"]), jnp.float32),
        "head_b": jnp.zeros((cfg["num_classes"],), jnp.float32),
    }


# ---------------------------------------------------------------------------

if __name__ == "__main__":
    cfg = dict(image_size=16, patch_size=8, num_classes=5, num_frames=4,
               dim=32, depth=2, heads=2, dim_head=16, scale_dim=2,
               in_channels=3, pool="cls")

    key = jax.random.PRNGKey(0)
    key, kx, kp = jax.random.split(key, 3)
    # (b, t, c, H, W)
    x = jax.random.normal(kx, (2, cfg["num_frames"], cfg["in_channels"],
                               cfg["image_size"], cfg["image_size"]), jnp.float32)
    params = init_vivit_params(kp, cfg)

    fwd = jax.jit(lambda xx, pp: vivit_forward(xx, pp, cfg))
    out = fwd(x, params)
    out = jax.block_until_ready(out)
    assert out.shape == (2, cfg["num_classes"]), out.shape
    assert bool(jnp.all(jnp.isfinite(out)))
    print("KERNEL_OK")
</pallas_src>

<mosaic_0001>
module attributes {stable_mosaic.version = 11 : i64} {
  func.func @_linear_kernel(%arg0: i32, %arg1: i32, %arg2: i32, %arg3: memref<32x192xf32, #tpu.memory_space<vmem>>, %arg4: memref<192x32xf32, #tpu.memory_space<vmem>>, %arg5: memref<1x32xf32, #tpu.memory_space<vmem>>, %arg6: memref<32x32xf32, #tpu.memory_space<vmem>>, %arg7: memref<32x32xf32, #tpu.memory_space<vmem>>) attributes {dimension_semantics = [#tpu.dimension_semantics<parallel>, #tpu.dimension_semantics<parallel>, #tpu.dimension_semantics<arbitrary>], iteration_bounds = array<i64: 1, 1, 1>, scalar_prefetch = 0 : i64, scratch_operands = 1 : i64, tpu.core_type = #tpu.core_type<tc>, window_params = [{transform_indices = @transform_0, window_bounds = array<i64: 32, 192>}, {transform_indices = @transform_1, window_bounds = array<i64: 192, 32>}, {transform_indices = @transform_2, window_bounds = array<i64: 1, 32>}, {transform_indices = @transform_3, window_bounds = array<i64: 32, 32>}]} {
    %c0_i32 = arith.constant 0 : i32
    %0 = arith.cmpi eq, %arg2, %c0_i32 : i32
    %1 = arith.extui %0 : i1 to i32
    %c0_i32_0 = arith.constant 0 : i32
    %2 = arith.cmpi ne, %1, %c0_i32_0 : i32
    scf.if %2 {
      %cst_10 = arith.constant 0.000000e+00 : f32
      %14 = vector.broadcast %cst_10 : f32 to vector<32x32xf32>
      %c0_11 = arith.constant 0 : index
      %c0_12 = arith.constant 0 : index
      %15 = vector.load %arg7[%c0_11, %c0_12] : memref<32x32xf32, #tpu.memory_space<vmem>>, vector<32x32xf32>
      tpu.vector_store %arg7[%c0_11, %c0_12], %14 {strides = array<i32>} : memref<32x32xf32, #tpu.memory_space<vmem>>, vector<32x32xf32>,
    } else {
    }
    %c0 = arith.constant 0 : index
    %c0_1 = arith.constant 0 : index
    %3 = vector.load %arg7[%c0, %c0_1] : memref<32x32xf32, #tpu.memory_space<vmem>>, vector<32x32xf32>
    %c0_2 = arith.constant 0 : index
    %c0_3 = arith.constant 0 : index
    %4 = vector.load %arg3[%c0_2, %c0_3] : memref<32x192xf32, #tpu.memory_space<vmem>>, vector<32x192xf32>
    %5 = arith.truncf %4 : vector<32x192xf32> to vector<32x192xbf16>
    %c0_4 = arith.constant 0 : index
    %c0_5 = arith.constant 0 : index
    %6 = vector.load %arg4[%c0_4, %c0_5] : memref<192x32xf32, #tpu.memory_space<vmem>>, vector<192x32xf32>
    %7 = arith.truncf %6 : vector<192x32xf32> to vector<192x32xbf16>
    %cst = arith.constant dense<0.000000e+00> : vector<32x32xf32>
    %8 = tpu.matmul %5, %7, %cst {dimension_numbers = #tpu.dot_dimension_numbers<[1], [0], [0], [1], [0, 0, 1, 1], [], []>} : vector<32x192xbf16>, vector<192x32xbf16>, vector<32x32xf32> -> vector<32x32xf32>
    %9 = arith.addf %3, %8 : vector<32x32xf32>
    %c0_6 = arith.constant 0 : index
    %c0_7 = arith.constant 0 : index
    %10 = vector.load %arg7[%c0_6, %c0_7] : memref<32x32xf32, #tpu.memory_space<vmem>>, vector<32x32xf32>
    tpu.vector_store %arg7[%c0_6, %c0_7], %9 {strides = array<i32>} : memref<32x32xf32, #tpu.memory_space<vmem>>, vector<32x32xf32>,
    %c0_i32_8 = arith.constant 0 : i32
    %11 = arith.cmpi eq, %arg2, %c0_i32_8 : i32
    %12 = arith.extui %11 : i1 to i32
    %c0_i32_9 = arith.constant 0 : i32
    %13 = arith.cmpi ne, %12, %c0_i32_9 : i32
    scf.if %13 {
      %c0_10 = arith.constant 0 : index
      %c0_11 = arith.constant 0 : index
      %14 = vector.load %arg7[%c0_10, %c0_11] : memref<32x32xf32, #tpu.memory_space<vmem>>, vector<32x32xf32>
      %c0_12 = arith.constant 0 : index
      %c0_13 = arith.constant 0 : index
      %15 = vector.load %arg5[%c0_12, %c0_13] : memref<1x32xf32, #tpu.memory_space<vmem>>, vector<1x32xf32>
      %16 = vector.broadcast %15 : vector<1x32xf32> to vector<32x32xf32>
      %17 = arith.addf %14, %16 : vector<32x32xf32>
      %c0_14 = arith.constant 0 : index
      %c0_15 = arith.constant 0 : index
      %18 = vector.load %arg6[%c0_14, %c0_15] : memref<32x32xf32, #tpu.memory_space<vmem>>, vector<32x32xf32>
      tpu.vector_store %arg6[%c0_14, %c0_15], %17 {strides = array<i32>} : memref<32x32xf32, #tpu.memory_space<vmem>>, vector<32x32xf32>,
    } else {
    }
    return
  }
  func.func @transform_0(%arg0: i32, %arg1: i32, %arg2: i32) -> (i32, i32) {
    %c0_i32 = arith.constant 0 : i32
    return %arg0, %arg2 : i32, i32
  }
  func.func @transform_1(%arg0: i32, %arg1: i32, %arg2: i32) -> (i32, i32) {
    %c0_i32 = arith.constant 0 : i32
    return %arg2, %arg1 : i32, i32
  }
  func.func @transform_2(%arg0: i32, %arg1: i32, %arg2: i32) -> (i32, i32) {
    %c0_i32 = arith.constant 0 : i32
    %c0_i32_0 = arith.constant 0 : i32
    return %c0_i32, %arg1 : i32, i32
  }
  func.func @transform_3(%arg0: i32, %arg1: i32, %arg2: i32) -> (i32, i32) {
    %c0_i32 = arith.constant 0 : i32
    return %arg0, %arg1 : i32, i32
  }
}

module attributes {stable_mosaic.version = 11 : i64} {
  func.func @_ln_linear_kernel(%arg0: i32, %arg1: i32, %arg2: memref<40x32xf32, #tpu.memory_space<vmem>>, %arg3: memref<1x32xf32, #tpu.memory_space<vmem>>, %arg4: memref<1x32xf32, #tpu.memory_space<vmem>>, %arg5: memref<32x96xf32, #tpu.memory_space<vmem>>, %arg6: memref<1x96xf32, #tpu.memory_space<vmem>>, %arg7: memref<40x96xf32, #tpu.memory_space<vmem>>) attributes {dimension_semantics = [#tpu.dimension_semantics<parallel>, #tpu.dimension_semantics<parallel>], iteration_bounds = array<i64: 1, 1>, scalar_prefetch = 0 : i64, scratch_operands = 0 : i64, tpu.core_type = #tpu.core_type<tc>, window_params = [{transform_indices = @transform_0, window_bounds = array<i64: 40, 32>}, {pipeline_mode = #tpu.pipeline_mode<synchronous>, transform_indices = @transform_1, window_bounds = array<i64: 1, 32>}, {pipeline_mode = #tpu.pipeline_mode<synchronous>, transform_indices = @transform_2, window_bounds = array<i64: 1, 32>}, {transform_indices = @transform_3, window_bounds = array<i64: 32, 96>}, {transform_indices = @transform_4, window_bounds = array<i64: 1, 96>}, {transform_indices = @transform_5, window_bounds = array<i64: 40, 96>}]} {
    %c0 = arith.constant 0 : index
    %c0_0 = arith.constant 0 : index
    %0 = vector.load %arg2[%c0, %c0_0] : memref<40x32xf32, #tpu.memory_space<vmem>>, vector<40x32xf32>
    %cst = arith.constant dense<0.000000e+00> : vector<40xf32>
    %1 = vector.multi_reduction <add>, %0, %cst [1] : vector<40x32xf32> to vector<40xf32>
    %2 = vector.shape_cast %1 : vector<40xf32> to vector<40x1xf32>
    %cst_1 = arith.constant 3.200000e+01 : f32
    %3 = vector.broadcast %cst_1 : f32 to vector<40x1xf32>
    %4 = arith.divf %2, %3 : vector<40x1xf32>
    %5 = vector.broadcast %4 : vector<40x1xf32> to vector<40x32xf32>
    %6 = arith.subf %0, %5 : vector<40x32xf32>
    %7 = arith.mulf %6, %6 : vector<40x32xf32>
    %cst_2 = arith.constant dense<0.000000e+00> : vector<40xf32>
    %8 = vector.multi_reduction <add>, %7, %cst_2 [1] : vector<40x32xf32> to vector<40xf32>
    %9 = vector.shape_cast %8 : vector<40xf32> to vector<40x1xf32>
    %cst_3 = arith.constant 3.200000e+01 : f32
    %10 = vector.broadcast %cst_3 : f32 to vector<40x1xf32>
    %11 = arith.divf %9, %10 : vector<40x1xf32>
    %12 = vector.broadcast %4 : vector<40x1xf32> to vector<40x32xf32>
    %13 = arith.subf %0, %12 : vector<40x32xf32>
    %cst_4 = arith.constant 9.99999974E-6 : f32
    %14 = vector.broadcast %cst_4 : f32 to vector<40x1xf32>
    %15 = arith.addf %11, %14 : vector<40x1xf32>
    %16 = math.rsqrt %15 : vector<40x1xf32>
    %17 = vector.broadcast %16 : vector<40x1xf32> to vector<40x32xf32>
    %18 = arith.mulf %13, %17 : vector<40x32xf32>
    %c0_5 = arith.constant 0 : index
    %c0_6 = arith.constant 0 : index
    %19 = vector.load %arg3[%c0_5, %c0_6] : memref<1x32xf32, #tpu.memory_space<vmem>>, vector<1x32xf32>
    %20 = vector.broadcast %19 : vector<1x32xf32> to vector<40x32xf32>
    %21 = arith.mulf %18, %20 : vector<40x32xf32>
    %c0_7 = arith.constant 0 : index
    %c0_8 = arith.constant 0 : index
    %22 = vector.load %arg4[%c0_7, %c0_8] : memref<1x32xf32, #tpu.memory_space<vmem>>, vector<1x32xf32>
    %23 = vector.broadcast %22 : vector<1x32xf32> to vector<40x32xf32>
    %24 = arith.addf %21, %23 : vector<40x32xf32>
    %25 = arith.truncf %24 : vector<40x32xf32> to vector<40x32xbf16>
    %c0_9 = arith.constant 0 : index
    %c0_10 = arith.constant 0 : index
    %26 = vector.load %arg5[%c0_9, %c0_10] : memref<32x96xf32, #tpu.memory_space<vmem>>, vector<32x96xf32>
    %27 = arith.truncf %26 : vector<32x96xf32> to vector<32x96xbf16>
    %cst_11 = arith.constant dense<0.000000e+00> : vector<40x96xf32>
    %28 = tpu.matmul %25, %27, %cst_11 {dimension_numbers = #tpu.dot_dimension_numbers<[1], [0], [0], [1], [0, 0, 1, 1], [], []>} : vector<40x32xbf16>, vector<32x96xbf16>, vector<40x96xf32> -> vector<40x96xf32>
    %c0_12 = arith.constant 0 : index
    %c0_13 = arith.constant 0 : index
    %29 = vector.load %arg6[%c0_12, %c0_13] : memref<1x96xf32, #tpu.memory_space<vmem>>, vector<1x96xf32>
    %30 = vector.broadcast %29 : vector<1x96xf32> to vector<40x96xf32>
    %31 = arith.addf %28, %30 : vector<40x96xf32>
    %c0_14 = arith.constant 0 : index
    %c0_15 = arith.constant 0 : index
    %32 = vector.load %arg7[%c0_14, %c0_15] : memref<40x96xf32, #tpu.memory_space<vmem>>, vector<40x96xf32>
    tpu.vector_store %arg7[%c0_14, %c0_15], %31 {strides = array<i32>} : memref<40x96xf32, #tpu.memory_space<vmem>>, vector<40x96xf32>,
    return
  }
  func.func @transform_0(%arg0: i32, %arg1: i32) -> (i32, i32) {
    %c0_i32 = arith.constant 0 : i32
    %c0_i32_0 = arith.constant 0 : i32
    return %arg0, %c0_i32 : i32, i32
  }
  func.func @transform_1(%arg0: i32, %arg1: i32) -> (i32, i32) {
    %c0_i32 = arith.constant 0 : i32
    %c0_i32_0 = arith.constant 0 : i32
    %c0_i32_1 = arith.constant 0 : i32
    return %c0_i32, %c0_i32_0 : i32, i32
  }
  func.func @transform_2(%arg0: i32, %arg1: i32) -> (i32, i32) {
    %c0_i32 = arith.constant 0 : i32
    %c0_i32_0 = arith.constant 0 : i32
    %c0_i32_1 = arith.constant 0 : i32
    return %c0_i32, %c0_i32_0 : i32, i32
  }
  func.func @transform_3(%arg0: i32, %arg1: i32) -> (i32, i32) {
    %c0_i32 = arith.constant 0 : i32
    %c0_i32_0 = arith.constant 0 : i32
    return %c0_i32, %arg1 : i32, i32
  }
  func.func @transform_4(%arg0: i32, %arg1: i32) -> (i32, i32) {
    %c0_i32 = arith.constant 0 : i32
    %c0_i32_0 = arith.constant 0 : i32
    return %c0_i32, %arg1 : i32, i32
  }
  func.func @transform_5(%arg0: i32, %arg1: i32) -> (i32, i32) {
    %c0_i32 = arith.constant 0 : i32
    return %arg0, %arg1 : i32, i32
  }
}

module attributes {stable_mosaic.version = 11 : i64} {
  func.func @_attn_kernel(%arg0: i32, %arg1: memref<1x5x96xf32, #tpu.memory_space<vmem>>, %arg2: memref<2x16x32xf32, #tpu.memory_space<vmem>>, %arg3: memref<1x32xf32, #tpu.memory_space<vmem>>, %arg4: memref<1x5x32xf32, #tpu.memory_space<vmem>>, %arg5: memref<1x5x32xf32, #tpu.memory_space<vmem>>) attributes {dimension_semantics = [#tpu.dimension_semantics<parallel>], iteration_bounds = array<i64: 8>, scalar_prefetch = 0 : i64, scratch_operands = 0 : i64, tpu.core_type = #tpu.core_type<tc>, window_params = [{transform_indices = @transform_0, window_bounds = array<i64: 1, 5, 96>}, {pipeline_mode = #tpu.pipeline_mode<synchronous>, transform_indices = @transform_1, window_bounds = array<i64: 2, 16, 32>}, {pipeline_mode = #tpu.pipeline_mode<synchronous>, transform_indices = @transform_2, window_bounds = array<i64: 1, 32>}, {transform_indices = @transform_3, window_bounds = array<i64: 1, 5, 32>}, {transform_indices = @transform_4, window_bounds = array<i64: 1, 5, 32>}]} {
    %c0 = arith.constant 0 : index
    %c0_0 = arith.constant 0 : index
    %c0_1 = arith.constant 0 : index
    %0 = vector.load %arg1[%c0, %c0_0, %c0_1] : memref<1x5x96xf32, #tpu.memory_space<vmem>>, vector<1x5x96xf32>
    %1 = vector.shape_cast %0 : vector<1x5x96xf32> to vector<5x96xf32>
    %c0_2 = arith.constant 0 : index
    %c0_3 = arith.constant 0 : index
    %c0_4 = arith.constant 0 : index
    %2 = vector.load %arg2[%c0_2, %c0_3, %c0_4] : memref<2x16x32xf32, #tpu.memory_space<vmem>>, vector<2x16x32xf32>
    %c0_5 = arith.constant 0 : index
    %c0_6 = arith.constant 0 : index
    %c0_7 = arith.constant 0 : index
    %3 = vector.load %arg4[%c0_5, %c0_6, %c0_7] : memref<1x5x32xf32, #tpu.memory_space<vmem>>, vector<1x5x32xf32>
    %4 = vector.shape_cast %3 : vector<1x5x32xf32> to vector<5x32xf32>
    %c0_8 = arith.constant 0 : index
    %c0_9 = arith.constant 0 : index
    %5 = vector.load %arg3[%c0_8, %c0_9] : memref<1x32xf32, #tpu.memory_space<vmem>>, vector<1x32xf32>
    %6 = vector.broadcast %5 : vector<1x32xf32> to vector<5x32xf32>
    %7 = arith.addf %4, %6 : vector<5x32xf32>
    %8 = vector.extract_strided_slice %1 {offsets = [0, 0], sizes = [5, 16], strides = [1, 1]} : vector<5x96xf32> to vector<5x16xf32>
    %cst = arith.constant 2.500000e-01 : f32
    %9 = vector.broadcast %cst : f32 to vector<5x16xf32>
    %10 = arith.mulf %8, %9 : vector<5x16xf32>
    %11 = vector.extract_strided_slice %1 {offsets = [0, 32], sizes = [5, 16], strides = [1, 1]} : vector<5x96xf32> to vector<5x16xf32>
    %12 = vector.extract_strided_slice %1 {offsets = [0, 64], sizes = [5, 16], strides = [1, 1]} : vector<5x96xf32> to vector<5x16xf32>
    %13 = arith.truncf %10 : vector<5x16xf32> to vector<5x16xbf16>
    %14 = arith.truncf %11 : vector<5x16xf32> to vector<5x16xbf16>
    %cst_10 = arith.constant dense<0.000000e+00> : vector<5x5xf32>
    %15 = tpu.matmul %13, %14, %cst_10 {dimension_numbers = #tpu.dot_dimension_numbers<[1], [1], [0], [0], [0, 0, 1, 0], [], []>} : vector<5x16xbf16>, vector<5x16xbf16>, vector<5x5xf32> -> vector<5x5xf32>
    %cst_11 = arith.constant dense<0xFF800000> : vector<5xf32>
    %16 = vector.multi_reduction <maximumf>, %15, %cst_11 [1] : vector<5x5xf32> to vector<5xf32>
    %17 = vector.shape_cast %16 : vector<5xf32> to vector<5x1xf32>
    %18 = vector.broadcast %17 : vector<5x1xf32> to vector<5x5xf32>
    %19 = arith.subf %15, %18 : vector<5x5xf32>
    %20 = math.exp %19 : vector<5x5xf32>
    %cst_12 = arith.constant dense<0.000000e+00> : vector<5xf32>
    %21 = vector.multi_reduction <add>, %20, %cst_12 [1] : vector<5x5xf32> to vector<5xf32>
    %22 = vector.shape_cast %21 : vector<5xf32> to vector<5x1xf32>
    %23 = tpu.reciprocal %22 {approx = true} : vector<5x1xf32> -> vector<5x1xf32>
    %24 = vector.broadcast %23 : vector<5x1xf32> to vector<5x5xf32>
    %25 = arith.mulf %20, %24 : vector<5x5xf32>
    %26 = arith.truncf %25 : vector<5x5xf32> to vector<5x5xbf16>
    %27 = arith.truncf %12 : vector<5x16xf32> to vector<5x16xbf16>
    %cst_13 = arith.constant dense<0.000000e+00> : vector<5x16xf32>
    %28 = tpu.matmul %26, %27, %cst_13 {dimension_numbers = #tpu.dot_dimension_numbers<[1], [0], [0], [1], [0, 0, 1, 1], [], []>} : vector<5x5xbf16>, vector<5x16xbf16>, vector<5x16xf32> -> vector<5x16xf32>
    %29 = arith.truncf %28 : vector<5x16xf32> to vector<5x16xbf16>
    %30 = vector.extract_strided_slice %2 {offsets = [0, 0, 0], sizes = [1, 16, 32], strides = [1, 1, 1]} : vector<2x16x32xf32> to vector<1x16x32xf32>
    %31 = vector.shape_cast %30 : vector<1x16x32xf32> to vector<16x32xf32>
    %32 = arith.truncf %31 : vector<16x32xf32> to vector<16x32xbf16>
    %cst_14 = arith.constant dense<0.000000e+00> : vector<5x32xf32>
    %33 = tpu.matmul %29, %32, %cst_14 {dimension_numbers = #tpu.dot_dimension_numbers<[1], [0], [0], [1], [0, 0, 1, 1], [], []>} : vector<5x16xbf16>, vector<16x32xbf16>, vector<5x32xf32> -> vector<5x32xf32>
    %34 = arith.addf %7, %33 : vector<5x32xf32>
    %35 = vector.extract_strided_slice %1 {offsets = [0, 16], sizes = [5, 16], strides = [1, 1]} : vector<5x96xf32> to vector<5x16xf32>
    %cst_15 = arith.constant 2.500000e-01 : f32
    %36 = vector.broadcast %cst_15 : f32 to vector<5x16xf32>
    %37 = arith.mulf %35, %36 : vector<5x16xf32>
    %38 = vector.extract_strided_slice %1 {offsets = [0, 48], sizes = [5, 16], strides = [1, 1]} : vector<5x96xf32> to vector<5x16xf32>
    %39 = vector.extract_strided_slice %1 {offsets = [0, 80], sizes = [5, 16], strides = [1, 1]} : vector<5x96xf32> to vector<5x16xf32>
    %40 = arith.truncf %37 : vector<5x16xf32> to vector<5x16xbf16>
    %41 = arith.truncf %38 : vector<5x16xf32> to vector<5x16xbf16>
    %cst_16 = arith.constant dense<0.000000e+00> : vector<5x5xf32>
    %42 = tpu.matmul %40, %41, %cst_16 {dimension_numbers = #tpu.dot_dimension_numbers<[1], [1], [0], [0], [0, 0, 1, 0], [], []>} : vector<5x16xbf16>, vector<5x16xbf16>, vector<5x5xf32> -> vector<5x5xf32>
    %cst_17 = arith.constant dense<0xFF800000> : vector<5xf32>
    %43 = vector.multi_reduction <maximumf>, %42, %cst_17 [1] : vector<5x5xf32> to vector<5xf32>
    %44 = vector.shape_cast %43 : vector<5xf32> to vector<5x1xf32>
    %45 = vector.broadcast %44 : vector<5x1xf32> to vector<5x5xf32>
    %46 = arith.subf %42, %45 : vector<5x5xf32>
    %47 = math.exp %46 : vector<5x5xf32>
    %cst_18 = arith.constant dense<0.000000e+00> : vector<5xf32>
    %48 = vector.multi_reduction <add>, %47, %cst_18 [1] : vector<5x5xf32> to vector<5xf32>
    %49 = vector.shape_cast %48 : vector<5xf32> to vector<5x1xf32>
    %50 = tpu.reciprocal %49 {approx = true} : vector<5x1xf32> -> vector<5x1xf32>
    %51 = vector.broadcast %50 : vector<5x1xf32> to vector<5x5xf32>
    %52 = arith.mulf %47, %51 : vector<5x5xf32>
    %53 = arith.truncf %52 : vector<5x5xf32> to vector<5x5xbf16>
    %54 = arith.truncf %39 : vector<5x16xf32> to vector<5x16xbf16>
    %cst_19 = arith.constant dense<0.000000e+00> : vector<5x16xf32>
    %55 = tpu.matmul %53, %54, %cst_19 {dimension_numbers = #tpu.dot_dimension_numbers<[1], [0], [0], [1], [0, 0, 1, 1], [], []>} : vector<5x5xbf16>, vector<5x16xbf16>, vector<5x16xf32> -> vector<5x16xf32>
    %56 = arith.truncf %55 : vector<5x16xf32> to vector<5x16xbf16>
    %57 = vector.extract_strided_slice %2 {offsets = [1, 0, 0], sizes = [1, 16, 32], strides = [1, 1, 1]} : vector<2x16x32xf32> to vector<1x16x32xf32>
    %58 = vector.shape_cast %57 : vector<1x16x32xf32> to vector<16x32xf32>
    %59 = arith.truncf %58 : vector<16x32xf32> to vector<16x32xbf16>
    %cst_20 = arith.constant dense<0.000000e+00> : vector<5x32xf32>
    %60 = tpu.matmul %56, %59, %cst_20 {dimension_numbers = #tpu.dot_dimension_numbers<[1], [0], [0], [1], [0, 0, 1, 1], [], []>} : vector<5x16xbf16>, vector<16x32xbf16>, vector<5x32xf32> -> vector<5x32xf32>
    %61 = arith.addf %34, %60 : vector<5x32xf32>
    %c0_21 = arith.constant 0 : index
    %c0_22 = arith.constant 0 : index
    %c0_23 = arith.constant 0 : index
    %62 = vector.load %arg5[%c0_21, %c0_22, %c0_23] : memref<1x5x32xf32, #tpu.memory_space<vmem>>, vector<1x5x32xf32>
    %63 = vector.shape_cast %62 : vector<1x5x32xf32> to vector<5x32xf32>
    %64 = vector.shape_cast %61 : vector<5x32xf32> to vector<1x5x32xf32>
    tpu.vector_store %arg5[%c0_21, %c0_22, %c0_23], %64 {strides = array<i32>} : memref<1x5x32xf32, #tpu.memory_space<vmem>>, vector<1x5x32xf32>,
    return
  }
  func.func @transform_0(%arg0: i32) -> (i32, i32, i32) {
    %c0_i32 = arith.constant 0 : i32
    %c0_i32_0 = arith.constant 0 : i32
    %c0_i32_1 = arith.constant 0 : i32
    return %arg0, %c0_i32, %c0_i32_0 : i32, i32, i32
  }
  func.func @transform_1(%arg0: i32) -> (i32, i32, i32) {
    %c0_i32 = arith.constant 0 : i32
    %c0_i32_0 = arith.constant 0 : i32
    %c0_i32_1 = arith.constant 0 : i32
    %c0_i32_2 = arith.constant 0 : i32
    return %c0_i32, %c0_i32_0, %c0_i32_1 : i32, i32, i32
  }
  func.func @transform_2(%arg0: i32) -> (i32, i32) {
    %c0_i32 = arith.constant 0 : i32
    %c0_i32_0 = arith.constant 0 : i32
    %c0_i32_1 = arith.constant 0 : i32
    return %c0_i32, %c0_i32_0 : i32, i32
  }
  func.func @transform_3(%arg0: i32) -> (i32, i32, i32) {
    %c0_i32 = arith.constant 0 : i32
    %c0_i32_0 = arith.constant 0 : i32
    %c0_i32_1 = arith.constant 0 : i32
    return %arg0, %c0_i32, %c0_i32_0 : i32, i32, i32
  }
  func.func @transform_4(%arg0: i32) -> (i32, i32, i32) {
    %c0_i32 = arith.constant 0 : i32
    %c0_i32_0 = arith.constant 0 : i32
    %c0_i32_1 = arith.constant 0 : i32
    return %arg0, %c0_i32, %c0_i32_0 : i32, i32, i32
  }
}

module attributes {stable_mosaic.version = 11 : i64} {
  func.func @_ln_linear_kernel(%arg0: i32, %arg1: i32, %arg2: memref<40x32xf32, #tpu.memory_space<vmem>>, %arg3: memref<1x32xf32, #tpu.memory_space<vmem>>, %arg4: memref<1x32xf32, #tpu.memory_space<vmem>>, %arg5: memref<32x64xf32, #tpu.memory_space<vmem>>, %arg6: memref<1x64xf32, #tpu.memory_space<vmem>>, %arg7: memref<40x64xf32, #tpu.memory_space<vmem>>) attributes {dimension_semantics = [#tpu.dimension_semantics<parallel>, #tpu.dimension_semantics<parallel>], iteration_bounds = array<i64: 1, 1>, scalar_prefetch = 0 : i64, scratch_operands = 0 : i64, tpu.core_type = #tpu.core_type<tc>, window_params = [{transform_indices = @transform_0, window_bounds = array<i64: 40, 32>}, {pipeline_mode = #tpu.pipeline_mode<synchronous>, transform_indices = @transform_1, window_bounds = array<i64: 1, 32>}, {pipeline_mode = #tpu.pipeline_mode<synchronous>, transform_indices = @transform_2, window_bounds = array<i64: 1, 32>}, {transform_indices = @transform_3, window_bounds = array<i64: 32, 64>}, {transform_indices = @transform_4, window_bounds = array<i64: 1, 64>}, {transform_indices = @transform_5, window_bounds = array<i64: 40, 64>}]} {
    %c0 = arith.constant 0 : index
    %c0_0 = arith.constant 0 : index
    %0 = vector.load %arg2[%c0, %c0_0] : memref<40x32xf32, #tpu.memory_space<vmem>>, vector<40x32xf32>
    %cst = arith.constant dense<0.000000e+00> : vector<40xf32>
    %1 = vector.multi_reduction <add>, %0, %cst [1] : vector<40x32xf32> to vector<40xf32>
    %2 = vector.shape_cast %1 : vector<40xf32> to vector<40x1xf32>
    %cst_1 = arith.constant 3.200000e+01 : f32
    %3 = vector.broadcast %cst_1 : f32 to vector<40x1xf32>
    %4 = arith.divf %2, %3 : vector<40x1xf32>
    %5 = vector.broadcast %4 : vector<40x1xf32> to vector<40x32xf32>
    %6 = arith.subf %0, %5 : vector<40x32xf32>
    %7 = arith.mulf %6, %6 : vector<40x32xf32>
    %cst_2 = arith.constant dense<0.000000e+00> : vector<40xf32>
    %8 = vector.multi_reduction <add>, %7, %cst_2 [1] : vector<40x32xf32> to vector<40xf32>
    %9 = vector.shape_cast %8 : vector<40xf32> to vector<40x1xf32>
    %cst_3 = arith.constant 3.200000e+01 : f32
    %10 = vector.broadcast %cst_3 : f32 to vector<40x1xf32>
    %11 = arith.divf %9, %10 : vector<40x1xf32>
    %12 = vector.broadcast %4 : vector<40x1xf32> to vector<40x32xf32>
    %13 = arith.subf %0, %12 : vector<40x32xf32>
    %cst_4 = arith.constant 9.99999974E-6 : f32
    %14 = vector.broadcast %cst_4 : f32 to vector<40x1xf32>
    %15 = arith.addf %11, %14 : vector<40x1xf32>
    %16 = math.rsqrt %15 : vector<40x1xf32>
    %17 = vector.broadcast %16 : vector<40x1xf32> to vector<40x32xf32>
    %18 = arith.mulf %13, %17 : vector<40x32xf32>
    %c0_5 = arith.constant 0 : index
    %c0_6 = arith.constant 0 : index
    %19 = vector.load %arg3[%c0_5, %c0_6] : memref<1x32xf32, #tpu.memory_space<vmem>>, vector<1x32xf32>
    %20 = vector.broadcast %19 : vector<1x32xf32> to vector<40x32xf32>
    %21 = arith.mulf %18, %20 : vector<40x32xf32>
    %c0_7 = arith.constant 0 : index
    %c0_8 = arith.constant 0 : index
    %22 = vector.load %arg4[%c0_7, %c0_8] : memref<1x32xf32, #tpu.memory_space<vmem>>, vector<1x32xf32>
    %23 = vector.broadcast %22 : vector<1x32xf32> to vector<40x32xf32>
    %24 = arith.addf %21, %23 : vector<40x32xf32>
    %25 = arith.truncf %24 : vector<40x32xf32> to vector<40x32xbf16>
    %c0_9 = arith.constant 0 : index
    %c0_10 = arith.constant 0 : index
    %26 = vector.load %arg5[%c0_9, %c0_10] : memref<32x64xf32, #tpu.memory_space<vmem>>, vector<32x64xf32>
    %27 = arith.truncf %26 : vector<32x64xf32> to vector<32x64xbf16>
    %cst_11 = arith.constant dense<0.000000e+00> : vector<40x64xf32>
    %28 = tpu.matmul %25, %27, %cst_11 {dimension_numbers = #tpu.dot_dimension_numbers<[1], [0], [0], [1], [0, 0, 1, 1], [], []>} : vector<40x32xbf16>, vector<32x64xbf16>, vector<40x64xf32> -> vector<40x64xf32>
    %c0_12 = arith.constant 0 : index
    %c0_13 = arith.constant 0 : index
    %29 = vector.load %arg6[%c0_12, %c0_13] : memref<1x64xf32, #tpu.memory_space<vmem>>, vector<1x64xf32>
    %30 = vector.broadcast %29 : vector<1x64xf32> to vector<40x64xf32>
    %31 = arith.addf %28, %30 : vector<40x64xf32>
    %cst_14 = arith.constant 5.000000e-01 : f32
    %32 = vector.broadcast %cst_14 : f32 to vector<40x64xf32>
    %33 = arith.mulf %32, %31 : vector<40x64xf32>
    %cst_15 = arith.constant 0.707106769 : f32
    %34 = vector.broadcast %cst_15 : f32 to vector<40x64xf32>
    %35 = arith.mulf %31, %34 : vector<40x64xf32>
    %36 = math.erf %35 : vector<40x64xf32>
    %cst_16 = arith.constant 1.000000e+00 : f32
    %37 = vector.broadcast %cst_16 : f32 to vector<40x64xf32>
    %38 = arith.addf %37, %36 : vector<40x64xf32>
    %39 = arith.mulf %33, %38 : vector<40x64xf32>
    %c0_17 = arith.constant 0 : index
    %c0_18 = arith.constant 0 : index
    %40 = vector.load %arg7[%c0_17, %c0_18] : memref<40x64xf32, #tpu.memory_space<vmem>>, vector<40x64xf32>
    tpu.vector_store %arg7[%c0_17, %c0_18], %39 {strides = array<i32>} : memref<40x64xf32, #tpu.memory_space<vmem>>, vector<40x64xf32>,
    return
  }
  func.func @transform_0(%arg0: i32, %arg1: i32) -> (i32, i32) {
    %c0_i32 = arith.constant 0 : i32
    %c0_i32_0 = arith.constant 0 : i32
    return %arg0, %c0_i32 : i32, i32
  }
  func.func @transform_1(%arg0: i32, %arg1: i32) -> (i32, i32) {
    %c0_i32 = arith.constant 0 : i32
    %c0_i32_0 = arith.constant 0 : i32
    %c0_i32_1 = arith.constant 0 : i32
    return %c0_i32, %c0_i32_0 : i32, i32
  }
  func.func @transform_2(%arg0: i32, %arg1: i32) -> (i32, i32) {
    %c0_i32 = arith.constant 0 : i32
    %c0_i32_0 = arith.constant 0 : i32
    %c0_i32_1 = arith.constant 0 : i32
    return %c0_i32, %c0_i32_0 : i32, i32
  }
  func.func @transform_3(%arg0: i32, %arg1: i32) -> (i32, i32) {
    %c0_i32 = arith.constant 0 : i32
    %c0_i32_0 = arith.constant 0 : i32
    return %c0_i32, %arg1 : i32, i32
  }
  func.func @transform_4(%arg0: i32, %arg1: i32) -> (i32, i32) {
    %c0_i32 = arith.constant 0 : i32
    %c0_i32_0 = arith.constant 0 : i32
    return %c0_i32, %arg1 : i32, i32
  }
  func.func @transform_5(%arg0: i32, %arg1: i32) -> (i32, i32) {
    %c0_i32 = arith.constant 0 : i32
    return %arg0, %arg1 : i32, i32
  }
}

module attributes {stable_mosaic.version = 11 : i64} {
  func.func @_linear_kernel(%arg0: i32, %arg1: i32, %arg2: i32, %arg3: memref<40x64xf32, #tpu.memory_space<vmem>>, %arg4: memref<64x32xf32, #tpu.memory_space<vmem>>, %arg5: memref<1x32xf32, #tpu.memory_space<vmem>>, %arg6: memref<40x32xf32, #tpu.memory_space<vmem>>, %arg7: memref<40x32xf32, #tpu.memory_space<vmem>>, %arg8: memref<40x32xf32, #tpu.memory_space<vmem>>) attributes {dimension_semantics = [#tpu.dimension_semantics<parallel>, #tpu.dimension_semantics<parallel>, #tpu.dimension_semantics<arbitrary>], iteration_bounds = array<i64: 1, 1, 1>, scalar_prefetch = 0 : i64, scratch_operands = 1 : i64, tpu.core_type = #tpu.core_type<tc>, window_params = [{transform_indices = @transform_0, window_bounds = array<i64: 40, 64>}, {transform_indices = @transform_1, window_bounds = array<i64: 64, 32>}, {transform_indices = @transform_2, window_bounds = array<i64: 1, 32>}, {transform_indices = @transform_3, window_bounds = array<i64: 40, 32>}, {transform_indices = @transform_4, window_bounds = array<i64: 40, 32>}]} {
    %c0_i32 = arith.constant 0 : i32
    %0 = arith.cmpi eq, %arg2, %c0_i32 : i32
    %1 = arith.extui %0 : i1 to i32
    %c0_i32_0 = arith.constant 0 : i32
    %2 = arith.cmpi ne, %1, %c0_i32_0 : i32
    scf.if %2 {
      %cst_10 = arith.constant 0.000000e+00 : f32
      %14 = vector.broadcast %cst_10 : f32 to vector<40x32xf32>
      %c0_11 = arith.constant 0 : index
      %c0_12 = arith.constant 0 : index
      %15 = vector.load %arg8[%c0_11, %c0_12] : memref<40x32xf32, #tpu.memory_space<vmem>>, vector<40x32xf32>
      tpu.vector_store %arg8[%c0_11, %c0_12], %14 {strides = array<i32>} : memref<40x32xf32, #tpu.memory_space<vmem>>, vector<40x32xf32>,
    } else {
    }
    %c0 = arith.constant 0 : index
    %c0_1 = arith.constant 0 : index
    %3 = vector.load %arg8[%c0, %c0_1] : memref<40x32xf32, #tpu.memory_space<vmem>>, vector<40x32xf32>
    %c0_2 = arith.constant 0 : index
    %c0_3 = arith.constant 0 : index
    %4 = vector.load %arg3[%c0_2, %c0_3] : memref<40x64xf32, #tpu.memory_space<vmem>>, vector<40x64xf32>
    %5 = arith.truncf %4 : vector<40x64xf32> to vector<40x64xbf16>
    %c0_4 = arith.constant 0 : index
    %c0_5 = arith.constant 0 : index
    %6 = vector.load %arg4[%c0_4, %c0_5] : memref<64x32xf32, #tpu.memory_space<vmem>>, vector<64x32xf32>
    %7 = arith.truncf %6 : vector<64x32xf32> to vector<64x32xbf16>
    %cst = arith.constant dense<0.000000e+00> : vector<40x32xf32>
    %8 = tpu.matmul %5, %7, %cst {dimension_numbers = #tpu.dot_dimension_numbers<[1], [0], [0], [1], [0, 0, 1, 1], [], []>} : vector<40x64xbf16>, vector<64x32xbf16>, vector<40x32xf32> -> vector<40x32xf32>
    %9 = arith.addf %3, %8 : vector<40x32xf32>
    %c0_6 = arith.constant 0 : index
    %c0_7 = arith.constant 0 : index
    %10 = vector.load %arg8[%c0_6, %c0_7] : memref<40x32xf32, #tpu.memory_space<vmem>>, vector<40x32xf32>
    tpu.vector_store %arg8[%c0_6, %c0_7], %9 {strides = array<i32>} : memref<40x32xf32, #tpu.memory_space<vmem>>, vector<40x32xf32>,
    %c0_i32_8 = arith.constant 0 : i32
    %11 = arith.cmpi eq, %arg2, %c0_i32_8 : i32
    %12 = arith.extui %11 : i1 to i32
    %c0_i32_9 = arith.constant 0 : i32
    %13 = arith.cmpi ne, %12, %c0_i32_9 : i32
    scf.if %13 {
      %c0_10 = arith.constant 0 : index
      %c0_11 = arith.constant 0 : index
      %14 = vector.load %arg8[%c0_10, %c0_11] : memref<40x32xf32, #tpu.memory_space<vmem>>, vector<40x32xf32>
      %c0_12 = arith.constant 0 : index
      %c0_13 = arith.constant 0 : index
      %15 = vector.load %arg5[%c0_12, %c0_13] : memref<1x32xf32, #tpu.memory_space<vmem>>, vector<1x32xf32>
      %16 = vector.broadcast %15 : vector<1x32xf32> to vector<40x32xf32>
      %17 = arith.addf %14, %16 : vector<40x32xf32>
      %c0_14 = arith.constant 0 : index
      %c0_15 = arith.constant 0 : index
      %18 = vector.load %arg6[%c0_14, %c0_15] : memref<40x32xf32, #tpu.memory_space<vmem>>, vector<40x32xf32>
      %19 = arith.addf %17, %18 : vector<40x32xf32>
      %c0_16 = arith.constant 0 : index
      %c0_17 = arith.constant 0 : index
      %20 = vector.load %arg7[%c0_16, %c0_17] : memref<40x32xf32, #tpu.memory_space<vmem>>, vector<40x32xf32>
      tpu.vector_store %arg7[%c0_16, %c0_17], %19 {strides = array<i32>} : memref<40x32xf32, #tpu.memory_space<vmem>>, vector<40x32xf32>,
    } else {
    }
    return
  }
  func.func @transform_0(%arg0: i32, %arg1: i32, %arg2: i32) -> (i32, i32) {
    %c0_i32 = arith.constant 0 : i32
    return %arg0, %arg2 : i32, i32
  }
  func.func @transform_1(%arg0: i32, %arg1: i32, %arg2: i32) -> (i32, i32) {
    %c0_i32 = arith.constant 0 : i32
    return %arg2, %arg1 : i32, i32
  }
  func.func @transform_2(%arg0: i32, %arg1: i32, %arg2: i32) -> (i32, i32) {
    %c0_i32 = arith.constant 0 : i32
    %c0_i32_0 = arith.constant 0 : i32
    return %c0_i32, %arg1 : i32, i32
  }
  func.func @transform_3(%arg0: i32, %arg1: i32, %arg2: i32) -> (i32, i32) {
    %c0_i32 = arith.constant 0 : i32
    return %arg0, %arg1 : i32, i32
  }
  func.func @transform_4(%arg0: i32, %arg1: i32, %arg2: i32) -> (i32, i32) {
    %c0_i32 = arith.constant 0 : i32
    return %arg0, %arg1 : i32, i32
  }
}

module attributes {stable_mosaic.version = 11 : i64} {
  func.func @_layernorm_kernel(%arg0: i32, %arg1: memref<40x32xf32, #tpu.memory_space<vmem>>, %arg2: memref<1x32xf32, #tpu.memory_space<vmem>>, %arg3: memref<1x32xf32, #tpu.memory_space<vmem>>, %arg4: memref<40x32xf32, #tpu.memory_space<vmem>>) attributes {dimension_semantics = [#tpu.dimension_semantics<parallel>], iteration_bounds = array<i64: 1>, scalar_prefetch = 0 : i64, scratch_operands = 0 : i64, tpu.core_type = #tpu.core_type<tc>, window_params = [{transform_indices = @transform_0, window_bounds = array<i64: 40, 32>}, {pipeline_mode = #tpu.pipeline_mode<synchronous>, transform_indices = @transform_1, window_bounds = array<i64: 1, 32>}, {pipeline_mode = #tpu.pipeline_mode<synchronous>, transform_indices = @transform_2, window_bounds = array<i64: 1, 32>}, {transform_indices = @transform_3, window_bounds = array<i64: 40, 32>}]} {
    %c0 = arith.constant 0 : index
    %c0_0 = arith.constant 0 : index
    %0 = vector.load %arg1[%c0, %c0_0] : memref<40x32xf32, #tpu.memory_space<vmem>>, vector<40x32xf32>
    %cst = arith.constant dense<0.000000e+00> : vector<40xf32>
    %1 = vector.multi_reduction <add>, %0, %cst [1] : vector<40x32xf32> to vector<40xf32>
    %2 = vector.shape_cast %1 : vector<40xf32> to vector<40x1xf32>
    %cst_1 = arith.constant 3.200000e+01 : f32
    %3 = vector.broadcast %cst_1 : f32 to vector<40x1xf32>
    %4 = arith.divf %2, %3 : vector<40x1xf32>
    %5 = vector.broadcast %4 : vector<40x1xf32> to vector<40x32xf32>
    %6 = arith.subf %0, %5 : vector<40x32xf32>
    %7 = arith.mulf %6, %6 : vector<40x32xf32>
    %cst_2 = arith.constant dense<0.000000e+00> : vector<40xf32>
    %8 = vector.multi_reduction <add>, %7, %cst_2 [1] : vector<40x32xf32> to vector<40xf32>
    %9 = vector.shape_cast %8 : vector<40xf32> to vector<40x1xf32>
    %cst_3 = arith.constant 3.200000e+01 : f32
    %10 = vector.broadcast %cst_3 : f32 to vector<40x1xf32>
    %11 = arith.divf %9, %10 : vector<40x1xf32>
    %12 = vector.broadcast %4 : vector<40x1xf32> to vector<40x32xf32>
    %13 = arith.subf %0, %12 : vector<40x32xf32>
    %cst_4 = arith.constant 9.99999974E-6 : f32
    %14 = vector.broadcast %cst_4 : f32 to vector<40x1xf32>
    %15 = arith.addf %11, %14 : vector<40x1xf32>
    %16 = math.rsqrt %15 : vector<40x1xf32>
    %17 = vector.broadcast %16 : vector<40x1xf32> to vector<40x32xf32>
    %18 = arith.mulf %13, %17 : vector<40x32xf32>
    %c0_5 = arith.constant 0 : index
    %c0_6 = arith.constant 0 : index
    %19 = vector.load %arg2[%c0_5, %c0_6] : memref<1x32xf32, #tpu.memory_space<vmem>>, vector<1x32xf32>
    %20 = vector.broadcast %19 : vector<1x32xf32> to vector<40x32xf32>
    %21 = arith.mulf %18, %20 : vector<40x32xf32>
    %c0_7 = arith.constant 0 : index
    %c0_8 = arith.constant 0 : index
    %22 = vector.load %arg3[%c0_7, %c0_8] : memref<1x32xf32, #tpu.memory_space<vmem>>, vector<1x32xf32>
    %23 = vector.broadcast %22 : vector<1x32xf32> to vector<40x32xf32>
    %24 = arith.addf %21, %23 : vector<40x32xf32>
    %c0_9 = arith.constant 0 : index
    %c0_10 = arith.constant 0 : index
    %25 = vector.load %arg4[%c0_9, %c0_10] : memref<40x32xf32, #tpu.memory_space<vmem>>, vector<40x32xf32>
    tpu.vector_store %arg4[%c0_9, %c0_10], %24 {strides = array<i32>} : memref<40x32xf32, #tpu.memory_space<vmem>>, vector<40x32xf32>,
    return
  }
  func.func @transform_0(%arg0: i32) -> (i32, i32) {
    %c0_i32 = arith.constant 0 : i32
    %c0_i32_0 = arith.constant 0 : i32
    return %arg0, %c0_i32 : i32, i32
  }
  func.func @transform_1(%arg0: i32) -> (i32, i32) {
    %c0_i32 = arith.constant 0 : i32
    %c0_i32_0 = arith.constant 0 : i32
    %c0_i32_1 = arith.constant 0 : i32
    return %c0_i32, %c0_i32_0 : i32, i32
  }
  func.func @transform_2(%arg0: i32) -> (i32, i32) {
    %c0_i32 = arith.constant 0 : i32
    %c0_i32_0 = arith.constant 0 : i32
    %c0_i32_1 = arith.constant 0 : i32
    return %c0_i32, %c0_i32_0 : i32, i32
  }
  func.func @transform_3(%arg0: i32) -> (i32, i32) {
    %c0_i32 = arith.constant 0 : i32
    %c0_i32_0 = arith.constant 0 : i32
    return %arg0, %c0_i32 : i32, i32
  }
}

module attributes {stable_mosaic.version = 11 : i64} {
  func.func @_attn_kernel(%arg0: i32, %arg1: memref<1x5x96xf32, #tpu.memory_space<vmem>>, %arg2: memref<2x16x32xf32, #tpu.memory_space<vmem>>, %arg3: memref<1x32xf32, #tpu.memory_space<vmem>>, %arg4: memref<1x5x32xf32, #tpu.memory_space<vmem>>, %arg5: memref<1x5x32xf32, #tpu.memory_space<vmem>>) attributes {dimension_semantics = [#tpu.dimension_semantics<parallel>], iteration_bounds = array<i64: 2>, scalar_prefetch = 0 : i64, scratch_operands = 0 : i64, tpu.core_type = #tpu.core_type<tc>, window_params = [{transform_indices = @transform_0, window_bounds = array<i64: 1, 5, 96>}, {pipeline_mode = #tpu.pipeline_mode<synchronous>, transform_indices = @transform_1, window_bounds = array<i64: 2, 16, 32>}, {pipeline_mode = #tpu.pipeline_mode<synchronous>, transform_indices = @transform_2, window_bounds = array<i64: 1, 32>}, {transform_indices = @transform_3, window_bounds = array<i64: 1, 5, 32>}, {transform_indices = @transform_4, window_bounds = array<i64: 1, 5, 32>}]} {
    %c0 = arith.constant 0 : index
    %c0_0 = arith.constant 0 : index
    %c0_1 = arith.constant 0 : index
    %0 = vector.load %arg1[%c0, %c0_0, %c0_1] : memref<1x5x96xf32, #tpu.memory_space<vmem>>, vector<1x5x96xf32>
    %1 = vector.shape_cast %0 : vector<1x5x96xf32> to vector<5x96xf32>
    %c0_2 = arith.constant 0 : index
    %c0_3 = arith.constant 0 : index
    %c0_4 = arith.constant 0 : index
    %2 = vector.load %arg2[%c0_2, %c0_3, %c0_4] : memref<2x16x32xf32, #tpu.memory_space<vmem>>, vector<2x16x32xf32>
    %c0_5 = arith.constant 0 : index
    %c0_6 = arith.constant 0 : index
    %c0_7 = arith.constant 0 : index
    %3 = vector.load %arg4[%c0_5, %c0_6, %c0_7] : memref<1x5x32xf32, #tpu.memory_space<vmem>>, vector<1x5x32xf32>
    %4 = vector.shape_cast %3 : vector<1x5x32xf32> to vector<5x32xf32>
    %c0_8 = arith.constant 0 : index
    %c0_9 = arith.constant 0 : index
    %5 = vector.load %arg3[%c0_8, %c0_9] : memref<1x32xf32, #tpu.memory_space<vmem>>, vector<1x32xf32>
    %6 = vector.broadcast %5 : vector<1x32xf32> to vector<5x32xf32>
    %7 = arith.addf %4, %6 : vector<5x32xf32>
    %8 = vector.extract_strided_slice %1 {offsets = [0, 0], sizes = [5, 16], strides = [1, 1]} : vector<5x96xf32> to vector<5x16xf32>
    %cst = arith.constant 2.500000e-01 : f32
    %9 = vector.broadcast %cst : f32 to vector<5x16xf32>
    %10 = arith.mulf %8, %9 : vector<5x16xf32>
    %11 = vector.extract_strided_slice %1 {offsets = [0, 32], sizes = [5, 16], strides = [1, 1]} : vector<5x96xf32> to vector<5x16xf32>
    %12 = vector.extract_strided_slice %1 {offsets = [0, 64], sizes = [5, 16], strides = [1, 1]} : vector<5x96xf32> to vector<5x16xf32>
    %13 = arith.truncf %10 : vector<5x16xf32> to vector<5x16xbf16>
    %14 = arith.truncf %11 : vector<5x16xf32> to vector<5x16xbf16>
    %cst_10 = arith.constant dense<0.000000e+00> : vector<5x5xf32>
    %15 = tpu.matmul %13, %14, %cst_10 {dimension_numbers = #tpu.dot_dimension_numbers<[1], [1], [0], [0], [0, 0, 1, 0], [], []>} : vector<5x16xbf16>, vector<5x16xbf16>, vector<5x5xf32> -> vector<5x5xf32>
    %cst_11 = arith.constant dense<0xFF800000> : vector<5xf32>
    %16 = vector.multi_reduction <maximumf>, %15, %cst_11 [1] : vector<5x5xf32> to vector<5xf32>
    %17 = vector.shape_cast %16 : vector<5xf32> to vector<5x1xf32>
    %18 = vector.broadcast %17 : vector<5x1xf32> to vector<5x5xf32>
    %19 = arith.subf %15, %18 : vector<5x5xf32>
    %20 = math.exp %19 : vector<5x5xf32>
    %cst_12 = arith.constant dense<0.000000e+00> : vector<5xf32>
    %21 = vector.multi_reduction <add>, %20, %cst_12 [1] : vector<5x5xf32> to vector<5xf32>
    %22 = vector.shape_cast %21 : vector<5xf32> to vector<5x1xf32>
    %23 = tpu.reciprocal %22 {approx = true} : vector<5x1xf32> -> vector<5x1xf32>
    %24 = vector.broadcast %23 : vector<5x1xf32> to vector<5x5xf32>
    %25 = arith.mulf %20, %24 : vector<5x5xf32>
    %26 = arith.truncf %25 : vector<5x5xf32> to vector<5x5xbf16>
    %27 = arith.truncf %12 : vector<5x16xf32> to vector<5x16xbf16>
    %cst_13 = arith.constant dense<0.000000e+00> : vector<5x16xf32>
    %28 = tpu.matmul %26, %27, %cst_13 {dimension_numbers = #tpu.dot_dimension_numbers<[1], [0], [0], [1], [0, 0, 1, 1], [], []>} : vector<5x5xbf16>, vector<5x16xbf16>, vector<5x16xf32> -> vector<5x16xf32>
    %29 = arith.truncf %28 : vector<5x16xf32> to vector<5x16xbf16>
    %30 = vector.extract_strided_slice %2 {offsets = [0, 0, 0], sizes = [1, 16, 32], strides = [1, 1, 1]} : vector<2x16x32xf32> to vector<1x16x32xf32>
    %31 = vector.shape_cast %30 : vector<1x16x32xf32> to vector<16x32xf32>
    %32 = arith.truncf %31 : vector<16x32xf32> to vector<16x32xbf16>
    %cst_14 = arith.constant dense<0.000000e+00> : vector<5x32xf32>
    %33 = tpu.matmul %29, %32, %cst_14 {dimension_numbers = #tpu.dot_dimension_numbers<[1], [0], [0], [1], [0, 0, 1, 1], [], []>} : vector<5x16xbf16>, vector<16x32xbf16>, vector<5x32xf32> -> vector<5x32xf32>
    %34 = arith.addf %7, %33 : vector<5x32xf32>
    %35 = vector.extract_strided_slice %1 {offsets = [0, 16], sizes = [5, 16], strides = [1, 1]} : vector<5x96xf32> to vector<5x16xf32>
    %cst_15 = arith.constant 2.500000e-01 : f32
    %36 = vector.broadcast %cst_15 : f32 to vector<5x16xf32>
    %37 = arith.mulf %35, %36 : vector<5x16xf32>
    %38 = vector.extract_strided_slice %1 {offsets = [0, 48], sizes = [5, 16], strides = [1, 1]} : vector<5x96xf32> to vector<5x16xf32>
    %39 = vector.extract_strided_slice %1 {offsets = [0, 80], sizes = [5, 16], strides = [1, 1]} : vector<5x96xf32> to vector<5x16xf32>
    %40 = arith.truncf %37 : vector<5x16xf32> to vector<5x16xbf16>
    %41 = arith.truncf %38 : vector<5x16xf32> to vector<5x16xbf16>
    %cst_16 = arith.constant dense<0.000000e+00> : vector<5x5xf32>
    %42 = tpu.matmul %40, %41, %cst_16 {dimension_numbers = #tpu.dot_dimension_numbers<[1], [1], [0], [0], [0, 0, 1, 0], [], []>} : vector<5x16xbf16>, vector<5x16xbf16>, vector<5x5xf32> -> vector<5x5xf32>
    %cst_17 = arith.constant dense<0xFF800000> : vector<5xf32>
    %43 = vector.multi_reduction <maximumf>, %42, %cst_17 [1] : vector<5x5xf32> to vector<5xf32>
    %44 = vector.shape_cast %43 : vector<5xf32> to vector<5x1xf32>
    %45 = vector.broadcast %44 : vector<5x1xf32> to vector<5x5xf32>
    %46 = arith.subf %42, %45 : vector<5x5xf32>
    %47 = math.exp %46 : vector<5x5xf32>
    %cst_18 = arith.constant dense<0.000000e+00> : vector<5xf32>
    %48 = vector.multi_reduction <add>, %47, %cst_18 [1] : vector<5x5xf32> to vector<5xf32>
    %49 = vector.shape_cast %48 : vector<5xf32> to vector<5x1xf32>
    %50 = tpu.reciprocal %49 {approx = true} : vector<5x1xf32> -> vector<5x1xf32>
    %51 = vector.broadcast %50 : vector<5x1xf32> to vector<5x5xf32>
    %52 = arith.mulf %47, %51 : vector<5x5xf32>
    %53 = arith.truncf %52 : vector<5x5xf32> to vector<5x5xbf16>
    %54 = arith.truncf %39 : vector<5x16xf32> to vector<5x16xbf16>
    %cst_19 = arith.constant dense<0.000000e+00> : vector<5x16xf32>
    %55 = tpu.matmul %53, %54, %cst_19 {dimension_numbers = #tpu.dot_dimension_numbers<[1], [0], [0], [1], [0, 0, 1, 1], [], []>} : vector<5x5xbf16>, vector<5x16xbf16>, vector<5x16xf32> -> vector<5x16xf32>
    %56 = arith.truncf %55 : vector<5x16xf32> to vector<5x16xbf16>
    %57 = vector.extract_strided_slice %2 {offsets = [1, 0, 0], sizes = [1, 16, 32], strides = [1, 1, 1]} : vector<2x16x32xf32> to vector<1x16x32xf32>
    %58 = vector.shape_cast %57 : vector<1x16x32xf32> to vector<16x32xf32>
    %59 = arith.truncf %58 : vector<16x32xf32> to vector<16x32xbf16>
    %cst_20 = arith.constant dense<0.000000e+00> : vector<5x32xf32>
    %60 = tpu.matmul %56, %59, %cst_20 {dimension_numbers = #tpu.dot_dimension_numbers<[1], [0], [0], [1], [0, 0, 1, 1], [], []>} : vector<5x16xbf16>, vector<16x32xbf16>, vector<5x32xf32> -> vector<5x32xf32>
    %61 = arith.addf %34, %60 : vector<5x32xf32>
    %c0_21 = arith.constant 0 : index
    %c0_22 = arith.constant 0 : index
    %c0_23 = arith.constant 0 : index
    %62 = vector.load %arg5[%c0_21, %c0_22, %c0_23] : memref<1x5x32xf32, #tpu.memory_space<vmem>>, vector<1x5x32xf32>
    %63 = vector.shape_cast %62 : vector<1x5x32xf32> to vector<5x32xf32>
    %64 = vector.shape_cast %61 : vector<5x32xf32> to vector<1x5x32xf32>
    tpu.vector_store %arg5[%c0_21, %c0_22, %c0_23], %64 {strides = array<i32>} : memref<1x5x32xf32, #tpu.memory_space<vmem>>, vector<1x5x32xf32>,
    return
  }
  func.func @transform_0(%arg0: i32) -> (i32, i32, i32) {
    %c0_i32 = arith.constant 0 : i32
    %c0_i32_0 = arith.constant 0 : i32
    %c0_i32_1 = arith.constant 0 : i32
    return %arg0, %c0_i32, %c0_i32_0 : i32, i32, i32
  }
  func.func @transform_1(%arg0: i32) -> (i32, i32, i32) {
    %c0_i32 = arith.constant 0 : i32
    %c0_i32_0 = arith.constant 0 : i32
    %c0_i32_1 = arith.constant 0 : i32
    %c0_i32_2 = arith.constant 0 : i32
    return %c0_i32, %c0_i32_0, %c0_i32_1 : i32, i32, i32
  }
  func.func @transform_2(%arg0: i32) -> (i32, i32) {
    %c0_i32 = arith.constant 0 : i32
    %c0_i32_0 = arith.constant 0 : i32
    %c0_i32_1 = arith.constant 0 : i32
    return %c0_i32, %c0_i32_0 : i32, i32
  }
  func.func @transform_3(%arg0: i32) -> (i32, i32, i32) {
    %c0_i32 = arith.constant 0 : i32
    %c0_i32_0 = arith.constant 0 : i32
    %c0_i32_1 = arith.constant 0 : i32
    return %arg0, %c0_i32, %c0_i32_0 : i32, i32, i32
  }
  func.func @transform_4(%arg0: i32) -> (i32, i32, i32) {
    %c0_i32 = arith.constant 0 : i32
    %c0_i32_0 = arith.constant 0 : i32
    %c0_i32_1 = arith.constant 0 : i32
    return %arg0, %c0_i32, %c0_i32_0 : i32, i32, i32
  }
}

module attributes {stable_mosaic.version = 11 : i64} {
  func.func @_ln_linear_kernel(%arg0: i32, %arg1: i32, %arg2: memref<10x32xf32, #tpu.memory_space<vmem>>, %arg3: memref<1x32xf32, #tpu.memory_space<vmem>>, %arg4: memref<1x32xf32, #tpu.memory_space<vmem>>, %arg5: memref<32x96xf32, #tpu.memory_space<vmem>>, %arg6: memref<1x96xf32, #tpu.memory_space<vmem>>, %arg7: memref<10x96xf32, #tpu.memory_space<vmem>>) attributes {dimension_semantics = [#tpu.dimension_semantics<parallel>, #tpu.dimension_semantics<parallel>], iteration_bounds = array<i64: 1, 1>, scalar_prefetch = 0 : i64, scratch_operands = 0 : i64, tpu.core_type = #tpu.core_type<tc>, window_params = [{transform_indices = @transform_0, window_bounds = array<i64: 10, 32>}, {pipeline_mode = #tpu.pipeline_mode<synchronous>, transform_indices = @transform_1, window_bounds = array<i64: 1, 32>}, {pipeline_mode = #tpu.pipeline_mode<synchronous>, transform_indices = @transform_2, window_bounds = array<i64: 1, 32>}, {transform_indices = @transform_3, window_bounds = array<i64: 32, 96>}, {transform_indices = @transform_4, window_bounds = array<i64: 1, 96>}, {transform_indices = @transform_5, window_bounds = array<i64: 10, 96>}]} {
    %c0 = arith.constant 0 : index
    %c0_0 = arith.constant 0 : index
    %0 = vector.load %arg2[%c0, %c0_0] : memref<10x32xf32, #tpu.memory_space<vmem>>, vector<10x32xf32>
    %cst = arith.constant dense<0.000000e+00> : vector<10xf32>
    %1 = vector.multi_reduction <add>, %0, %cst [1] : vector<10x32xf32> to vector<10xf32>
    %2 = vector.shape_cast %1 : vector<10xf32> to vector<10x1xf32>
    %cst_1 = arith.constant 3.200000e+01 : f32
    %3 = vector.broadcast %cst_1 : f32 to vector<10x1xf32>
    %4 = arith.divf %2, %3 : vector<10x1xf32>
    %5 = vector.broadcast %4 : vector<10x1xf32> to vector<10x32xf32>
    %6 = arith.subf %0, %5 : vector<10x32xf32>
    %7 = arith.mulf %6, %6 : vector<10x32xf32>
    %cst_2 = arith.constant dense<0.000000e+00> : vector<10xf32>
    %8 = vector.multi_reduction <add>, %7, %cst_2 [1] : vector<10x32xf32> to vector<10xf32>
    %9 = vector.shape_cast %8 : vector<10xf32> to vector<10x1xf32>
    %cst_3 = arith.constant 3.200000e+01 : f32
    %10 = vector.broadcast %cst_3 : f32 to vector<10x1xf32>
    %11 = arith.divf %9, %10 : vector<10x1xf32>
    %12 = vector.broadcast %4 : vector<10x1xf32> to vector<10x32xf32>
    %13 = arith.subf %0, %12 : vector<10x32xf32>
    %cst_4 = arith.constant 9.99999974E-6 : f32
    %14 = vector.broadcast %cst_4 : f32 to vector<10x1xf32>
    %15 = arith.addf %11, %14 : vector<10x1xf32>
    %16 = math.rsqrt %15 : vector<10x1xf32>
    %17 = vector.broadcast %16 : vector<10x1xf32> to vector<10x32xf32>
    %18 = arith.mulf %13, %17 : vector<10x32xf32>
    %c0_5 = arith.constant 0 : index
    %c0_6 = arith.constant 0 : index
    %19 = vector.load %arg3[%c0_5, %c0_6] : memref<1x32xf32, #tpu.memory_space<vmem>>, vector<1x32xf32>
    %20 = vector.broadcast %19 : vector<1x32xf32> to vector<10x32xf32>
    %21 = arith.mulf %18, %20 : vector<10x32xf32>
    %c0_7 = arith.constant 0 : index
    %c0_8 = arith.constant 0 : index
    %22 = vector.load %arg4[%c0_7, %c0_8] : memref<1x32xf32, #tpu.memory_space<vmem>>, vector<1x32xf32>
    %23 = vector.broadcast %22 : vector<1x32xf32> to vector<10x32xf32>
    %24 = arith.addf %21, %23 : vector<10x32xf32>
    %25 = arith.truncf %24 : vector<10x32xf32> to vector<10x32xbf16>
    %c0_9 = arith.constant 0 : index
    %c0_10 = arith.constant 0 : index
    %26 = vector.load %arg5[%c0_9, %c0_10] : memref<32x96xf32, #tpu.memory_space<vmem>>, vector<32x96xf32>
    %27 = arith.truncf %26 : vector<32x96xf32> to vector<32x96xbf16>
    %cst_11 = arith.constant dense<0.000000e+00> : vector<10x96xf32>
    %28 = tpu.matmul %25, %27, %cst_11 {dimension_numbers = #tpu.dot_dimension_numbers<[1], [0], [0], [1], [0, 0, 1, 1], [], []>} : vector<10x32xbf16>, vector<32x96xbf16>, vector<10x96xf32> -> vector<10x96xf32>
    %c0_12 = arith.constant 0 : index
    %c0_13 = arith.constant 0 : index
    %29 = vector.load %arg6[%c0_12, %c0_13] : memref<1x96xf32, #tpu.memory_space<vmem>>, vector<1x96xf32>
    %30 = vector.broadcast %29 : vector<1x96xf32> to vector<10x96xf32>
    %31 = arith.addf %28, %30 : vector<10x96xf32>
    %c0_14 = arith.constant 0 : index
    %c0_15 = arith.constant 0 : index
    %32 = vector.load %arg7[%c0_14, %c0_15] : memref<10x96xf32, #tpu.memory_space<vmem>>, vector<10x96xf32>
    tpu.vector_store %arg7[%c0_14, %c0_15], %31 {strides = array<i32>} : memref<10x96xf32, #tpu.memory_space<vmem>>, vector<10x96xf32>,
    return
  }
  func.func @transform_0(%arg0: i32, %arg1: i32) -> (i32, i32) {
    %c0_i32 = arith.constant 0 : i32
    %c0_i32_0 = arith.constant 0 : i32
    return %arg0, %c0_i32 : i32, i32
  }
  func.func @transform_1(%arg0: i32, %arg1: i32) -> (i32, i32) {
    %c0_i32 = arith.constant 0 : i32
    %c0_i32_0 = arith.constant 0 : i32
    %c0_i32_1 = arith.constant 0 : i32
    return %c0_i32, %c0_i32_0 : i32, i32
  }
  func.func @transform_2(%arg0: i32, %arg1: i32) -> (i32, i32) {
    %c0_i32 = arith.constant 0 : i32
    %c0_i32_0 = arith.constant 0 : i32
    %c0_i32_1 = arith.constant 0 : i32
    return %c0_i32, %c0_i32_0 : i32, i32
  }
  func.func @transform_3(%arg0: i32, %arg1: i32) -> (i32, i32) {
    %c0_i32 = arith.constant 0 : i32
    %c0_i32_0 = arith.constant 0 : i32
    return %c0_i32, %arg1 : i32, i32
  }
  func.func @transform_4(%arg0: i32, %arg1: i32) -> (i32, i32) {
    %c0_i32 = arith.constant 0 : i32
    %c0_i32_0 = arith.constant 0 : i32
    return %c0_i32, %arg1 : i32, i32
  }
  func.func @transform_5(%arg0: i32, %arg1: i32) -> (i32, i32) {
    %c0_i32 = arith.constant 0 : i32
    return %arg0, %arg1 : i32, i32
  }
}

module attributes {stable_mosaic.version = 11 : i64} {
  func.func @_ln_linear_kernel(%arg0: i32, %arg1: i32, %arg2: memref<10x32xf32, #tpu.memory_space<vmem>>, %arg3: memref<1x32xf32, #tpu.memory_space<vmem>>, %arg4: memref<1x32xf32, #tpu.memory_space<vmem>>, %arg5: memref<32x64xf32, #tpu.memory_space<vmem>>, %arg6: memref<1x64xf32, #tpu.memory_space<vmem>>, %arg7: memref<10x64xf32, #tpu.memory_space<vmem>>) attributes {dimension_semantics = [#tpu.dimension_semantics<parallel>, #tpu.dimension_semantics<parallel>], iteration_bounds = array<i64: 1, 1>, scalar_prefetch = 0 : i64, scratch_operands = 0 : i64, tpu.core_type = #tpu.core_type<tc>, window_params = [{transform_indices = @transform_0, window_bounds = array<i64: 10, 32>}, {pipeline_mode = #tpu.pipeline_mode<synchronous>, transform_indices = @transform_1, window_bounds = array<i64: 1, 32>}, {pipeline_mode = #tpu.pipeline_mode<synchronous>, transform_indices = @transform_2, window_bounds = array<i64: 1, 32>}, {transform_indices = @transform_3, window_bounds = array<i64: 32, 64>}, {transform_indices = @transform_4, window_bounds = array<i64: 1, 64>}, {transform_indices = @transform_5, window_bounds = array<i64: 10, 64>}]} {
    %c0 = arith.constant 0 : index
    %c0_0 = arith.constant 0 : index
    %0 = vector.load %arg2[%c0, %c0_0] : memref<10x32xf32, #tpu.memory_space<vmem>>, vector<10x32xf32>
    %cst = arith.constant dense<0.000000e+00> : vector<10xf32>
    %1 = vector.multi_reduction <add>, %0, %cst [1] : vector<10x32xf32> to vector<10xf32>
    %2 = vector.shape_cast %1 : vector<10xf32> to vector<10x1xf32>
    %cst_1 = arith.constant 3.200000e+01 : f32
    %3 = vector.broadcast %cst_1 : f32 to vector<10x1xf32>
    %4 = arith.divf %2, %3 : vector<10x1xf32>
    %5 = vector.broadcast %4 : vector<10x1xf32> to vector<10x32xf32>
    %6 = arith.subf %0, %5 : vector<10x32xf32>
    %7 = arith.mulf %6, %6 : vector<10x32xf32>
    %cst_2 = arith.constant dense<0.000000e+00> : vector<10xf32>
    %8 = vector.multi_reduction <add>, %7, %cst_2 [1] : vector<10x32xf32> to vector<10xf32>
    %9 = vector.shape_cast %8 : vector<10xf32> to vector<10x1xf32>
    %cst_3 = arith.constant 3.200000e+01 : f32
    %10 = vector.broadcast %cst_3 : f32 to vector<10x1xf32>
    %11 = arith.divf %9, %10 : vector<10x1xf32>
    %12 = vector.broadcast %4 : vector<10x1xf32> to vector<10x32xf32>
    %13 = arith.subf %0, %12 : vector<10x32xf32>
    %cst_4 = arith.constant 9.99999974E-6 : f32
    %14 = vector.broadcast %cst_4 : f32 to vector<10x1xf32>
    %15 = arith.addf %11, %14 : vector<10x1xf32>
    %16 = math.rsqrt %15 : vector<10x1xf32>
    %17 = vector.broadcast %16 : vector<10x1xf32> to vector<10x32xf32>
    %18 = arith.mulf %13, %17 : vector<10x32xf32>
    %c0_5 = arith.constant 0 : index
    %c0_6 = arith.constant 0 : index
    %19 = vector.load %arg3[%c0_5, %c0_6] : memref<1x32xf32, #tpu.memory_space<vmem>>, vector<1x32xf32>
    %20 = vector.broadcast %19 : vector<1x32xf32> to vector<10x32xf32>
    %21 = arith.mulf %18, %20 : vector<10x32xf32>
    %c0_7 = arith.constant 0 : index
    %c0_8 = arith.constant 0 : index
    %22 = vector.load %arg4[%c0_7, %c0_8] : memref<1x32xf32, #tpu.memory_space<vmem>>, vector<1x32xf32>
    %23 = vector.broadcast %22 : vector<1x32xf32> to vector<10x32xf32>
    %24 = arith.addf %21, %23 : vector<10x32xf32>
    %25 = arith.truncf %24 : vector<10x32xf32> to vector<10x32xbf16>
    %c0_9 = arith.constant 0 : index
    %c0_10 = arith.constant 0 : index
    %26 = vector.load %arg5[%c0_9, %c0_10] : memref<32x64xf32, #tpu.memory_space<vmem>>, vector<32x64xf32>
    %27 = arith.truncf %26 : vector<32x64xf32> to vector<32x64xbf16>
    %cst_11 = arith.constant dense<0.000000e+00> : vector<10x64xf32>
    %28 = tpu.matmul %25, %27, %cst_11 {dimension_numbers = #tpu.dot_dimension_numbers<[1], [0], [0], [1], [0, 0, 1, 1], [], []>} : vector<10x32xbf16>, vector<32x64xbf16>, vector<10x64xf32> -> vector<10x64xf32>
    %c0_12 = arith.constant 0 : index
    %c0_13 = arith.constant 0 : index
    %29 = vector.load %arg6[%c0_12, %c0_13] : memref<1x64xf32, #tpu.memory_space<vmem>>, vector<1x64xf32>
    %30 = vector.broadcast %29 : vector<1x64xf32> to vector<10x64xf32>
    %31 = arith.addf %28, %30 : vector<10x64xf32>
    %cst_14 = arith.constant 5.000000e-01 : f32
    %32 = vector.broadcast %cst_14 : f32 to vector<10x64xf32>
    %33 = arith.mulf %32, %31 : vector<10x64xf32>
    %cst_15 = arith.constant 0.707106769 : f32
    %34 = vector.broadcast %cst_15 : f32 to vector<10x64xf32>
    %35 = arith.mulf %31, %34 : vector<10x64xf32>
    %36 = math.erf %35 : vector<10x64xf32>
    %cst_16 = arith.constant 1.000000e+00 : f32
    %37 = vector.broadcast %cst_16 : f32 to vector<10x64xf32>
    %38 = arith.addf %37, %36 : vector<10x64xf32>
    %39 = arith.mulf %33, %38 : vector<10x64xf32>
    %c0_17 = arith.constant 0 : index
    %c0_18 = arith.constant 0 : index
    %40 = vector.load %arg7[%c0_17, %c0_18] : memref<10x64xf32, #tpu.memory_space<vmem>>, vector<10x64xf32>
    tpu.vector_store %arg7[%c0_17, %c0_18], %39 {strides = array<i32>} : memref<10x64xf32, #tpu.memory_space<vmem>>, vector<10x64xf32>,
    return
  }
  func.func @transform_0(%arg0: i32, %arg1: i32) -> (i32, i32) {
    %c0_i32 = arith.constant 0 : i32
    %c0_i32_0 = arith.constant 0 : i32
    return %arg0, %c0_i32 : i32, i32
  }
  func.func @transform_1(%arg0: i32, %arg1: i32) -> (i32, i32) {
    %c0_i32 = arith.constant 0 : i32
    %c0_i32_0 = arith.constant 0 : i32
    %c0_i32_1 = arith.constant 0 : i32
    return %c0_i32, %c0_i32_0 : i32, i32
  }
  func.func @transform_2(%arg0: i32, %arg1: i32) -> (i32, i32) {
    %c0_i32 = arith.constant 0 : i32
    %c0_i32_0 = arith.constant 0 : i32
    %c0_i32_1 = arith.constant 0 : i32
    return %c0_i32, %c0_i32_0 : i32, i32
  }
  func.func @transform_3(%arg0: i32, %arg1: i32) -> (i32, i32) {
    %c0_i32 = arith.constant 0 : i32
    %c0_i32_0 = arith.constant 0 : i32
    return %c0_i32, %arg1 : i32, i32
  }
  func.func @transform_4(%arg0: i32, %arg1: i32) -> (i32, i32) {
    %c0_i32 = arith.constant 0 : i32
    %c0_i32_0 = arith.constant 0 : i32
    return %c0_i32, %arg1 : i32, i32
  }
  func.func @transform_5(%arg0: i32, %arg1: i32) -> (i32, i32) {
    %c0_i32 = arith.constant 0 : i32
    return %arg0, %arg1 : i32, i32
  }
}

module attributes {stable_mosaic.version = 11 : i64} {
  func.func @_linear_kernel(%arg0: i32, %arg1: i32, %arg2: i32, %arg3: memref<10x64xf32, #tpu.memory_space<vmem>>, %arg4: memref<64x32xf32, #tpu.memory_space<vmem>>, %arg5: memref<1x32xf32, #tpu.memory_space<vmem>>, %arg6: memref<10x32xf32, #tpu.memory_space<vmem>>, %arg7: memref<10x32xf32, #tpu.memory_space<vmem>>, %arg8: memref<10x32xf32, #tpu.memory_space<vmem>>) attributes {dimension_semantics = [#tpu.dimension_semantics<parallel>, #tpu.dimension_semantics<parallel>, #tpu.dimension_semantics<arbitrary>], iteration_bounds = array<i64: 1, 1, 1>, scalar_prefetch = 0 : i64, scratch_operands = 1 : i64, tpu.core_type = #tpu.core_type<tc>, window_params = [{transform_indices = @transform_0, window_bounds = array<i64: 10, 64>}, {transform_indices = @transform_1, window_bounds = array<i64: 64, 32>}, {transform_indices = @transform_2, window_bounds = array<i64: 1, 32>}, {transform_indices = @transform_3, window_bounds = array<i64: 10, 32>}, {transform_indices = @transform_4, window_bounds = array<i64: 10, 32>}]} {
    %c0_i32 = arith.constant 0 : i32
    %0 = arith.cmpi eq, %arg2, %c0_i32 : i32
    %1 = arith.extui %0 : i1 to i32
    %c0_i32_0 = arith.constant 0 : i32
    %2 = arith.cmpi ne, %1, %c0_i32_0 : i32
    scf.if %2 {
      %cst_10 = arith.constant 0.000000e+00 : f32
      %14 = vector.broadcast %cst_10 : f32 to vector<10x32xf32>
      %c0_11 = arith.constant 0 : index
      %c0_12 = arith.constant 0 : index
      %15 = vector.load %arg8[%c0_11, %c0_12] : memref<10x32xf32, #tpu.memory_space<vmem>>, vector<10x32xf32>
      tpu.vector_store %arg8[%c0_11, %c0_12], %14 {strides = array<i32>} : memref<10x32xf32, #tpu.memory_space<vmem>>, vector<10x32xf32>,
    } else {
    }
    %c0 = arith.constant 0 : index
    %c0_1 = arith.constant 0 : index
    %3 = vector.load %arg8[%c0, %c0_1] : memref<10x32xf32, #tpu.memory_space<vmem>>, vector<10x32xf32>
    %c0_2 = arith.constant 0 : index
    %c0_3 = arith.constant 0 : index
    %4 = vector.load %arg3[%c0_2, %c0_3] : memref<10x64xf32, #tpu.memory_space<vmem>>, vector<10x64xf32>
    %5 = arith.truncf %4 : vector<10x64xf32> to vector<10x64xbf16>
    %c0_4 = arith.constant 0 : index
    %c0_5 = arith.constant 0 : index
    %6 = vector.load %arg4[%c0_4, %c0_5] : memref<64x32xf32, #tpu.memory_space<vmem>>, vector<64x32xf32>
    %7 = arith.truncf %6 : vector<64x32xf32> to vector<64x32xbf16>
    %cst = arith.constant dense<0.000000e+00> : vector<10x32xf32>
    %8 = tpu.matmul %5, %7, %cst {dimension_numbers = #tpu.dot_dimension_numbers<[1], [0], [0], [1], [0, 0, 1, 1], [], []>} : vector<10x64xbf16>, vector<64x32xbf16>, vector<10x32xf32> -> vector<10x32xf32>
    %9 = arith.addf %3, %8 : vector<10x32xf32>
    %c0_6 = arith.constant 0 : index
    %c0_7 = arith.constant 0 : index
    %10 = vector.load %arg8[%c0_6, %c0_7] : memref<10x32xf32, #tpu.memory_space<vmem>>, vector<10x32xf32>
    tpu.vector_store %arg8[%c0_6, %c0_7], %9 {strides = array<i32>} : memref<10x32xf32, #tpu.memory_space<vmem>>, vector<10x32xf32>,
    %c0_i32_8 = arith.constant 0 : i32
    %11 = arith.cmpi eq, %arg2, %c0_i32_8 : i32
    %12 = arith.extui %11 : i1 to i32
    %c0_i32_9 = arith.constant 0 : i32
    %13 = arith.cmpi ne, %12, %c0_i32_9 : i32
    scf.if %13 {
      %c0_10 = arith.constant 0 : index
      %c0_11 = arith.constant 0 : index
      %14 = vector.load %arg8[%c0_10, %c0_11] : memref<10x32xf32, #tpu.memory_space<vmem>>, vector<10x32xf32>
      %c0_12 = arith.constant 0 : index
      %c0_13 = arith.constant 0 : index
      %15 = vector.load %arg5[%c0_12, %c0_13] : memref<1x32xf32, #tpu.memory_space<vmem>>, vector<1x32xf32>
      %16 = vector.broadcast %15 : vector<1x32xf32> to vector<10x32xf32>
      %17 = arith.addf %14, %16 : vector<10x32xf32>
      %c0_14 = arith.constant 0 : index
      %c0_15 = arith.constant 0 : index
      %18 = vector.load %arg6[%c0_14, %c0_15] : memref<10x32xf32, #tpu.memory_space<vmem>>, vector<10x32xf32>
      %19 = arith.addf %17, %18 : vector<10x32xf32>
      %c0_16 = arith.constant 0 : index
      %c0_17 = arith.constant 0 : index
      %20 = vector.load %arg7[%c0_16, %c0_17] : memref<10x32xf32, #tpu.memory_space<vmem>>, vector<10x32xf32>
      tpu.vector_store %arg7[%c0_16, %c0_17], %19 {strides = array<i32>} : memref<10x32xf32, #tpu.memory_space<vmem>>, vector<10x32xf32>,
    } else {
    }
    return
  }
  func.func @transform_0(%arg0: i32, %arg1: i32, %arg2: i32) -> (i32, i32) {
    %c0_i32 = arith.constant 0 : i32
    return %arg0, %arg2 : i32, i32
  }
  func.func @transform_1(%arg0: i32, %arg1: i32, %arg2: i32) -> (i32, i32) {
    %c0_i32 = arith.constant 0 : i32
    return %arg2, %arg1 : i32, i32
  }
  func.func @transform_2(%arg0: i32, %arg1: i32, %arg2: i32) -> (i32, i32) {
    %c0_i32 = arith.constant 0 : i32
    %c0_i32_0 = arith.constant 0 : i32
    return %c0_i32, %arg1 : i32, i32
  }
  func.func @transform_3(%arg0: i32, %arg1: i32, %arg2: i32) -> (i32, i32) {
    %c0_i32 = arith.constant 0 : i32
    return %arg0, %arg1 : i32, i32
  }
  func.func @transform_4(%arg0: i32, %arg1: i32, %arg2: i32) -> (i32, i32) {
    %c0_i32 = arith.constant 0 : i32
    return %arg0, %arg1 : i32, i32
  }
}

module attributes {stable_mosaic.version = 11 : i64} {
  func.func @_layernorm_kernel(%arg0: i32, %arg1: memref<10x32xf32, #tpu.memory_space<vmem>>, %arg2: memref<1x32xf32, #tpu.memory_space<vmem>>, %arg3: memref<1x32xf32, #tpu.memory_space<vmem>>, %arg4: memref<10x32xf32, #tpu.memory_space<vmem>>) attributes {dimension_semantics = [#tpu.dimension_semantics<parallel>], iteration_bounds = array<i64: 1>, scalar_prefetch = 0 : i64, scratch_operands = 0 : i64, tpu.core_type = #tpu.core_type<tc>, window_params = [{transform_indices = @transform_0, window_bounds = array<i64: 10, 32>}, {pipeline_mode = #tpu.pipeline_mode<synchronous>, transform_indices = @transform_1, window_bounds = array<i64: 1, 32>}, {pipeline_mode = #tpu.pipeline_mode<synchronous>, transform_indices = @transform_2, window_bounds = array<i64: 1, 32>}, {transform_indices = @transform_3, window_bounds = array<i64: 10, 32>}]} {
    %c0 = arith.constant 0 : index
    %c0_0 = arith.constant 0 : index
    %0 = vector.load %arg1[%c0, %c0_0] : memref<10x32xf32, #tpu.memory_space<vmem>>, vector<10x32xf32>
    %cst = arith.constant dense<0.000000e+00> : vector<10xf32>
    %1 = vector.multi_reduction <add>, %0, %cst [1] : vector<10x32xf32> to vector<10xf32>
    %2 = vector.shape_cast %1 : vector<10xf32> to vector<10x1xf32>
    %cst_1 = arith.constant 3.200000e+01 : f32
    %3 = vector.broadcast %cst_1 : f32 to vector<10x1xf32>
    %4 = arith.divf %2, %3 : vector<10x1xf32>
    %5 = vector.broadcast %4 : vector<10x1xf32> to vector<10x32xf32>
    %6 = arith.subf %0, %5 : vector<10x32xf32>
    %7 = arith.mulf %6, %6 : vector<10x32xf32>
    %cst_2 = arith.constant dense<0.000000e+00> : vector<10xf32>
    %8 = vector.multi_reduction <add>, %7, %cst_2 [1] : vector<10x32xf32> to vector<10xf32>
    %9 = vector.shape_cast %8 : vector<10xf32> to vector<10x1xf32>
    %cst_3 = arith.constant 3.200000e+01 : f32
    %10 = vector.broadcast %cst_3 : f32 to vector<10x1xf32>
    %11 = arith.divf %9, %10 : vector<10x1xf32>
    %12 = vector.broadcast %4 : vector<10x1xf32> to vector<10x32xf32>
    %13 = arith.subf %0, %12 : vector<10x32xf32>
    %cst_4 = arith.constant 9.99999974E-6 : f32
    %14 = vector.broadcast %cst_4 : f32 to vector<10x1xf32>
    %15 = arith.addf %11, %14 : vector<10x1xf32>
    %16 = math.rsqrt %15 : vector<10x1xf32>
    %17 = vector.broadcast %16 : vector<10x1xf32> to vector<10x32xf32>
    %18 = arith.mulf %13, %17 : vector<10x32xf32>
    %c0_5 = arith.constant 0 : index
    %c0_6 = arith.constant 0 : index
    %19 = vector.load %arg2[%c0_5, %c0_6] : memref<1x32xf32, #tpu.memory_space<vmem>>, vector<1x32xf32>
    %20 = vector.broadcast %19 : vector<1x32xf32> to vector<10x32xf32>
    %21 = arith.mulf %18, %20 : vector<10x32xf32>
    %c0_7 = arith.constant 0 : index
    %c0_8 = arith.constant 0 : index
    %22 = vector.load %arg3[%c0_7, %c0_8] : memref<1x32xf32, #tpu.memory_space<vmem>>, vector<1x32xf32>
    %23 = vector.broadcast %22 : vector<1x32xf32> to vector<10x32xf32>
    %24 = arith.addf %21, %23 : vector<10x32xf32>
    %c0_9 = arith.constant 0 : index
    %c0_10 = arith.constant 0 : index
    %25 = vector.load %arg4[%c0_9, %c0_10] : memref<10x32xf32, #tpu.memory_space<vmem>>, vector<10x32xf32>
    tpu.vector_store %arg4[%c0_9, %c0_10], %24 {strides = array<i32>} : memref<10x32xf32, #tpu.memory_space<vmem>>, vector<10x32xf32>,
    return
  }
  func.func @transform_0(%arg0: i32) -> (i32, i32) {
    %c0_i32 = arith.constant 0 : i32
    %c0_i32_0 = arith.constant 0 : i32
    return %arg0, %c0_i32 : i32, i32
  }
  func.func @transform_1(%arg0: i32) -> (i32, i32) {
    %c0_i32 = arith.constant 0 : i32
    %c0_i32_0 = arith.constant 0 : i32
    %c0_i32_1 = arith.constant 0 : i32
    return %c0_i32, %c0_i32_0 : i32, i32
  }
  func.func @transform_2(%arg0: i32) -> (i32, i32) {
    %c0_i32 = arith.constant 0 : i32
    %c0_i32_0 = arith.constant 0 : i32
    %c0_i32_1 = arith.constant 0 : i32
    return %c0_i32, %c0_i32_0 : i32, i32
  }
  func.func @transform_3(%arg0: i32) -> (i32, i32) {
    %c0_i32 = arith.constant 0 : i32
    %c0_i32_0 = arith.constant 0 : i32
    return %arg0, %c0_i32 : i32, i32
  }
}

module attributes {stable_mosaic.version = 11 : i64} {
  func.func @_ln_linear_kernel(%arg0: i32, %arg1: i32, %arg2: memref<2x32xf32, #tpu.memory_space<vmem>>, %arg3: memref<1x32xf32, #tpu.memory_space<vmem>>, %arg4: memref<1x32xf32, #tpu.memory_space<vmem>>, %arg5: memref<32x5xf32, #tpu.memory_space<vmem>>, %arg6: memref<1x5xf32, #tpu.memory_space<vmem>>, %arg7: memref<2x5xf32, #tpu.memory_space<vmem>>) attributes {dimension_semantics = [#tpu.dimension_semantics<parallel>, #tpu.dimension_semantics<parallel>], iteration_bounds = array<i64: 1, 1>, scalar_prefetch = 0 : i64, scratch_operands = 0 : i64, tpu.core_type = #tpu.core_type<tc>, window_params = [{transform_indices = @transform_0, window_bounds = array<i64: 2, 32>}, {pipeline_mode = #tpu.pipeline_mode<synchronous>, transform_indices = @transform_1, window_bounds = array<i64: 1, 32>}, {pipeline_mode = #tpu.pipeline_mode<synchronous>, transform_indices = @transform_2, window_bounds = array<i64: 1, 32>}, {transform_indices = @transform_3, window_bounds = array<i64: 32, 5>}, {transform_indices = @transform_4, window_bounds = array<i64: 1, 5>}, {transform_indices = @transform_5, window_bounds = array<i64: 2, 5>}]} {
    %c0 = arith.constant 0 : index
    %c0_0 = arith.constant 0 : index
    %0 = vector.load %arg2[%c0, %c0_0] : memref<2x32xf32, #tpu.memory_space<vmem>>, vector<2x32xf32>
    %cst = arith.constant dense<0.000000e+00> : vector<2xf32>
    %1 = vector.multi_reduction <add>, %0, %cst [1] : vector<2x32xf32> to vector<2xf32>
    %2 = vector.shape_cast %1 : vector<2xf32> to vector<2x1xf32>
    %cst_1 = arith.constant 3.200000e+01 : f32
    %3 = vector.broadcast %cst_1 : f32 to vector<2x1xf32>
    %4 = arith.divf %2, %3 : vector<2x1xf32>
    %5 = vector.broadcast %4 : vector<2x1xf32> to vector<2x32xf32>
    %6 = arith.subf %0, %5 : vector<2x32xf32>
    %7 = arith.mulf %6, %6 : vector<2x32xf32>
    %cst_2 = arith.constant dense<0.000000e+00> : vector<2xf32>
    %8 = vector.multi_reduction <add>, %7, %cst_2 [1] : vector<2x32xf32> to vector<2xf32>
    %9 = vector.shape_cast %8 : vector<2xf32> to vector<2x1xf32>
    %cst_3 = arith.constant 3.200000e+01 : f32
    %10 = vector.broadcast %cst_3 : f32 to vector<2x1xf32>
    %11 = arith.divf %9, %10 : vector<2x1xf32>
    %12 = vector.broadcast %4 : vector<2x1xf32> to vector<2x32xf32>
    %13 = arith.subf %0, %12 : vector<2x32xf32>
    %cst_4 = arith.constant 9.99999974E-6 : f32
    %14 = vector.broadcast %cst_4 : f32 to vector<2x1xf32>
    %15 = arith.addf %11, %14 : vector<2x1xf32>
    %16 = math.rsqrt %15 : vector<2x1xf32>
    %17 = vector.broadcast %16 : vector<2x1xf32> to vector<2x32xf32>
    %18 = arith.mulf %13, %17 : vector<2x32xf32>
    %c0_5 = arith.constant 0 : index
    %c0_6 = arith.constant 0 : index
    %19 = vector.load %arg3[%c0_5, %c0_6] : memref<1x32xf32, #tpu.memory_space<vmem>>, vector<1x32xf32>
    %20 = vector.broadcast %19 : vector<1x32xf32> to vector<2x32xf32>
    %21 = arith.mulf %18, %20 : vector<2x32xf32>
    %c0_7 = arith.constant 0 : index
    %c0_8 = arith.constant 0 : index
    %22 = vector.load %arg4[%c0_7, %c0_8] : memref<1x32xf32, #tpu.memory_space<vmem>>, vector<1x32xf32>
    %23 = vector.broadcast %22 : vector<1x32xf32> to vector<2x32xf32>
    %24 = arith.addf %21, %23 : vector<2x32xf32>
    %25 = arith.truncf %24 : vector<2x32xf32> to vector<2x32xbf16>
    %c0_9 = arith.constant 0 : index
    %c0_10 = arith.constant 0 : index
    %26 = vector.load %arg5[%c0_9, %c0_10] : memref<32x5xf32, #tpu.memory_space<vmem>>, vector<32x5xf32>
    %27 = arith.truncf %26 : vector<32x5xf32> to vector<32x5xbf16>
    %cst_11 = arith.constant dense<0.000000e+00> : vector<2x5xf32>
    %28 = tpu.matmul %25, %27, %cst_11 {dimension_numbers = #tpu.dot_dimension_numbers<[1], [0], [0], [1], [0, 0, 1, 1], [], []>} : vector<2x32xbf16>, vector<32x5xbf16>, vector<2x5xf32> -> vector<2x5xf32>
    %c0_12 = arith.constant 0 : index
    %c0_13 = arith.constant 0 : index
    %29 = vector.load %arg6[%c0_12, %c0_13] : memref<1x5xf32, #tpu.memory_space<vmem>>, vector<1x5xf32>
    %30 = vector.broadcast %29 : vector<1x5xf32> to vector<2x5xf32>
    %31 = arith.addf %28, %30 : vector<2x5xf32>
    %c0_14 = arith.constant 0 : index
    %c0_15 = arith.constant 0 : index
    %32 = vector.load %arg7[%c0_14, %c0_15] : memref<2x5xf32, #tpu.memory_space<vmem>>, vector<2x5xf32>
    tpu.vector_store %arg7[%c0_14, %c0_15], %31 {strides = array<i32>} : memref<2x5xf32, #tpu.memory_space<vmem>>, vector<2x5xf32>,
    return
  }
  func.func @transform_0(%arg0: i32, %arg1: i32) -> (i32, i32) {
    %c0_i32 = arith.constant 0 : i32
    %c0_i32_0 = arith.constant 0 : i32
    return %arg0, %c0_i32 : i32, i32
  }
  func.func @transform_1(%arg0: i32, %arg1: i32) -> (i32, i32) {
    %c0_i32 = arith.constant 0 : i32
    %c0_i32_0 = arith.constant 0 : i32
    %c0_i32_1 = arith.constant 0 : i32
    return %c0_i32, %c0_i32_0 : i32, i32
  }
  func.func @transform_2(%arg0: i32, %arg1: i32) -> (i32, i32) {
    %c0_i32 = arith.constant 0 : i32
    %c0_i32_0 = arith.constant 0 : i32
    %c0_i32_1 = arith.constant 0 : i32
    return %c0_i32, %c0_i32_0 : i32, i32
  }
  func.func @transform_3(%arg0: i32, %arg1: i32) -> (i32, i32) {
    %c0_i32 = arith.constant 0 : i32
    %c0_i32_0 = arith.constant 0 : i32
    return %c0_i32, %arg1 : i32, i32
  }
  func.func @transform_4(%arg0: i32, %arg1: i32) -> (i32, i32) {
    %c0_i32 = arith.constant 0 : i32
    %c0_i32_0 = arith.constant 0 : i32
    return %c0_i32, %arg1 : i32, i32
  }
  func.func @transform_5(%arg0: i32, %arg1: i32) -> (i32, i32) {
    %c0_i32 = arith.constant 0 : i32
    return %arg0, %arg1 : i32, i32
  }
}

</mosaic_0001>

<llo_original>
// kernel: _lambda_.20
$region0: #{_lambda_.20}
  #allocation0 [shape = 'u32[]', space=smem, size = 0x4, offset = 0x4, fixed_abs, tag = 'smem constant byte address 0x4 - core index']
  #allocation1 [shape = 'u32[72,128]{1,0:T(1,128)}', space=vmem, size = 0x9000, scoped, tag = 'internal scratch']
  #allocation2 [shape = 'f32[32,32]{1,0:T(8,128)}', space=vmem, size = 0x4000, scoped, tag = 'scratch operand']
  %s0 = inlined_call_operand.vmem [shape: f32[32,192], index: 0, kind: input, shape index: {}]
  %s1 = inlined_call_operand.vmem [shape: f32[192,32], index: 1, kind: input, shape index: {}]
  %s2 = inlined_call_operand.vmem [shape: f32[1,32], index: 2, kind: input, shape index: {}]
  %s3 = inlined_call_operand.vmem [shape: f32[32,32], index: 3, kind: output, shape index: {}]
  %s4 = sld [smem:[#allocation0]]
  $region30: #{_lambda_.20} parent=0
    _
  %s6 = ssub.s32 1, %s4
  %s7 = scalar_select 0, %s6, %s4
  // Predicated region
  $region2: #{_lambda_.20} parent=0 // pred_check
    _
  $region3: #{_lambda_.20} parent=0 // pred_check_branch
    %9 = sbr.rel (0) target = $region5
  $region4: #{_lambda_.20} parent=0 // pred_region
    _
  $region5: #{_lambda_.20} parent=0 // pred_fallthru
    _
  // Predicated region
  $region6: #{_lambda_.20} parent=0 // pred_check
    _
  $region7: #{_lambda_.20} parent=0 // pred_check_branch
    %11 = sbr.rel (0) target = $region9
  $region8: #{_lambda_.20} parent=0 // pred_region
    _
  $region9: #{_lambda_.20} parent=0 // pred_fallthru
    _
  // Predicated region
  $region10: #{_lambda_.20} parent=0 // pred_check
    _
  $region11: #{_lambda_.20} parent=0 // pred_check_branch
    %13 = sbr.rel (0) target = $region13
  $region12: #{_lambda_.20} parent=0 // pred_region
    _
  $region13: #{_lambda_.20} parent=0 // pred_fallthru
    _
  %p15 = scmp.eq.s32.totalorder 0, 0
  // Predicated region
  $region14: #{_lambda_.20} parent=0 // pred_check
    %p16 = pneg %p15
  $region15: #{_lambda_.20} parent=0 // pred_check_branch
    %18 = sbr.rel (%p16) target = $region17
  $region16: #{_lambda_.20} parent=0 // pred_region
    %vm19 = vcmask 261120
    %20 = vst.msk [vmem:[#allocation2] sm:$0xff] %vm19, 0.0
    %21 = vst.msk [vmem:[#allocation2 + $0x8] sm:$0xff] %vm19, 0.0
    %22 = vst.msk [vmem:[#allocation2 + $0x10] sm:$0xff] %vm19, 0.0
    %23 = vst.msk [vmem:[#allocation2 + $0x18] sm:$0xff] %vm19, 0.0
  $region17: #{_lambda_.20} parent=0 // pred_fallthru
    _
  %v24 = vld [vmem:[#allocation2] sm:$0xff]
  %v25 = vld [vmem:[#allocation2 + $0x8] sm:$0xff]
  %v26 = vld [vmem:[#allocation2 + $0x10] sm:$0xff]
  %v27 = vld [vmem:[#allocation2 + $0x18] sm:$0xff]
  %v28 = vld [vmem:[%s0] sm:$0xff]
  %v29 = vld [vmem:[%s0 + $0x8] sm:$0xff]
  %v30 = vld [vmem:[%s0 + $0x10] sm:$0xff]
  %v31 = vld [vmem:[%s0 + $0x18] sm:$0xff]
  %v32 = vld [vmem:[%s0 + $0x20] sm:$0xff]
  %v33 = vld [vmem:[%s0 + $0x28] sm:$0xff]
  %v34 = vld [vmem:[%s0 + $0x30] sm:$0xff]
  %v35 = vld [vmem:[%s0 + $0x38] sm:$0xff]
  %v36 = vpack.c.bf16 %v30, %v28
  %v37 = vpack.c.bf16 %v31, %v29
  %v38 = vpack.c.bf16 %v34, %v32
  %v39 = vpack.c.bf16 %v35, %v33
  %v40 = vld [vmem:[%s1] sm:$0xff]
  %v41 = vld [vmem:[%s1 + $0x8] sm:$0xff]
  %v42 = vld [vmem:[%s1 + $0x10] sm:$0xff]
  %v43 = vld [vmem:[%s1 + $0x18] sm:$0xff]
  %v44 = vld [vmem:[%s1 + $0x20] sm:$0xff]
  %v45 = vld [vmem:[%s1 + $0x28] sm:$0xff]
  %v46 = vld [vmem:[%s1 + $0x30] sm:$0xff]
  %v47 = vld [vmem:[%s1 + $0x38] sm:$0xff]
  %v48 = vld [vmem:[%s1 + $0x40] sm:$0xff]
  %v49 = vld [vmem:[%s1 + $0x48] sm:$0xff]
  %v50 = vld [vmem:[%s1 + $0x50] sm:$0xff]
  %v51 = vld [vmem:[%s1 + $0x58] sm:$0xff]
  %v52 = vld [vmem:[%s1 + $0x60] sm:$0xff]
  %v53 = vld [vmem:[%s1 + $0x68] sm:$0xff]
  %v54 = vld [vmem:[%s1 + $0x70] sm:$0xff]
  %v55 = vld [vmem:[%s1 + $0x78] sm:$0xff]
  %v56 = vld [vmem:[%s1 + $0x80] sm:$0xff]
  %v57 = vld [vmem:[%s1 + $0x88] sm:$0xff]
  %v58 = vld [vmem:[%s1 + $0x90] sm:$0xff]
  %v59 = vld [vmem:[%s1 + $0x98] sm:$0xff]
  %v60 = vld [vmem:[%s1 + $0xa0] sm:$0xff]
  %v61 = vld [vmem:[%s1 + $0xa8] sm:$0xff]
  %v62 = vld [vmem:[%s1 + $0xb0] sm:$0xff]
  %v63 = vld [vmem:[%s1 + $0xb8] sm:$0xff]
  %v64 = vpack.c.bf16 %v41, %v40
  %v65 = vpack.c.bf16 %v43, %v42
  %v66 = vpack.c.bf16 %v45, %v44
  %v67 = vpack.c.bf16 %v47, %v46
  %v68 = vpack.c.bf16 %v49, %v48
  %v69 = vpack.c.bf16 %v51, %v50
  %v70 = vpack.c.bf16 %v53, %v52
  %v71 = vpack.c.bf16 %v55, %v54
  %v72 = vpack.c.bf16 %v57, %v56
  %v73 = vpack.c.bf16 %v59, %v58
  %v74 = vpack.c.bf16 %v61, %v60
  %v75 = vpack.c.bf16 %v63, %v62
  %vm76 = vcmask 523264
  %v78 = vsel %vm76, %v37, 0
  %v81 = vsel %vm76, %v39, 0
  %83 = vmatpush.bf16.msra.mxu0 %v71
  %84 = vmatpush.bf16.msra.mxu0 %v70
  %85 = vmatpush.bf16.msra.mxu0 %v69
  %86 = vmatpush.bf16.msra.mxu0 %v68
  %87 = vmatpush.bf16.msra.mxu0 %v67
  %88 = vmatpush.bf16.msra.mxu0 %v66
  %89 = vmatpush.bf16.msra.mxu0 %v65
  %90 = vmatpush.bf16.msra.mxu0 %v64
  %91 = vmatmul.bf16.gmra.mxu0 %v36
  %v92 = vpop.f32.mrf.mxu0
  %v93 = vadd.f32 0.0, %v92
  %v94 = vpop.f32.mrf.mxu0
  %v95 = vadd.f32 0.0, %v94
  %96 = vmatmul.bf16.gmra.mxu0 %v38
  %v97 = vpop.f32.mrf.mxu0
  %v98 = vadd.f32 0.0, %v97
  %v99 = vpop.f32.mrf.mxu0
  %v100 = vadd.f32 0.0, %v99
  %101 = vdwg.mxu0
  %102 = vmatpush.bf16.msra.mxu0 0
  %103 = vmatpush.bf16.msra.mxu0 0
  %104 = vmatpush.bf16.msra.mxu0 0
  %105 = vmatpush.bf16.msra.mxu0 0
  %106 = vmatpush.bf16.msra.mxu0 %v75
  %107 = vmatpush.bf16.msra.mxu0 %v74
  %108 = vmatpush.bf16.msra.mxu0 %v73
  %109 = vmatpush.bf16.msra.mxu0 %v72
  %110 = vmatmul.bf16.gmra.mxu0 %v78
  %v111 = vpop.f32.mrf.mxu0
  %v112 = vadd.f32 %v93, %v111
  %v113 = vpop.f32.mrf.mxu0
  %v114 = vadd.f32 %v95, %v113
  %115 = vmatmul.bf16.gmra.mxu0 %v81
  %v116 = vpop.f32.mrf.mxu0
  %v117 = vadd.f32 %v98, %v116
  %v118 = vpop.f32.mrf.mxu0
  %v119 = vadd.f32 %v100, %v118
  %120 = vdwg.mxu0
  %v121 = vadd.f32 %v24, %v112
  %v122 = vadd.f32 %v25, %v114
  %v123 = vadd.f32 %v26, %v117
  %v124 = vadd.f32 %v27, %v119
  %vm125 = vcmask 261120
  %126 = vst.msk [vmem:[#allocation2] sm:$0xff] %vm125, %v121
  %127 = vst.msk [vmem:[#allocation2 + $0x8] sm:$0xff] %vm125, %v122
  %128 = vst.msk [vmem:[#allocation2 + $0x10] sm:$0xff] %vm125, %v123
  %129 = vst.msk [vmem:[#allocation2 + $0x18] sm:$0xff] %vm125, %v124
  // Predicated region
  $region18: #{_lambda_.20} parent=0 // pred_check
    %p130 = pneg %p15
  $region19: #{_lambda_.20} parent=0 // pred_check_branch
    %132 = sbr.rel (%p130) target = $region21
  $region20: #{_lambda_.20} parent=0 // pred_region
    %v133 = vld [vmem:[#allocation2] sm:$0xff]
    %v134 = vld [vmem:[#allocation2 + $0x8] sm:$0xff]
    %v135 = vld [vmem:[#allocation2 + $0x10] sm:$0xff]
    %v136 = vld [vmem:[#allocation2 + $0x18] sm:$0xff]
    %v137 = vld [vmem:[%s2] sm:$0x1]
    %v139 = vperm.slane %v137, 0
    %v141 = vadd.f32 %v133, %v139
    %v142 = vadd.f32 %v134, %v139
    %v143 = vadd.f32 %v135, %v139
    %v144 = vadd.f32 %v136, %v139
    %145 = vst.msk [vmem:[%s3] sm:$0xff] %vm125, %v141
    %146 = vst.msk [vmem:[%s3 + $0x8] sm:$0xff] %vm125, %v142
    %147 = vst.msk [vmem:[%s3 + $0x10] sm:$0xff] %vm125, %v143
    %148 = vst.msk [vmem:[%s3 + $0x18] sm:$0xff] %vm125, %v144
  $region21: #{_lambda_.20} parent=0 // pred_fallthru
    _
  // Predicated region
  $region22: #{_lambda_.20} parent=0 // pred_check
    _
  $region23: #{_lambda_.20} parent=0 // pred_check_branch
    %150 = sbr.rel (0) target = $region25
  $region24: #{_lambda_.20} parent=0 // pred_region
    _
  $region25: #{_lambda_.20} parent=0 // pred_fallthru
    _
  // Predicated region
  $region26: #{_lambda_.20} parent=0 // pred_check
    _
  $region27: #{_lambda_.20} parent=0 // pred_check_branch
    %152 = sbr.rel (0) target = $region29
  $region28: #{_lambda_.20} parent=0 // pred_region
    _
  $region29: #{_lambda_.20} parent=0 // pred_fallthru
    _

// kernel: _lambda_.21
$region0: #{_lambda_.21}
  #allocation0 [shape = 'u32[]', space=smem, size = 0x4, offset = 0x4, fixed_abs, tag = 'smem constant byte address 0x4 - core index']
  #allocation1 [shape = 'u32[72,128]{1,0:T(1,128)}', space=vmem, size = 0x9000, scoped, tag = 'internal scratch']
  %s0 = inlined_call_operand.vmem [shape: f32[40,32], index: 0, kind: input, shape index: {}]
  %s1 = inlined_call_operand.vmem [shape: f32[1,32], index: 1, kind: input, shape index: {}]
  %s2 = inlined_call_operand.vmem [shape: f32[1,32], index: 2, kind: input, shape index: {}]
  %s3 = inlined_call_operand.vmem [shape: f32[32,96], index: 3, kind: input, shape index: {}]
  %s4 = inlined_call_operand.vmem [shape: f32[1,96], index: 4, kind: input, shape index: {}]
  %s5 = inlined_call_operand.vmem [shape: f32[40,96], index: 5, kind: output, shape index: {}]
  %s6 = sld [smem:[#allocation0]]
  $region30: #{_lambda_.21} parent=0
    _
  %s8 = ssub.s32 1, %s6
  %s9 = scalar_select 0, %s8, %s6
  // Predicated region
  $region2: #{_lambda_.21} parent=0 // pred_check
    _
  $region3: #{_lambda_.21} parent=0 // pred_check_branch
    %11 = sbr.rel (0) target = $region5
  $region4: #{_lambda_.21} parent=0 // pred_region
    _
  $region5: #{_lambda_.21} parent=0 // pred_fallthru
    _
  // Predicated region
  $region6: #{_lambda_.21} parent=0 // pred_check
    _
  $region7: #{_lambda_.21} parent=0 // pred_check_branch
    %13 = sbr.rel (0) target = $region9
  $region8: #{_lambda_.21} parent=0 // pred_region
    _
  $region9: #{_lambda_.21} parent=0 // pred_fallthru
    _
  // Predicated region
  $region10: #{_lambda_.21} parent=0 // pred_check
    _
  $region11: #{_lambda_.21} parent=0 // pred_check_branch
    %15 = sbr.rel (0) target = $region13
  $region12: #{_lambda_.21} parent=0 // pred_region
    _
  $region13: #{_lambda_.21} parent=0 // pred_fallthru
    _
  // Predicated region
  $region14: #{_lambda_.21} parent=0 // pred_check
    _
  $region15: #{_lambda_.21} parent=0 // pred_check_branch
    %17 = sbr.rel (0) target = $region17
  $region16: #{_lambda_.21} parent=0 // pred_region
    _
  $region17: #{_lambda_.21} parent=0 // pred_fallthru
    _
  // Predicated region
  $region18: #{_lambda_.21} parent=0 // pred_check
    _
  $region19: #{_lambda_.21} parent=0 // pred_check_branch
    %19 = sbr.rel (0) target = $region21
  $region20: #{_lambda_.21} parent=0 // pred_region
    _
  $region21: #{_lambda_.21} parent=0 // pred_fallthru
    _
  %v21 = vld [vmem:[%s0] sm:$0xff]
  %v22 = vld [vmem:[%s0 + $0x8] sm:$0xff]
  %v23 = vld [vmem:[%s0 + $0x10] sm:$0xff]
  %v24 = vld [vmem:[%s0 + $0x18] sm:$0xff]
  %v25 = vld [vmem:[%s0 + $0x20] sm:$0xff]
  %vm26 = vcmask 261120
  %v27 = vsel %vm26, %v21, 0.0
  %28 = vadd.xlane.f32.xlu0 %v27
  %v29 = vpop.xlane.xlu0 %28
  %v30 = vsel %vm26, %v22, 0.0
  %31 = vadd.xlane.f32.xlu0 %v30
  %v32 = vpop.xlane.xlu0 %31
  %v33 = vsel %vm26, %v23, 0.0
  %34 = vadd.xlane.f32.xlu0 %v33
  %v35 = vpop.xlane.xlu0 %34
  %v36 = vsel %vm26, %v24, 0.0
  %37 = vadd.xlane.f32.xlu0 %v36
  %v38 = vpop.xlane.xlu0 %37
  %v39 = vsel %vm26, %v25, 0.0
  %40 = vadd.xlane.f32.xlu0 %v39
  %v41 = vpop.xlane.xlu0 %40
  %v42 = vrcp.pop 32.0
  %v43 = vmul.f32 32.0, %v42
  %v44 = vsub.f32 1.0, %v43
  %v45 = vmul.f32 %v42, %v44
  %v46 = vadd.f32 %v42, %v45
  %vm47 = vweird.f32 %v42
  %v48 = vsel %vm47, %v42, %v46
  %v49 = vmul.f32 %v29, %v48
  %v50 = vmul.f32 %v32, %v48
  %v51 = vmul.f32 %v35, %v48
  %v52 = vmul.f32 %v38, %v48
  %v53 = vmul.f32 %v41, %v48
  %v54 = vsub.f32 %v21, %v49
  %v55 = vsub.f32 %v22, %v50
  %v56 = vsub.f32 %v23, %v51
  %v57 = vsub.f32 %v24, %v52
  %v58 = vsub.f32 %v25, %v53
  %v59 = vmul.f32 %v54, %v54
  %v60 = vmul.f32 %v55, %v55
  %v61 = vmul.f32 %v56, %v56
  %v62 = vmul.f32 %v57, %v57
  %v63 = vmul.f32 %v58, %v58
  %v64 = vsel %vm26, %v59, 0.0
  %65 = vadd.xlane.f32.xlu0 %v64
  %v66 = vpop.xlane.xlu0 %65
  %v67 = vsel %vm26, %v60, 0.0
  %68 = vadd.xlane.f32.xlu0 %v67
  %v69 = vpop.xlane.xlu0 %68
  %v70 = vsel %vm26, %v61, 0.0
  %71 = vadd.xlane.f32.xlu0 %v70
  %v72 = vpop.xlane.xlu0 %71
  %v73 = vsel %vm26, %v62, 0.0
  %74 = vadd.xlane.f32.xlu0 %v73
  %v75 = vpop.xlane.xlu0 %74
  %v76 = vsel %vm26, %v63, 0.0
  %77 = vadd.xlane.f32.xlu0 %v76
  %v78 = vpop.xlane.xlu0 %77
  %v79 = vmul.f32 %v66, %v48
  %v80 = vmul.f32 %v69, %v48
  %v81 = vmul.f32 %v72, %v48
  %v82 = vmul.f32 %v75, %v48
  %v83 = vmul.f32 %v78, %v48
  %v84 = vadd.f32 %v79, 1e-05
  %v85 = vadd.f32 %v80, 1e-05
  %v86 = vadd.f32 %v81, 1e-05
  %v87 = vadd.f32 %v82, 1e-05
  %v88 = vadd.f32 %v83, 1e-05
  %v89 = vrsqrt.pop %v84
  %v90 = vmul.f32 %v89, %v84
  %v91 = vmul.f32 %v90, %v89
  %v92 = vmul.f32 0.5, %v91
  %v93 = vsub.f32 1.5, %v92
  %v94 = vmul.f32 %v89, %v93
  %vm95 = vweird.f32 %v84
  %vm96 = vweird.f32 %v89
  %vm97 = vmor %vm95, %vm96
  %v98 = vsel %vm97, %v89, %v94
  %v99 = vrsqrt.pop %v85
  %v100 = vmul.f32 %v99, %v85
  %v101 = vmul.f32 %v100, %v99
  %v102 = vmul.f32 0.5, %v101
  %v103 = vsub.f32 1.5, %v102
  %v104 = vmul.f32 %v99, %v103
  %vm105 = vweird.f32 %v85
  %vm106 = vweird.f32 %v99
  %vm107 = vmor %vm105, %vm106
  %v108 = vsel %vm107, %v99, %v104
  %v109 = vrsqrt.pop %v86
  %v110 = vmul.f32 %v109, %v86
  %v111 = vmul.f32 %v110, %v109
  %v112 = vmul.f32 0.5, %v111
  %v113 = vsub.f32 1.5, %v112
  %v114 = vmul.f32 %v109, %v113
  %vm115 = vweird.f32 %v86
  %vm116 = vweird.f32 %v109
  %vm117 = vmor %vm115, %vm116
  %v118 = vsel %vm117, %v109, %v114
  %v119 = vrsqrt.pop %v87
  %v120 = vmul.f32 %v119, %v87
  %v121 = vmul.f32 %v120, %v119
  %v122 = vmul.f32 0.5, %v121
  %v123 = vsub.f32 1.5, %v122
  %v124 = vmul.f32 %v119, %v123
  %vm125 = vweird.f32 %v87
  %vm126 = vweird.f32 %v119
  %vm127 = vmor %vm125, %vm126
  %v128 = vsel %vm127, %v119, %v124
  %v129 = vrsqrt.pop %v88
  %v130 = vmul.f32 %v129, %v88
  %v131 = vmul.f32 %v130, %v129
  %v132 = vmul.f32 0.5, %v131
  %v133 = vsub.f32 1.5, %v132
  %v134 = vmul.f32 %v129, %v133
  %vm135 = vweird.f32 %v88
  %vm136 = vweird.f32 %v129
  %vm137 = vmor %vm135, %vm136
  %v138 = vsel %vm137, %v129, %v134
  %v139 = vmul.f32 %v54, %v98
  %v140 = vmul.f32 %v55, %v108
  %v141 = vmul.f32 %v56, %v118
  %v142 = vmul.f32 %v57, %v128
  %v143 = vmul.f32 %v58, %v138
  %v144 = vld [vmem:[%s1] sm:$0x1]
  %v146 = vperm.slane %v144, 0
  %v148 = vmul.f32 %v139, %v146
  %v149 = vmul.f32 %v140, %v146
  %v150 = vmul.f32 %v141, %v146
  %v151 = vmul.f32 %v142, %v146
  %v152 = vmul.f32 %v143, %v146
  %v153 = vld [vmem:[%s2] sm:$0x1]
  %v155 = vperm.slane %v153, 0
  %v157 = vadd.f32 %v148, %v155
  %v158 = vadd.f32 %v149, %v155
  %v159 = vadd.f32 %v150, %v155
  %v160 = vadd.f32 %v151, %v155
  %v161 = vadd.f32 %v152, %v155
  %v162 = vpack.c.bf16 %v158, %v157
  %v163 = vpack.c.bf16 %v160, %v159
  %v164 = vpack.c.bf16 %v161, %v161
  %v165 = vld [vmem:[%s3] sm:$0xff]
  %v166 = vld [vmem:[%s3 + $0x8] sm:$0xff]
  %v167 = vld [vmem:[%s3 + $0x10] sm:$0xff]
  %v168 = vld [vmem:[%s3 + $0x18] sm:$0xff]
  %v169 = vpack.c.bf16 %v166, %v165
  %v170 = vpack.c.bf16 %v168, %v167
  %v171 = vld [vmem:[%s4] sm:$0x1]
  %v173 = vperm.slane %v171, 0
  %v176 = vsel %vm26, %v162, 0
  %v179 = vsel %vm26, %v163, 0
  %v182 = vsel %vm26, %v164, 0
  %184 = vmatpush.bf16.msra.mxu0 0
  %185 = vmatpush.bf16.msra.mxu0 0
  %186 = vmatpush.bf16.msra.mxu0 0
  %187 = vmatpush.bf16.msra.mxu0 0
  %188 = vmatpush.bf16.msra.mxu0 0
  %189 = vmatpush.bf16.msra.mxu0 0
  %190 = vmatpush.bf16.msra.mxu0 %v170
  %191 = vmatpush.bf16.msra.mxu0 %v169
  %192 = vmatmul.bf16.gmra.mxu0 %v176
  %v193 = vpop.f32.mrf.mxu0
  %v194 = vadd.f32 %v173, %v193
  %v195 = vpop.f32.mrf.mxu0
  %v196 = vadd.f32 %v173, %v195
  %197 = vmatmul.bf16.gmra.mxu0 %v179
  %v198 = vpop.f32.mrf.mxu0
  %v199 = vadd.f32 %v173, %v198
  %v200 = vpop.f32.mrf.mxu0
  %v201 = vadd.f32 %v173, %v200
  %202 = vmatmul.bf16.gmra.mxu0 %v182
  %v203 = vpop.f32.mrf.mxu0
  %v204 = vadd.f32 %v173, %v203
  %v205 = vpop.f32.mrf.mxu0
  %206 = vdwg.mxu0
  %vm207 = vcmask 785408
  %208 = vst.msk [vmem:[%s5] sm:$0xff] %vm207, %v194
  %209 = vst.msk [vmem:[%s5 + $0x8] sm:$0xff] %vm207, %v196
  %210 = vst.msk [vmem:[%s5 + $0x10] sm:$0xff] %vm207, %v199
  %211 = vst.msk [vmem:[%s5 + $0x18] sm:$0xff] %vm207, %v201
  %212 = vst.msk [vmem:[%s5 + $0x20] sm:$0xff] %vm207, %v204
  // Predicated region
  $region22: #{_lambda_.21} parent=0 // pred_check
    _
  $region23: #{_lambda_.21} parent=0 // pred_check_branch
    %214 = sbr.rel (0) target = $region25
  $region24: #{_lambda_.21} parent=0 // pred_region
    _
  $region25: #{_lambda_.21} parent=0 // pred_fallthru
    _
  // Predicated region
  $region26: #{_lambda_.21} parent=0 // pred_check
    _
  $region27: #{_lambda_.21} parent=0 // pred_check_branch
    %216 = sbr.rel (0) target = $region29
  $region28: #{_lambda_.21} parent=0 // pred_region
    _
  $region29: #{_lambda_.21} parent=0 // pred_fallthru
    _

// kernel: _lambda_.22
$region0: #{_lambda_.22}
  #allocation0 [shape = 'u32[]', space=smem, size = 0x4, offset = 0x4, fixed_abs, tag = 'smem constant byte address 0x4 - core index']
  #allocation1 [shape = 'u32[72,128]{1,0:T(1,128)}', space=vmem, size = 0x9000, scoped, tag = 'internal scratch']
  %s0 = inlined_call_operand.vmem [shape: f32[8,5,96], index: 0, kind: input, shape index: {}]
  %s1 = inlined_call_operand.vmem [shape: f32[2,16,32], index: 1, kind: input, shape index: {}]
  %s2 = inlined_call_operand.vmem [shape: f32[1,32], index: 2, kind: input, shape index: {}]
  %s3 = inlined_call_operand.vmem [shape: f32[8,5,32], index: 3, kind: input, shape index: {}]
  %s4 = inlined_call_operand.vmem [shape: f32[8,5,32], index: 4, kind: output, shape index: {}]
  %s5 = sld [smem:[#allocation0]]
  $region49: #{_lambda_.22} parent=0
    _
  %s7 = ssub.s32 1, %s5
  %s8 = scalar_select 0, %s7, %s5
  loop: start=0, step=1, limit=10
  $region2: #{_lambda_.22} parent=0 // loop_pre_header
    _
  $region3: #{_lambda_.22} parent=0 // loop_header
    %s10 = sphi 0, %s14
    %p11 = scmp.ge.s32.totalorder %s10, 10
    %s20 = sphi 0, %s22
    %s23 = sphi 0, %s20
    %s24 = sphi 0, %s23
    %s40 = sphi 0, %s24
    %s44 = sphi 0, %s44
    %s46 = sphi 0, %s44
    %s47 = sphi 0, %s46
    %s61 = sphi 0, %s47
    %s65 = sphi 0, %s65
    %s67 = sphi 0, %s65
    %s68 = sphi 0, %s67
    %s82 = sphi 0, %s68
    %s88 = sphi 0, %s90
    %s91 = sphi 0, %s88
    %s92 = sphi 0, %s91
    %s108 = sphi 0, %s92
    %s114 = sphi 0, %s116
    %s117 = sphi 0, %s114
    %s118 = sphi 0, %s117
    %s134 = sphi 0, %s118
  $region4: #{_lambda_.22} parent=0 // loop_header_branch
    %13 = sbr.rel (%p11) target = $region8
  $region5: #{_lambda_.22} parent=0 // loop_body
    %s15 = ssub.s32 %s10, 1
    %s16 = ssub.s32 %s10, 2
    %s17 = sadd.s32 %s10, 1
    %s18 = ssub.s32 %s10, %s17
    %p19 = scmp.eq.s32.totalorder %s18, 0
    %s21 = sadd.s32 %s20, 1
    %s22 = scalar_select %p19, %s20, %s21
    %p25 = pneg %p19
    %p26 = scmp.eq.s32.totalorder %s10, 7
    %p27 = por %p25, %p26
    %p28 = scmp.ne.s32.totalorder %s20, %s23
    %p29 = scmp.eq.s32.totalorder %s10, 0
    %p30 = por %p28, %p29
    %p31 = scmp.ne.s32.totalorder %s20, %s23
    %p32 = scmp.eq.s32.totalorder %s15, 7
    %p33 = por %p31, %p32
    %p34 = scmp.ne.s32.totalorder %s23, %s24
    %p35 = scmp.eq.s32.totalorder %s15, 0
    %p36 = por %p34, %p35
    %p37 = scmp.ne.s32.totalorder %s23, %s24
    %p38 = scmp.eq.s32.totalorder %s16, 7
    %p39 = por %p37, %p38
    %p41 = scmp.ne.s32.totalorder %s24, %s40
    %p42 = scmp.eq.s32.totalorder %s16, 0
    %p43 = por %p41, %p42
    %s45 = sadd.s32 %s44, 1
    %p48 = scmp.eq.s32.totalorder %s10, 7
    %p49 = scmp.ne.s32.totalorder %s44, %s46
    %p50 = scmp.eq.s32.totalorder %s10, 0
    %p51 = por %p49, %p50
    %p52 = scmp.ne.s32.totalorder %s44, %s46
    %p53 = scmp.eq.s32.totalorder %s15, 7
    %p54 = por %p52, %p53
    %p55 = scmp.ne.s32.totalorder %s46, %s47
    %p56 = scmp.eq.s32.totalorder %s15, 0
    %p57 = por %p55, %p56
    %p58 = scmp.ne.s32.totalorder %s46, %s47
    %p59 = scmp.eq.s32.totalorder %s16, 7
    %p60 = por %p58, %p59
    %p62 = scmp.ne.s32.totalorder %s47, %s61
    %p63 = scmp.eq.s32.totalorder %s16, 0
    %p64 = por %p62, %p63
    %s66 = sadd.s32 %s65, 1
    %p69 = scmp.eq.s32.totalorder %s10, 7
    %p70 = scmp.ne.s32.totalorder %s65, %s67
    %p71 = scmp.eq.s32.totalorder %s10, 0
    %p72 = por %p70, %p71
    %p73 = scmp.ne.s32.totalorder %s65, %s67
    %p74 = scmp.eq.s32.totalorder %s15, 7
    %p75 = por %p73, %p74
    %p76 = scmp.ne.s32.totalorder %s67, %s68
    %p77 = scmp.eq.s32.totalorder %s15, 0
    %p78 = por %p76, %p77
    %p79 = scmp.ne.s32.totalorder %s67, %s68
    %p80 = scmp.eq.s32.totalorder %s16, 7
    %p81 = por %p79, %p80
    %p83 = scmp.ne.s32.totalorder %s68, %s82
    %p84 = scmp.eq.s32.totalorder %s16, 0
    %p85 = por %p83, %p84
    %s86 = ssub.s32 %s10, %s17
    %p87 = scmp.eq.s32.totalorder %s86, 0
    %s89 = sadd.s32 %s88, 1
    %s90 = scalar_select %p87, %s88, %s89
    %p93 = pneg %p87
    %p94 = scmp.eq.s32.totalorder %s10, 7
    %p95 = por %p93, %p94
    %p96 = scmp.ne.s32.totalorder %s88, %s91
    %p97 = scmp.eq.s32.totalorder %s10, 0
    %p98 = por %p96, %p97
    %p99 = scmp.ne.s32.totalorder %s88, %s91
    %p100 = scmp.eq.s32.totalorder %s15, 7
    %p101 = por %p99, %p100
    %p102 = scmp.ne.s32.totalorder %s91, %s92
    %p103 = scmp.eq.s32.totalorder %s15, 0
    %p104 = por %p102, %p103
    %p105 = scmp.ne.s32.totalorder %s91, %s92
    %p106 = scmp.eq.s32.totalorder %s16, 7
    %p107 = por %p105, %p106
    %p109 = scmp.ne.s32.totalorder %s92, %s108
    %p110 = scmp.eq.s32.totalorder %s16, 0
    %p111 = por %p109, %p110
    %s112 = ssub.s32 %s10, %s17
    %p113 = scmp.eq.s32.totalorder %s112, 0
    %s115 = sadd.s32 %s114, 1
    %s116 = scalar_select %p113, %s114, %s115
    %p119 = pneg %p113
    %p120 = scmp.eq.s32.totalorder %s10, 7
    %p121 = por %p119, %p120
    %p122 = scmp.ne.s32.totalorder %s114, %s117
    %p123 = scmp.eq.s32.totalorder %s10, 0
    %p124 = por %p122, %p123
    %p125 = scmp.ne.s32.totalorder %s114, %s117
    %p126 = scmp.eq.s32.totalorder %s15, 7
    %p127 = por %p125, %p126
    %p128 = scmp.ne.s32.totalorder %s117, %s118
    %p129 = scmp.eq.s32.totalorder %s15, 0
    %p130 = por %p128, %p129
    %p131 = scmp.ne.s32.totalorder %s117, %s118
    %p132 = scmp.eq.s32.totalorder %s16, 7
    %p133 = por %p131, %p132
    %p135 = scmp.ne.s32.totalorder %s118, %s134
    %p136 = scmp.eq.s32.totalorder %s16, 0
    %p137 = por %p135, %p136
    %p138 = scmp.le.s32.totalorder 1, %s10
    %p139 = scmp.lt.s32.totalorder %s10, 9
    %p140 = pnand %p138, %p139
    %p141 = pneg %p140
    // Predicated region
    $region9: #{_lambda_.22} parent=5 // pred_check
      _
    $region10: #{_lambda_.22} parent=5 // pred_check_branch
      %143 = sbr.rel (%p140) target = $region12
    $region11: #{_lambda_.22} parent=5 // pred_region
      %s144 = ssub.s32 %s10, 1
      // Predicated region
      $region13: #{_lambda_.22} parent=11 // pred_check
        %p145 = pneg %p57
      $region14: #{_lambda_.22} parent=11 // pred_check_branch
        %147 = sbr.rel (%p145) target = $region16
      $region15: #{_lambda_.22} parent=11 // pred_region
        _
      $region16: #{_lambda_.22} parent=11 // pred_fallthru
        _
      // Predicated region
      $region17: #{_lambda_.22} parent=11 // pred_check
        %p148 = pneg %p78
      $region18: #{_lambda_.22} parent=11 // pred_check_branch
        %150 = sbr.rel (%p148) target = $region20
      $region19: #{_lambda_.22} parent=11 // pred_region
        _
      $region20: #{_lambda_.22} parent=11 // pred_fallthru
        _
    $region12: #{_lambda_.22} parent=5 // pred_fallthru
      _
    %p151 = scmp.lt.s32.totalorder %s10, 8
    // Predicated region
    $region21: #{_lambda_.22} parent=5 // pred_check
      %p152 = pneg %p151
    $region22: #{_lambda_.22} parent=5 // pred_check_branch
      %154 = sbr.rel (%p152) target = $region24
    $region23: #{_lambda_.22} parent=5 // pred_region
      // Predicated region
      $region25: #{_lambda_.22} parent=23 // pred_check
        %p155 = pneg %p30
      $region26: #{_lambda_.22} parent=23 // pred_check_branch
        %157 = sbr.rel (%p155) target = $region28
      $region27: #{_lambda_.22} parent=23 // pred_region
        %p158 = scmp.lt.s32.totalorder %s10, 7
        %s159 = scalar_select %p158, %s10, 7
        %s160 = smul.addr %s159, 8
        %s161 = scalar_lea.vmem %s0, %s160
      $region28: #{_lambda_.22} parent=23 // pred_fallthru
        _
      // Predicated region
      $region29: #{_lambda_.22} parent=23 // pred_check
        %p162 = pneg %p98
      $region30: #{_lambda_.22} parent=23 // pred_check_branch
        %164 = sbr.rel (%p162) target = $region32
      $region31: #{_lambda_.22} parent=23 // pred_region
        %p165 = scmp.lt.s32.totalorder %s10, 7
        %s166 = scalar_select %p165, %s10, 7
        %s167 = smul.addr %s166, 8
        %s168 = scalar_lea.vmem %s3, %s167
      $region32: #{_lambda_.22} parent=23 // pred_fallthru
        _
    $region24: #{_lambda_.22} parent=5 // pred_fallthru
      _
    %p169 = scmp.le.s32.totalorder 1, %s10
    %p170 = scmp.lt.s32.totalorder %s10, 9
    %p171 = pnand %p169, %p170
    %p172 = pneg %p171
    // Predicated region
    $region33: #{_lambda_.22} parent=5 // pred_check
      _
    $region34: #{_lambda_.22} parent=5 // pred_check_branch
      %174 = sbr.rel (%p171) target = $region36
    $region35: #{_lambda_.22} parent=5 // pred_region
      %s175 = ssub.s32 %s10, 1
      %p176 = scmp.lt.s32.totalorder %s15, 7
      %s177 = scalar_select %p176, %s15, 7
      %s178 = smul.addr %s177, 8
      %s179 = scalar_lea.vmem %s0, %s178
      %p180 = pneg %p36
      %p181 = pneg %p33
      %p182 = pneg %p57
      %p183 = pneg %p54
      %p184 = pneg %p78
      %p185 = pneg %p75
      %p186 = scmp.lt.s32.totalorder %s15, 7
      %s187 = scalar_select %p186, %s15, 7
      %s188 = smul.addr %s187, 8
      %s189 = scalar_lea.vmem %s3, %s188
      %p190 = pneg %p104
      %p191 = pneg %p101
      %p192 = pneg %p130
      %p193 = pneg %p127
      %p194 = scmp.lt.s32.totalorder %s15, 7
      %s195 = scalar_select %p194, %s15, 7
      %s196 = smul.addr %s195, 8
      %s197 = scalar_lea.vmem %s4, %s196
      %p198 = scmp.lt.s32.totalorder %s15, 7
      %s199 = scalar_select %p198, %s15, 7
      %s200 = smul.addr %s199, 8
      %s201 = scalar_lea.vmem %s0, %s200
      %p202 = scmp.lt.s32.totalorder %s15, 7
      %s203 = scalar_select %p202, %s15, 7
      %s204 = smul.addr %s203, 8
      %s205 = scalar_lea.vmem %s3, %s204
      %p206 = scmp.lt.s32.totalorder %s15, 7
      %s207 = scalar_select %p206, %s15, 7
      %s208 = smul.addr %s207, 8
      %s209 = scalar_lea.vmem %s4, %s208
      %v211 = vld [vmem:[%s201] sm:$0x1f]
      %v212 = vld [vmem:[%s1] sm:$0xff]
      %v213 = vld [vmem:[%s1 + $0x8] sm:$0xff]
      %v214 = vld [vmem:[%s1 + $0x10] sm:$0xff]
      %v215 = vld [vmem:[%s1 + $0x18] sm:$0xff]
      %v216 = vld [vmem:[%s205] sm:$0x1f]
      %v217 = vld [vmem:[%s2] sm:$0x1]
      %v219 = vperm.slane %v217, 0
      %v221 = vadd.f32 %v216, %v219
      %v222 = vmul.f32 %v211, 0.25
      %v223 = vpack.c.bf16 %v222, %v222
      %v224 = vpack.c.bf16 %v211, %v211
      %226 = vrot.lane.b32.xlu0 %v224, 96
      %v227 = vpop.permute.xlu0 %226
      %vm228 = vcmask 130048
      %v230 = vsel %vm228, %v223, 0
      %v233 = vsel %vm228, %v227, 0
      %235 = vmatpush.bf16.xpose.msra.mxu0 0
      %236 = vmatpush.bf16.xpose.msra.mxu0 0
      %237 = vmatpush.bf16.xpose.msra.mxu0 0
      %238 = vmatpush.bf16.xpose.msra.mxu0 0
      %239 = vmatpush.bf16.xpose.msra.mxu0 0
      %240 = vmatpush.bf16.xpose.msra.mxu0 0
      %241 = vmatpush.bf16.xpose.msra.mxu0 0
      %242 = vmatpush.bf16.xpose.msra.mxu0 %v233
      %243 = vmatmul.bf16.gmra.mxu0 %v230
      %v244 = vpop.f32.mrf.mxu0
      %v245 = vadd.f32 0.0, %v244
      %v246 = vpop.f32.mrf.mxu0
      %247 = vdwg.mxu0
      %vm248 = vcmask 36864
      %v249 = vsel %vm248, %v245, -inf
      %250 = vmax.xlane.f32.xlu0 %v249
      %v251 = vpop.xlane.xlu0 %250
      %v252 = vsub.f32 %v245, %v251
      %v253 = vmul.f32 %v252, 1.442695
      %v254 = vpow.pop %v253
      %v255 = vsel %vm248, %v254, 0.0
      %256 = vadd.xlane.f32.xlu0 %v255
      %v257 = vpop.xlane.xlu0 %256
      %v258 = vrcp.pop %v257
      %v259 = vmul.f32 %v254, %v258
      %v260 = vpack.c.bf16 %v259, %v259
      %261 = vrot.lane.b32.xlu0 %v224, 64
      %v262 = vpop.permute.xlu0 %261
      %vm263 = vcmask 39936
      %v265 = vsel %vm263, %v260, 0
      %vm267 = vcmask 1041408
      %vm268 = vcmask 1042432
      %v269 = vsel %vm267, 4294967295, 65535
      %v270 = vsel %vm268, %v269, 0
      %v272 = vand.u32 %v262, %v270
      %274 = vmatpush.bf16.msra.mxu0 0
      %275 = vmatpush.bf16.msra.mxu0 0
      %276 = vmatpush.bf16.msra.mxu0 0
      %277 = vmatpush.bf16.msra.mxu0 0
      %278 = vmatpush.bf16.msra.mxu0 0
      %279 = vmatpush.bf16.msra.mxu0 0
      %280 = vmatpush.bf16.msra.mxu0 0
      %281 = vmatpush.bf16.msra.mxu0 %v272
      %282 = vmatmul.bf16.gmra.mxu0 %v265
      %v283 = vpop.f32.mrf.mxu0
      %v284 = vadd.f32 0.0, %v283
      %v285 = vpop.f32.mrf.mxu0
      %286 = vdwg.mxu0
      %v287 = vpack.c.bf16 %v284, %v284
      %v288 = vpack.c.bf16 %v213, %v212
      %v290 = vsel %vm228, %v287, 0
      %292 = vmatpush.bf16.msra.mxu0 0
      %293 = vmatpush.bf16.msra.mxu0 0
      %294 = vmatpush.bf16.msra.mxu0 0
      %295 = vmatpush.bf16.msra.mxu0 0
      %296 = vmatpush.bf16.msra.mxu0 0
      %297 = vmatpush.bf16.msra.mxu0 0
      %298 = vmatpush.bf16.msra.mxu0 0
      %299 = vmatpush.bf16.msra.mxu0 %v288
      %300 = vmatmul.bf16.gmra.mxu0 %v290
      %v301 = vpop.f32.mrf.mxu0
      %v302 = vadd.f32 0.0, %v301
      %v303 = vpop.f32.mrf.mxu0
      %304 = vdwg.mxu0
      %v305 = vadd.f32 %v221, %v302
      %307 = vrot.lane.b32.xlu0 %v223, 112
      %v308 = vpop.permute.xlu0 %307
      %309 = vrot.lane.b32.xlu0 %v224, 80
      %v310 = vpop.permute.xlu0 %309
      %v312 = vsel %vm228, %v308, 0
      %v315 = vsel %vm228, %v310, 0
      %317 = vmatpush.bf16.xpose.msra.mxu0 0
      %318 = vmatpush.bf16.xpose.msra.mxu0 0
      %319 = vmatpush.bf16.xpose.msra.mxu0 0
      %320 = vmatpush.bf16.xpose.msra.mxu0 0
      %321 = vmatpush.bf16.xpose.msra.mxu0 0
      %322 = vmatpush.bf16.xpose.msra.mxu0 0
      %323 = vmatpush.bf16.xpose.msra.mxu0 0
      %324 = vmatpush.bf16.xpose.msra.mxu0 %v315
      %325 = vmatmul.bf16.gmra.mxu0 %v312
      %v326 = vpop.f32.mrf.mxu0
      %v327 = vadd.f32 0.0, %v326
      %v328 = vpop.f32.mrf.mxu0
      %329 = vdwg.mxu0
      %v330 = vsel %vm248, %v327, -inf
      %331 = vmax.xlane.f32.xlu0 %v330
      %v332 = vpop.xlane.xlu0 %331
      %v333 = vsub.f32 %v327, %v332
      %v334 = vmul.f32 %v333, 1.442695
      %v335 = vpow.pop %v334
      %v336 = vsel %vm248, %v335, 0.0
      %337 = vadd.xlane.f32.xlu0 %v336
      %v338 = vpop.xlane.xlu0 %337
      %v339 = vrcp.pop %v338
      %v340 = vmul.f32 %v335, %v339
      %v341 = vpack.c.bf16 %v340, %v340
      %342 = vrot.lane.b32.xlu0 %v224, 48
      %v343 = vpop.permute.xlu0 %342
      %v345 = vsel %vm263, %v341, 0
      %v348 = vand.u32 %v343, %v270
      %350 = vmatpush.bf16.msra.mxu0 0
      %351 = vmatpush.bf16.msra.mxu0 0
      %352 = vmatpush.bf16.msra.mxu0 0
      %353 = vmatpush.bf16.msra.mxu0 0
      %354 = vmatpush.bf16.msra.mxu0 0
      %355 = vmatpush.bf16.msra.mxu0 0
      %356 = vmatpush.bf16.msra.mxu0 0
      %357 = vmatpush.bf16.msra.mxu0 %v348
      %358 = vmatmul.bf16.gmra.mxu0 %v345
      %v359 = vpop.f32.mrf.mxu0
      %v360 = vadd.f32 0.0, %v359
      %v361 = vpop.f32.mrf.mxu0
      %362 = vdwg.mxu0
      %v363 = vpack.c.bf16 %v360, %v360
      %v364 = vpack.c.bf16 %v215, %v214
      %v366 = vsel %vm228, %v363, 0
      %368 = vmatpush.bf16.msra.mxu0 0
      %369 = vmatpush.bf16.msra.mxu0 0
      %370 = vmatpush.bf16.msra.mxu0 0
      %371 = vmatpush.bf16.msra.mxu0 0
      %372 = vmatpush.bf16.msra.mxu0 0
      %373 = vmatpush.bf16.msra.mxu0 0
      %374 = vmatpush.bf16.msra.mxu0 0
      %375 = vmatpush.bf16.msra.mxu0 %v364
      %376 = vmatmul.bf16.gmra.mxu0 %v366
      %v377 = vpop.f32.mrf.mxu0
      %v378 = vadd.f32 0.0, %v377
      %v379 = vpop.f32.mrf.mxu0
      %380 = vdwg.mxu0
      %v381 = vadd.f32 %v305, %v378
      %vm382 = vcmask 258048
      %383 = vst.msk [vmem:[%s209] sm:$0x1f] %vm382, %v381
      %p384 = scmp.lt.s32.totalorder %s15, 7
      %s385 = scalar_select %p384, %s15, 7
      %s386 = smul.addr %s385, 8
      %s387 = scalar_lea.vmem %s4, %s386
      // Predicated region
      $region37: #{_lambda_.22} parent=35 // pred_check
        %p388 = pneg %p127
      $region38: #{_lambda_.22} parent=35 // pred_check_branch
        %390 = sbr.rel (%p388) target = $region40
      $region39: #{_lambda_.22} parent=35 // pred_region
        _
      $region40: #{_lambda_.22} parent=35 // pred_fallthru
        _
    $region36: #{_lambda_.22} parent=5 // pred_fallthru
      _
    %p391 = scmp.le.s32.totalorder 2, %s10
    // Predicated region
    $region41: #{_lambda_.22} parent=5 // pred_check
      %p392 = pneg %p391
    $region42: #{_lambda_.22} parent=5 // pred_check_branch
      %394 = sbr.rel (%p392) target = $region44
    $region43: #{_lambda_.22} parent=5 // pred_region
      %s395 = ssub.s32 %s10, 2
      // Predicated region
      $region45: #{_lambda_.22} parent=43 // pred_check
        %p396 = pneg %p133
      $region46: #{_lambda_.22} parent=43 // pred_check_branch
        %398 = sbr.rel (%p396) target = $region48
      $region47: #{_lambda_.22} parent=43 // pred_region
        %p399 = scmp.lt.s32.totalorder %s16, 7
        %s400 = scalar_select %p399, %s16, 7
        %s401 = smul.addr %s400, 8
        %s402 = scalar_lea.vmem %s4, %s401
      $region48: #{_lambda_.22} parent=43 // pred_fallthru
        _
    $region44: #{_lambda_.22} parent=5 // pred_fallthru
      _
  $region6: #{_lambda_.22} parent=0 // loop_footer
    %s14 = sadd.s32 1, %s10
  $region7: #{_lambda_.22} parent=0 // loop_footer_branch
    %9 = sbr.rel target = $region3
  $region8: #{_lambda_.22} parent=0 // loop_exit
    _

// kernel: _lambda_.23
$region0: #{_lambda_.23}
  #allocation0 [shape = 'u32[]', space=smem, size = 0x4, offset = 0x4, fixed_abs, tag = 'smem constant byte address 0x4 - core index']
  #allocation1 [shape = 'u32[72,128]{1,0:T(1,128)}', space=vmem, size = 0x9000, scoped, tag = 'internal scratch']
  %s0 = inlined_call_operand.vmem [shape: f32[40,32], index: 0, kind: input, shape index: {}]
  %s1 = inlined_call_operand.vmem [shape: f32[1,32], index: 1, kind: input, shape index: {}]
  %s2 = inlined_call_operand.vmem [shape: f32[1,32], index: 2, kind: input, shape index: {}]
  %s3 = inlined_call_operand.vmem [shape: f32[32,64], index: 3, kind: input, shape index: {}]
  %s4 = inlined_call_operand.vmem [shape: f32[1,64], index: 4, kind: input, shape index: {}]
  %s5 = inlined_call_operand.vmem [shape: f32[40,64], index: 5, kind: output, shape index: {}]
  %s6 = sld [smem:[#allocation0]]
  $region30: #{_lambda_.23} parent=0
    _
  %s8 = ssub.s32 1, %s6
  %s9 = scalar_select 0, %s8, %s6
  // Predicated region
  $region2: #{_lambda_.23} parent=0 // pred_check
    _
  $region3: #{_lambda_.23} parent=0 // pred_check_branch
    %11 = sbr.rel (0) target = $region5
  $region4: #{_lambda_.23} parent=0 // pred_region
    _
  $region5: #{_lambda_.23} parent=0 // pred_fallthru
    _
  // Predicated region
  $region6: #{_lambda_.23} parent=0 // pred_check
    _
  $region7: #{_lambda_.23} parent=0 // pred_check_branch
    %13 = sbr.rel (0) target = $region9
  $region8: #{_lambda_.23} parent=0 // pred_region
    _
  $region9: #{_lambda_.23} parent=0 // pred_fallthru
    _
  // Predicated region
  $region10: #{_lambda_.23} parent=0 // pred_check
    _
  $region11: #{_lambda_.23} parent=0 // pred_check_branch
    %15 = sbr.rel (0) target = $region13
  $region12: #{_lambda_.23} parent=0 // pred_region
    _
  $region13: #{_lambda_.23} parent=0 // pred_fallthru
    _
  // Predicated region
  $region14: #{_lambda_.23} parent=0 // pred_check
    _
  $region15: #{_lambda_.23} parent=0 // pred_check_branch
    %17 = sbr.rel (0) target = $region17
  $region16: #{_lambda_.23} parent=0 // pred_region
    _
  $region17: #{_lambda_.23} parent=0 // pred_fallthru
    _
  // Predicated region
  $region18: #{_lambda_.23} parent=0 // pred_check
    _
  $region19: #{_lambda_.23} parent=0 // pred_check_branch
    %19 = sbr.rel (0) target = $region21
  $region20: #{_lambda_.23} parent=0 // pred_region
    _
  $region21: #{_lambda_.23} parent=0 // pred_fallthru
    _
  %v21 = vld [vmem:[%s0] sm:$0xff]
  %v22 = vld [vmem:[%s0 + $0x8] sm:$0xff]
  %v23 = vld [vmem:[%s0 + $0x10] sm:$0xff]
  %v24 = vld [vmem:[%s0 + $0x18] sm:$0xff]
  %v25 = vld [vmem:[%s0 + $0x20] sm:$0xff]
  %vm26 = vcmask 261120
  %v27 = vsel %vm26, %v21, 0.0
  %28 = vadd.xlane.f32.xlu0 %v27
  %v29 = vpop.xlane.xlu0 %28
  %v30 = vsel %vm26, %v22, 0.0
  %31 = vadd.xlane.f32.xlu0 %v30
  %v32 = vpop.xlane.xlu0 %31
  %v33 = vsel %vm26, %v23, 0.0
  %34 = vadd.xlane.f32.xlu0 %v33
  %v35 = vpop.xlane.xlu0 %34
  %v36 = vsel %vm26, %v24, 0.0
  %37 = vadd.xlane.f32.xlu0 %v36
  %v38 = vpop.xlane.xlu0 %37
  %v39 = vsel %vm26, %v25, 0.0
  %40 = vadd.xlane.f32.xlu0 %v39
  %v41 = vpop.xlane.xlu0 %40
  %v42 = vrcp.pop 32.0
  %v43 = vmul.f32 32.0, %v42
  %v44 = vsub.f32 1.0, %v43
  %v45 = vmul.f32 %v42, %v44
  %v46 = vadd.f32 %v42, %v45
  %vm47 = vweird.f32 %v42
  %v48 = vsel %vm47, %v42, %v46
  %v49 = vmul.f32 %v29, %v48
  %v50 = vmul.f32 %v32, %v48
  %v51 = vmul.f32 %v35, %v48
  %v52 = vmul.f32 %v38, %v48
  %v53 = vmul.f32 %v41, %v48
  %v54 = vsub.f32 %v21, %v49
  %v55 = vsub.f32 %v22, %v50
  %v56 = vsub.f32 %v23, %v51
  %v57 = vsub.f32 %v24, %v52
  %v58 = vsub.f32 %v25, %v53
  %v59 = vmul.f32 %v54, %v54
  %v60 = vmul.f32 %v55, %v55
  %v61 = vmul.f32 %v56, %v56
  %v62 = vmul.f32 %v57, %v57
  %v63 = vmul.f32 %v58, %v58
  %v64 = vsel %vm26, %v59, 0.0
  %65 = vadd.xlane.f32.xlu0 %v64
  %v66 = vpop.xlane.xlu0 %65
  %v67 = vsel %vm26, %v60, 0.0
  %68 = vadd.xlane.f32.xlu0 %v67
  %v69 = vpop.xlane.xlu0 %68
  %v70 = vsel %vm26, %v61, 0.0
  %71 = vadd.xlane.f32.xlu0 %v70
  %v72 = vpop.xlane.xlu0 %71
  %v73 = vsel %vm26, %v62, 0.0
  %74 = vadd.xlane.f32.xlu0 %v73
  %v75 = vpop.xlane.xlu0 %74
  %v76 = vsel %vm26, %v63, 0.0
  %77 = vadd.xlane.f32.xlu0 %v76
  %v78 = vpop.xlane.xlu0 %77
  %v79 = vmul.f32 %v66, %v48
  %v80 = vmul.f32 %v69, %v48
  %v81 = vmul.f32 %v72, %v48
  %v82 = vmul.f32 %v75, %v48
  %v83 = vmul.f32 %v78, %v48
  %v84 = vadd.f32 %v79, 1e-05
  %v85 = vadd.f32 %v80, 1e-05
  %v86 = vadd.f32 %v81, 1e-05
  %v87 = vadd.f32 %v82, 1e-05
  %v88 = vadd.f32 %v83, 1e-05
  %v89 = vrsqrt.pop %v84
  %v90 = vmul.f32 %v89, %v84
  %v91 = vmul.f32 %v90, %v89
  %v92 = vmul.f32 0.5, %v91
  %v93 = vsub.f32 1.5, %v92
  %v94 = vmul.f32 %v89, %v93
  %vm95 = vweird.f32 %v84
  %vm96 = vweird.f32 %v89
  %vm97 = vmor %vm95, %vm96
  %v98 = vsel %vm97, %v89, %v94
  %v99 = vrsqrt.pop %v85
  %v100 = vmul.f32 %v99, %v85
  %v101 = vmul.f32 %v100, %v99
  %v102 = vmul.f32 0.5, %v101
  %v103 = vsub.f32 1.5, %v102
  %v104 = vmul.f32 %v99, %v103
  %vm105 = vweird.f32 %v85
  %vm106 = vweird.f32 %v99
  %vm107 = vmor %vm105, %vm106
  %v108 = vsel %vm107, %v99, %v104
  %v109 = vrsqrt.pop %v86
  %v110 = vmul.f32 %v109, %v86
  %v111 = vmul.f32 %v110, %v109
  %v112 = vmul.f32 0.5, %v111
  %v113 = vsub.f32 1.5, %v112
  %v114 = vmul.f32 %v109, %v113
  %vm115 = vweird.f32 %v86
  %vm116 = vweird.f32 %v109
  %vm117 = vmor %vm115, %vm116
  %v118 = vsel %vm117, %v109, %v114
  %v119 = vrsqrt.pop %v87
  %v120 = vmul.f32 %v119, %v87
  %v121 = vmul.f32 %v120, %v119
  %v122 = vmul.f32 0.5, %v121
  %v123 = vsub.f32 1.5, %v122
  %v124 = vmul.f32 %v119, %v123
  %vm125 = vweird.f32 %v87
  %vm126 = vweird.f32 %v119
  %vm127 = vmor %vm125, %vm126
  %v128 = vsel %vm127, %v119, %v124
  %v129 = vrsqrt.pop %v88
  %v130 = vmul.f32 %v129, %v88
  %v131 = vmul.f32 %v130, %v129
  %v132 = vmul.f32 0.5, %v131
  %v133 = vsub.f32 1.5, %v132
  %v134 = vmul.f32 %v129, %v133
  %vm135 = vweird.f32 %v88
  %vm136 = vweird.f32 %v129
  %vm137 = vmor %vm135, %vm136
  %v138 = vsel %vm137, %v129, %v134
  %v139 = vmul.f32 %v54, %v98
  %v140 = vmul.f32 %v55, %v108
  %v141 = vmul.f32 %v56, %v118
  %v142 = vmul.f32 %v57, %v128
  %v143 = vmul.f32 %v58, %v138
  %v144 = vld [vmem:[%s1] sm:$0x1]
  %v146 = vperm.slane %v144, 0
  %v148 = vmul.f32 %v139, %v146
  %v149 = vmul.f32 %v140, %v146
  %v150 = vmul.f32 %v141, %v146
  %v151 = vmul.f32 %v142, %v146
  %v152 = vmul.f32 %v143, %v146
  %v153 = vld [vmem:[%s2] sm:$0x1]
  %v155 = vperm.slane %v153, 0
  %v157 = vadd.f32 %v148, %v155
  %v158 = vadd.f32 %v149, %v155
  %v159 = vadd.f32 %v150, %v155
  %v160 = vadd.f32 %v151, %v155
  %v161 = vadd.f32 %v152, %v155
  %v162 = vpack.c.bf16 %v158, %v157
  %v163 = vpack.c.bf16 %v160, %v159
  %v164 = vpack.c.bf16 %v161, %v161
  %v165 = vld [vmem:[%s3] sm:$0xff]
  %v166 = vld [vmem:[%s3 + $0x8] sm:$0xff]
  %v167 = vld [vmem:[%s3 + $0x10] sm:$0xff]
  %v168 = vld [vmem:[%s3 + $0x18] sm:$0xff]
  %v169 = vpack.c.bf16 %v166, %v165
  %v170 = vpack.c.bf16 %v168, %v167
  %v171 = vld [vmem:[%s4] sm:$0x1]
  %v173 = vperm.slane %v171, 0
  %v176 = vsel %vm26, %v162, 0
  %v179 = vsel %vm26, %v163, 0
  %v182 = vsel %vm26, %v164, 0
  %184 = vmatpush.bf16.msra.mxu0 0
  %185 = vmatpush.bf16.msra.mxu0 0
  %186 = vmatpush.bf16.msra.mxu0 0
  %187 = vmatpush.bf16.msra.mxu0 0
  %188 = vmatpush.bf16.msra.mxu0 0
  %189 = vmatpush.bf16.msra.mxu0 0
  %190 = vmatpush.bf16.msra.mxu0 %v170
  %191 = vmatpush.bf16.msra.mxu0 %v169
  %192 = vmatmul.bf16.gmra.mxu0 %v176
  %v193 = vpop.f32.mrf.mxu0
  %v194 = vadd.f32 %v173, %v193
  %v195 = vpop.f32.mrf.mxu0
  %v196 = vadd.f32 %v173, %v195
  %197 = vmatmul.bf16.gmra.mxu0 %v179
  %v198 = vpop.f32.mrf.mxu0
  %v199 = vadd.f32 %v173, %v198
  %v200 = vpop.f32.mrf.mxu0
  %v201 = vadd.f32 %v173, %v200
  %202 = vmatmul.bf16.gmra.mxu0 %v182
  %v203 = vpop.f32.mrf.mxu0
  %v204 = vadd.f32 %v173, %v203
  %v205 = vpop.f32.mrf.mxu0
  %206 = vdwg.mxu0
  %v207 = vmul.f32 %v194, 0.5
  %v208 = vmul.f32 %v196, 0.5
  %v209 = vmul.f32 %v199, 0.5
  %v210 = vmul.f32 %v201, 0.5
  %v211 = vmul.f32 %v204, 0.5
  %v212 = vmul.f32 %v194, 0.70710677
  %v213 = vmul.f32 %v196, 0.70710677
  %v214 = vmul.f32 %v199, 0.70710677
  %v215 = vmul.f32 %v201, 0.70710677
  %v216 = vmul.f32 %v204, 0.70710677
  %v217 = vmul.f32 %v212, %v212
  %v218 = vmin.f32 16.0, %v217
  %v219 = vmul.f32 %v218, 2.1237322e-06
  %v220 = vadd.f32 %v219, 0.00028619796
  %v221 = vmul.f32 %v218, %v220
  %v222 = vadd.f32 %v221, 0.0036580483
  %v223 = vmul.f32 %v218, %v222
  %v224 = vadd.f32 %v223, 0.05243302
  %v225 = vmul.f32 %v218, %v224
  %v226 = vadd.f32 %v225, 0.18741608
  %v227 = vmul.f32 %v218, %v226
  %v228 = vadd.f32 %v227, 1.1283791
  %v229 = vmul.f32 %v212, %v228
  %v230 = vmul.f32 %v218, 3.8918573e-05
  %v231 = vadd.f32 %v230, 0.001143296
  %v232 = vmul.f32 %v218, %v231
  %v233 = vadd.f32 %v232, 0.014752088
  %v234 = vmul.f32 %v218, %v233
  %v235 = vadd.f32 %v234, 0.112945676
  %v236 = vmul.f32 %v218, %v235
  %v237 = vadd.f32 %v236, 0.4994258
  %v238 = vmul.f32 %v218, %v237
  %v239 = vadd.f32 %v238, 1.0
  %v240 = vrcp.pop %v239
  %v241 = vmul.f32 %v239, %v240
  %v242 = vsub.f32 1.0, %v241
  %v243 = vmul.f32 %v240, %v242
  %v244 = vadd.f32 %v240, %v243
  %vm245 = vweird.f32 %v239
  %vm246 = vweird.f32 %v240
  %vm247 = vmor %vm245, %vm246
  %v248 = vsel %vm247, %v240, %v244
  %v249 = vand.u32 2147483647, %v239
  %vm250 = vcmp.eq.f32.partialorder %v249, 8.507059e+37
  %v251 = vand.u32 %v239, 2147483648
  %v252 = vor.u32 1.1754944e-38, %v251
  %v253 = vsel %vm250, %v252, %v248
  %v254 = vmul.f32 %v229, %v253
  %v255 = vmin.f32 %v254, 1.0
  %v256 = vmax.f32 %v255, -1.0
  %v257 = vmul.f32 %v213, %v213
  %v258 = vmin.f32 16.0, %v257
  %v259 = vmul.f32 %v258, 2.1237322e-06
  %v260 = vadd.f32 %v259, 0.00028619796
  %v261 = vmul.f32 %v258, %v260
  %v262 = vadd.f32 %v261, 0.0036580483
  %v263 = vmul.f32 %v258, %v262
  %v264 = vadd.f32 %v263, 0.05243302
  %v265 = vmul.f32 %v258, %v264
  %v266 = vadd.f32 %v265, 0.18741608
  %v267 = vmul.f32 %v258, %v266
  %v268 = vadd.f32 %v267, 1.1283791
  %v269 = vmul.f32 %v213, %v268
  %v270 = vmul.f32 %v258, 3.8918573e-05
  %v271 = vadd.f32 %v270, 0.001143296
  %v272 = vmul.f32 %v258, %v271
  %v273 = vadd.f32 %v272, 0.014752088
  %v274 = vmul.f32 %v258, %v273
  %v275 = vadd.f32 %v274, 0.112945676
  %v276 = vmul.f32 %v258, %v275
  %v277 = vadd.f32 %v276, 0.4994258
  %v278 = vmul.f32 %v258, %v277
  %v279 = vadd.f32 %v278, 1.0
  %v280 = vrcp.pop %v279
  %v281 = vmul.f32 %v279, %v280
  %v282 = vsub.f32 1.0, %v281
  %v283 = vmul.f32 %v280, %v282
  %v284 = vadd.f32 %v280, %v283
  %vm285 = vweird.f32 %v279
  %vm286 = vweird.f32 %v280
  %vm287 = vmor %vm285, %vm286
  %v288 = vsel %vm287, %v280, %v284
  %v289 = vand.u32 2147483647, %v279
  %vm290 = vcmp.eq.f32.partialorder %v289, 8.507059e+37
  %v291 = vand.u32 %v279, 2147483648
  %v292 = vor.u32 1.1754944e-38, %v291
  %v293 = vsel %vm290, %v292, %v288
  %v294 = vmul.f32 %v269, %v293
  %v295 = vmin.f32 %v294, 1.0
  %v296 = vmax.f32 %v295, -1.0
  %v297 = vmul.f32 %v214, %v214
  %v298 = vmin.f32 16.0, %v297
  %v299 = vmul.f32 %v298, 2.1237322e-06
  %v300 = vadd.f32 %v299, 0.00028619796
  %v301 = vmul.f32 %v298, %v300
  %v302 = vadd.f32 %v301, 0.0036580483
  %v303 = vmul.f32 %v298, %v302
  %v304 = vadd.f32 %v303, 0.05243302
  %v305 = vmul.f32 %v298, %v304
  %v306 = vadd.f32 %v305, 0.18741608
  %v307 = vmul.f32 %v298, %v306
  %v308 = vadd.f32 %v307, 1.1283791
  %v309 = vmul.f32 %v214, %v308
  %v310 = vmul.f32 %v298, 3.8918573e-05
  %v311 = vadd.f32 %v310, 0.001143296
  %v312 = vmul.f32 %v298, %v311
  %v313 = vadd.f32 %v312, 0.014752088
  %v314 = vmul.f32 %v298, %v313
  %v315 = vadd.f32 %v314, 0.112945676
  %v316 = vmul.f32 %v298, %v315
  %v317 = vadd.f32 %v316, 0.4994258
  %v318 = vmul.f32 %v298, %v317
  %v319 = vadd.f32 %v318, 1.0
  %v320 = vrcp.pop %v319
  %v321 = vmul.f32 %v319, %v320
  %v322 = vsub.f32 1.0, %v321
  %v323 = vmul.f32 %v320, %v322
  %v324 = vadd.f32 %v320, %v323
  %vm325 = vweird.f32 %v319
  %vm326 = vweird.f32 %v320
  %vm327 = vmor %vm325, %vm326
  %v328 = vsel %vm327, %v320, %v324
  %v329 = vand.u32 2147483647, %v319
  %vm330 = vcmp.eq.f32.partialorder %v329, 8.507059e+37
  %v331 = vand.u32 %v319, 2147483648
  %v332 = vor.u32 1.1754944e-38, %v331
  %v333 = vsel %vm330, %v332, %v328
  %v334 = vmul.f32 %v309, %v333
  %v335 = vmin.f32 %v334, 1.0
  %v336 = vmax.f32 %v335, -1.0
  %v337 = vmul.f32 %v215, %v215
  %v338 = vmin.f32 16.0, %v337
  %v339 = vmul.f32 %v338, 2.1237322e-06
  %v340 = vadd.f32 %v339, 0.00028619796
  %v341 = vmul.f32 %v338, %v340
  %v342 = vadd.f32 %v341, 0.0036580483
  %v343 = vmul.f32 %v338, %v342
  %v344 = vadd.f32 %v343, 0.05243302
  %v345 = vmul.f32 %v338, %v344
  %v346 = vadd.f32 %v345, 0.18741608
  %v347 = vmul.f32 %v338, %v346
  %v348 = vadd.f32 %v347, 1.1283791
  %v349 = vmul.f32 %v215, %v348
  %v350 = vmul.f32 %v338, 3.8918573e-05
  %v351 = vadd.f32 %v350, 0.001143296
  %v352 = vmul.f32 %v338, %v351
  %v353 = vadd.f32 %v352, 0.014752088
  %v354 = vmul.f32 %v338, %v353
  %v355 = vadd.f32 %v354, 0.112945676
  %v356 = vmul.f32 %v338, %v355
  %v357 = vadd.f32 %v356, 0.4994258
  %v358 = vmul.f32 %v338, %v357
  %v359 = vadd.f32 %v358, 1.0
  %v360 = vrcp.pop %v359
  %v361 = vmul.f32 %v359, %v360
  %v362 = vsub.f32 1.0, %v361
  %v363 = vmul.f32 %v360, %v362
  %v364 = vadd.f32 %v360, %v363
  %vm365 = vweird.f32 %v359
  %vm366 = vweird.f32 %v360
  %vm367 = vmor %vm365, %vm366
  %v368 = vsel %vm367, %v360, %v364
  %v369 = vand.u32 2147483647, %v359
  %vm370 = vcmp.eq.f32.partialorder %v369, 8.507059e+37
  %v371 = vand.u32 %v359, 2147483648
  %v372 = vor.u32 1.1754944e-38, %v371
  %v373 = vsel %vm370, %v372, %v368
  %v374 = vmul.f32 %v349, %v373
  %v375 = vmin.f32 %v374, 1.0
  %v376 = vmax.f32 %v375, -1.0
  %v377 = vmul.f32 %v216, %v216
  %v378 = vmin.f32 16.0, %v377
  %v379 = vmul.f32 %v378, 2.1237322e-06
  %v380 = vadd.f32 %v379, 0.00028619796
  %v381 = vmul.f32 %v378, %v380
  %v382 = vadd.f32 %v381, 0.0036580483
  %v383 = vmul.f32 %v378, %v382
  %v384 = vadd.f32 %v383, 0.05243302
  %v385 = vmul.f32 %v378, %v384
  %v386 = vadd.f32 %v385, 0.18741608
  %v387 = vmul.f32 %v378, %v386
  %v388 = vadd.f32 %v387, 1.1283791
  %v389 = vmul.f32 %v216, %v388
  %v390 = vmul.f32 %v378, 3.8918573e-05
  %v391 = vadd.f32 %v390, 0.001143296
  %v392 = vmul.f32 %v378, %v391
  %v393 = vadd.f32 %v392, 0.014752088
  %v394 = vmul.f32 %v378, %v393
  %v395 = vadd.f32 %v394, 0.112945676
  %v396 = vmul.f32 %v378, %v395
  %v397 = vadd.f32 %v396, 0.4994258
  %v398 = vmul.f32 %v378, %v397
  %v399 = vadd.f32 %v398, 1.0
  %v400 = vrcp.pop %v399
  %v401 = vmul.f32 %v399, %v400
  %v402 = vsub.f32 1.0, %v401
  %v403 = vmul.f32 %v400, %v402
  %v404 = vadd.f32 %v400, %v403
  %vm405 = vweird.f32 %v399
  %vm406 = vweird.f32 %v400
  %vm407 = vmor %vm405, %vm406
  %v408 = vsel %vm407, %v400, %v404
  %v409 = vand.u32 2147483647, %v399
  %vm410 = vcmp.eq.f32.partialorder %v409, 8.507059e+37
  %v411 = vand.u32 %v399, 2147483648
  %v412 = vor.u32 1.1754944e-38, %v411
  %v413 = vsel %vm410, %v412, %v408
  %v414 = vmul.f32 %v389, %v413
  %v415 = vmin.f32 %v414, 1.0
  %v416 = vmax.f32 %v415, -1.0
  %v417 = vadd.f32 %v256, 1.0
  %v418 = vadd.f32 %v296, 1.0
  %v419 = vadd.f32 %v336, 1.0
  %v420 = vadd.f32 %v376, 1.0
  %v421 = vadd.f32 %v416, 1.0
  %v422 = vmul.f32 %v207, %v417
  %v423 = vmul.f32 %v208, %v418
  %v424 = vmul.f32 %v209, %v419
  %v425 = vmul.f32 %v210, %v420
  %v426 = vmul.f32 %v211, %v421
  %vm427 = vcmask 523264
  %428 = vst.msk [vmem:[%s5] sm:$0xff] %vm427, %v422
  %429 = vst.msk [vmem:[%s5 + $0x8] sm:$0xff] %vm427, %v423
  %430 = vst.msk [vmem:[%s5 + $0x10] sm:$0xff] %vm427, %v424
  %431 = vst.msk [vmem:[%s5 + $0x18] sm:$0xff] %vm427, %v425
  %432 = vst.msk [vmem:[%s5 + $0x20] sm:$0xff] %vm427, %v426
  // Predicated region
  $region22: #{_lambda_.23} parent=0 // pred_check
    _
  $region23: #{_lambda_.23} parent=0 // pred_check_branch
    %434 = sbr.rel (0) target = $region25
  $region24: #{_lambda_.23} parent=0 // pred_region
    _
  $region25: #{_lambda_.23} parent=0 // pred_fallthru
    _
  // Predicated region
  $region26: #{_lambda_.23} parent=0 // pred_check
    _
  $region27: #{_lambda_.23} parent=0 // pred_check_branch
    %436 = sbr.rel (0) target = $region29
  $region28: #{_lambda_.23} parent=0 // pred_region
    _
  $region29: #{_lambda_.23} parent=0 // pred_fallthru
    _

// kernel: _lambda_.24
$region0: #{_lambda_.24}
  #allocation0 [shape = 'u32[]', space=smem, size = 0x4, offset = 0x4, fixed_abs, tag = 'smem constant byte address 0x4 - core index']
  #allocation1 [shape = 'u32[72,128]{1,0:T(1,128)}', space=vmem, size = 0x9000, scoped, tag = 'internal scratch']
  #allocation2 [shape = 'f32[40,32]{1,0:T(8,128)}', space=vmem, size = 0x5000, scoped, tag = 'scratch operand']
  %s0 = inlined_call_operand.vmem [shape: f32[40,64], index: 0, kind: input, shape index: {}]
  %s1 = inlined_call_operand.vmem [shape: f32[64,32], index: 1, kind: input, shape index: {}]
  %s2 = inlined_call_operand.vmem [shape: f32[1,32], index: 2, kind: input, shape index: {}]
  %s3 = inlined_call_operand.vmem [shape: f32[40,32], index: 3, kind: input, shape index: {}]
  %s4 = inlined_call_operand.vmem [shape: f32[40,32], index: 4, kind: output, shape index: {}]
  %s5 = sld [smem:[#allocation0]]
  $region34: #{_lambda_.24} parent=0
    _
  %s7 = ssub.s32 1, %s5
  %s8 = scalar_select 0, %s7, %s5
  // Predicated region
  $region2: #{_lambda_.24} parent=0 // pred_check
    _
  $region3: #{_lambda_.24} parent=0 // pred_check_branch
    %10 = sbr.rel (0) target = $region5
  $region4: #{_lambda_.24} parent=0 // pred_region
    _
  $region5: #{_lambda_.24} parent=0 // pred_fallthru
    _
  // Predicated region
  $region6: #{_lambda_.24} parent=0 // pred_check
    _
  $region7: #{_lambda_.24} parent=0 // pred_check_branch
    %12 = sbr.rel (0) target = $region9
  $region8: #{_lambda_.24} parent=0 // pred_region
    _
  $region9: #{_lambda_.24} parent=0 // pred_fallthru
    _
  // Predicated region
  $region10: #{_lambda_.24} parent=0 // pred_check
    _
  $region11: #{_lambda_.24} parent=0 // pred_check_branch
    %14 = sbr.rel (0) target = $region13
  $region12: #{_lambda_.24} parent=0 // pred_region
    _
  $region13: #{_lambda_.24} parent=0 // pred_fallthru
    _
  // Predicated region
  $region14: #{_lambda_.24} parent=0 // pred_check
    _
  $region15: #{_lambda_.24} parent=0 // pred_check_branch
    %16 = sbr.rel (0) target = $region17
  $region16: #{_lambda_.24} parent=0 // pred_region
    _
  $region17: #{_lambda_.24} parent=0 // pred_fallthru
    _
  %p18 = scmp.eq.s32.totalorder 0, 0
  // Predicated region
  $region18: #{_lambda_.24} parent=0 // pred_check
    %p19 = pneg %p18
  $region19: #{_lambda_.24} parent=0 // pred_check_branch
    %21 = sbr.rel (%p19) target = $region21
  $region20: #{_lambda_.24} parent=0 // pred_region
    %vm22 = vcmask 261120
    %23 = vst.msk [vmem:[#allocation2] sm:$0xff] %vm22, 0.0
    %24 = vst.msk [vmem:[#allocation2 + $0x8] sm:$0xff] %vm22, 0.0
    %25 = vst.msk [vmem:[#allocation2 + $0x10] sm:$0xff] %vm22, 0.0
    %26 = vst.msk [vmem:[#allocation2 + $0x18] sm:$0xff] %vm22, 0.0
    %27 = vst.msk [vmem:[#allocation2 + $0x20] sm:$0xff] %vm22, 0.0
  $region21: #{_lambda_.24} parent=0 // pred_fallthru
    _
  %v28 = vld [vmem:[#allocation2] sm:$0xff]
  %v29 = vld [vmem:[#allocation2 + $0x8] sm:$0xff]
  %v30 = vld [vmem:[#allocation2 + $0x10] sm:$0xff]
  %v31 = vld [vmem:[#allocation2 + $0x18] sm:$0xff]
  %v32 = vld [vmem:[#allocation2 + $0x20] sm:$0xff]
  %v33 = vld [vmem:[%s0] sm:$0xff]
  %v34 = vld [vmem:[%s0 + $0x8] sm:$0xff]
  %v35 = vld [vmem:[%s0 + $0x10] sm:$0xff]
  %v36 = vld [vmem:[%s0 + $0x18] sm:$0xff]
  %v37 = vld [vmem:[%s0 + $0x20] sm:$0xff]
  %v38 = vpack.c.bf16 %v34, %v33
  %v39 = vpack.c.bf16 %v36, %v35
  %v40 = vpack.c.bf16 %v37, %v37
  %v41 = vld [vmem:[%s1] sm:$0xff]
  %v42 = vld [vmem:[%s1 + $0x8] sm:$0xff]
  %v43 = vld [vmem:[%s1 + $0x10] sm:$0xff]
  %v44 = vld [vmem:[%s1 + $0x18] sm:$0xff]
  %v45 = vld [vmem:[%s1 + $0x20] sm:$0xff]
  %v46 = vld [vmem:[%s1 + $0x28] sm:$0xff]
  %v47 = vld [vmem:[%s1 + $0x30] sm:$0xff]
  %v48 = vld [vmem:[%s1 + $0x38] sm:$0xff]
  %v49 = vpack.c.bf16 %v42, %v41
  %v50 = vpack.c.bf16 %v44, %v43
  %v51 = vpack.c.bf16 %v46, %v45
  %v52 = vpack.c.bf16 %v48, %v47
  %vm53 = vcmask 523264
  %v55 = vsel %vm53, %v38, 0
  %v58 = vsel %vm53, %v39, 0
  %v61 = vsel %vm53, %v40, 0
  %63 = vmatpush.bf16.msra.mxu0 0
  %64 = vmatpush.bf16.msra.mxu0 0
  %65 = vmatpush.bf16.msra.mxu0 0
  %66 = vmatpush.bf16.msra.mxu0 0
  %67 = vmatpush.bf16.msra.mxu0 %v52
  %68 = vmatpush.bf16.msra.mxu0 %v51
  %69 = vmatpush.bf16.msra.mxu0 %v50
  %70 = vmatpush.bf16.msra.mxu0 %v49
  %71 = vmatmul.bf16.gmra.mxu0 %v55
  %v72 = vpop.f32.mrf.mxu0
  %v73 = vadd.f32 0.0, %v72
  %v74 = vpop.f32.mrf.mxu0
  %v75 = vadd.f32 0.0, %v74
  %76 = vmatmul.bf16.gmra.mxu0 %v58
  %v77 = vpop.f32.mrf.mxu0
  %v78 = vadd.f32 0.0, %v77
  %v79 = vpop.f32.mrf.mxu0
  %v80 = vadd.f32 0.0, %v79
  %81 = vmatmul.bf16.gmra.mxu0 %v61
  %v82 = vpop.f32.mrf.mxu0
  %v83 = vadd.f32 0.0, %v82
  %v84 = vpop.f32.mrf.mxu0
  %85 = vdwg.mxu0
  %v86 = vadd.f32 %v28, %v73
  %v87 = vadd.f32 %v29, %v75
  %v88 = vadd.f32 %v30, %v78
  %v89 = vadd.f32 %v31, %v80
  %v90 = vadd.f32 %v32, %v83
  %vm91 = vcmask 261120
  %92 = vst.msk [vmem:[#allocation2] sm:$0xff] %vm91, %v86
  %93 = vst.msk [vmem:[#allocation2 + $0x8] sm:$0xff] %vm91, %v87
  %94 = vst.msk [vmem:[#allocation2 + $0x10] sm:$0xff] %vm91, %v88
  %95 = vst.msk [vmem:[#allocation2 + $0x18] sm:$0xff] %vm91, %v89
  %96 = vst.msk [vmem:[#allocation2 + $0x20] sm:$0xff] %vm91, %v90
  // Predicated region
  $region22: #{_lambda_.24} parent=0 // pred_check
    %p97 = pneg %p18
  $region23: #{_lambda_.24} parent=0 // pred_check_branch
    %99 = sbr.rel (%p97) target = $region25
  $region24: #{_lambda_.24} parent=0 // pred_region
    %v100 = vld [vmem:[#allocation2] sm:$0xff]
    %v101 = vld [vmem:[#allocation2 + $0x8] sm:$0xff]
    %v102 = vld [vmem:[#allocation2 + $0x10] sm:$0xff]
    %v103 = vld [vmem:[#allocation2 + $0x18] sm:$0xff]
    %v104 = vld [vmem:[#allocation2 + $0x20] sm:$0xff]
    %v105 = vld [vmem:[%s2] sm:$0x1]
    %v107 = vperm.slane %v105, 0
    %v109 = vadd.f32 %v100, %v107
    %v110 = vadd.f32 %v101, %v107
    %v111 = vadd.f32 %v102, %v107
    %v112 = vadd.f32 %v103, %v107
    %v113 = vadd.f32 %v104, %v107
    %v114 = vld [vmem:[%s3] sm:$0xff]
    %v115 = vld [vmem:[%s3 + $0x8] sm:$0xff]
    %v116 = vld [vmem:[%s3 + $0x10] sm:$0xff]
    %v117 = vld [vmem:[%s3 + $0x18] sm:$0xff]
    %v118 = vld [vmem:[%s3 + $0x20] sm:$0xff]
    %v119 = vadd.f32 %v109, %v114
    %v120 = vadd.f32 %v110, %v115
    %v121 = vadd.f32 %v111, %v116
    %v122 = vadd.f32 %v112, %v117
    %v123 = vadd.f32 %v113, %v118
    %124 = vst.msk [vmem:[%s4] sm:$0xff] %vm91, %v119
    %125 = vst.msk [vmem:[%s4 + $0x8] sm:$0xff] %vm91, %v120
    %126 = vst.msk [vmem:[%s4 + $0x10] sm:$0xff] %vm91, %v121
    %127 = vst.msk [vmem:[%s4 + $0x18] sm:$0xff] %vm91, %v122
    %128 = vst.msk [vmem:[%s4 + $0x20] sm:$0xff] %vm91, %v123
  $region25: #{_lambda_.24} parent=0 // pred_fallthru
    _
  // Predicated region
  $region26: #{_lambda_.24} parent=0 // pred_check
    _
  $region27: #{_lambda_.24} parent=0 // pred_check_branch
    %130 = sbr.rel (0) target = $region29
  $region28: #{_lambda_.24} parent=0 // pred_region
    _
  $region29: #{_lambda_.24} parent=0 // pred_fallthru
    _
  // Predicated region
  $region30: #{_lambda_.24} parent=0 // pred_check
    _
  $region31: #{_lambda_.24} parent=0 // pred_check_branch
    %132 = sbr.rel (0) target = $region33
  $region32: #{_lambda_.24} parent=0 // pred_region
    _
  $region33: #{_lambda_.24} parent=0 // pred_fallthru
    _

// kernel: _lambda_.29
$region0: #{_lambda_.29}
  #allocation0 [shape = 'u32[]', space=smem, size = 0x4, offset = 0x4, fixed_abs, tag = 'smem constant byte address 0x4 - core index']
  #allocation1 [shape = 'u32[72,128]{1,0:T(1,128)}', space=vmem, size = 0x9000, scoped, tag = 'internal scratch']
  %s0 = inlined_call_operand.vmem [shape: f32[40,32], index: 0, kind: input, shape index: {}]
  %s1 = inlined_call_operand.vmem [shape: f32[1,32], index: 1, kind: input, shape index: {}]
  %s2 = inlined_call_operand.vmem [shape: f32[1,32], index: 2, kind: input, shape index: {}]
  %s3 = inlined_call_operand.vmem [shape: f32[40,32], index: 3, kind: output, shape index: {}]
  %s4 = sld [smem:[#allocation0]]
  $region22: #{_lambda_.29} parent=0
    _
  %s6 = ssub.s32 1, %s4
  %s7 = scalar_select 0, %s6, %s4
  // Predicated region
  $region2: #{_lambda_.29} parent=0 // pred_check
    _
  $region3: #{_lambda_.29} parent=0 // pred_check_branch
    %9 = sbr.rel (0) target = $region5
  $region4: #{_lambda_.29} parent=0 // pred_region
    _
  $region5: #{_lambda_.29} parent=0 // pred_fallthru
    _
  // Predicated region
  $region6: #{_lambda_.29} parent=0 // pred_check
    _
  $region7: #{_lambda_.29} parent=0 // pred_check_branch
    %11 = sbr.rel (0) target = $region9
  $region8: #{_lambda_.29} parent=0 // pred_region
    _
  $region9: #{_lambda_.29} parent=0 // pred_fallthru
    _
  // Predicated region
  $region10: #{_lambda_.29} parent=0 // pred_check
    _
  $region11: #{_lambda_.29} parent=0 // pred_check_branch
    %13 = sbr.rel (0) target = $region13
  $region12: #{_lambda_.29} parent=0 // pred_region
    _
  $region13: #{_lambda_.29} parent=0 // pred_fallthru
    _
  %v14 = vld [vmem:[%s0] sm:$0xff]
  %v15 = vld [vmem:[%s0 + $0x8] sm:$0xff]
  %v16 = vld [vmem:[%s0 + $0x10] sm:$0xff]
  %v17 = vld [vmem:[%s0 + $0x18] sm:$0xff]
  %v18 = vld [vmem:[%s0 + $0x20] sm:$0xff]
  %vm19 = vcmask 261120
  %v20 = vsel %vm19, %v14, 0.0
  %21 = vadd.xlane.f32.xlu0 %v20
  %v22 = vpop.xlane.xlu0 %21
  %v23 = vsel %vm19, %v15, 0.0
  %24 = vadd.xlane.f32.xlu0 %v23
  %v25 = vpop.xlane.xlu0 %24
  %v26 = vsel %vm19, %v16, 0.0
  %27 = vadd.xlane.f32.xlu0 %v26
  %v28 = vpop.xlane.xlu0 %27
  %v29 = vsel %vm19, %v17, 0.0
  %30 = vadd.xlane.f32.xlu0 %v29
  %v31 = vpop.xlane.xlu0 %30
  %v32 = vsel %vm19, %v18, 0.0
  %33 = vadd.xlane.f32.xlu0 %v32
  %v34 = vpop.xlane.xlu0 %33
  %v35 = vrcp.pop 32.0
  %v36 = vmul.f32 32.0, %v35
  %v37 = vsub.f32 1.0, %v36
  %v38 = vmul.f32 %v35, %v37
  %v39 = vadd.f32 %v35, %v38
  %vm40 = vweird.f32 %v35
  %v41 = vsel %vm40, %v35, %v39
  %v42 = vmul.f32 %v22, %v41
  %v43 = vmul.f32 %v25, %v41
  %v44 = vmul.f32 %v28, %v41
  %v45 = vmul.f32 %v31, %v41
  %v46 = vmul.f32 %v34, %v41
  %v47 = vsub.f32 %v14, %v42
  %v48 = vsub.f32 %v15, %v43
  %v49 = vsub.f32 %v16, %v44
  %v50 = vsub.f32 %v17, %v45
  %v51 = vsub.f32 %v18, %v46
  %v52 = vmul.f32 %v47, %v47
  %v53 = vmul.f32 %v48, %v48
  %v54 = vmul.f32 %v49, %v49
  %v55 = vmul.f32 %v50, %v50
  %v56 = vmul.f32 %v51, %v51
  %v57 = vsel %vm19, %v52, 0.0
  %58 = vadd.xlane.f32.xlu0 %v57
  %v59 = vpop.xlane.xlu0 %58
  %v60 = vsel %vm19, %v53, 0.0
  %61 = vadd.xlane.f32.xlu0 %v60
  %v62 = vpop.xlane.xlu0 %61
  %v63 = vsel %vm19, %v54, 0.0
  %64 = vadd.xlane.f32.xlu0 %v63
  %v65 = vpop.xlane.xlu0 %64
  %v66 = vsel %vm19, %v55, 0.0
  %67 = vadd.xlane.f32.xlu0 %v66
  %v68 = vpop.xlane.xlu0 %67
  %v69 = vsel %vm19, %v56, 0.0
  %70 = vadd.xlane.f32.xlu0 %v69
  %v71 = vpop.xlane.xlu0 %70
  %v72 = vmul.f32 %v59, %v41
  %v73 = vmul.f32 %v62, %v41
  %v74 = vmul.f32 %v65, %v41
  %v75 = vmul.f32 %v68, %v41
  %v76 = vmul.f32 %v71, %v41
  %v77 = vadd.f32 %v72, 1e-05
  %v78 = vadd.f32 %v73, 1e-05
  %v79 = vadd.f32 %v74, 1e-05
  %v80 = vadd.f32 %v75, 1e-05
  %v81 = vadd.f32 %v76, 1e-05
  %v82 = vrsqrt.pop %v77
  %v83 = vmul.f32 %v82, %v77
  %v84 = vmul.f32 %v83, %v82
  %v85 = vmul.f32 0.5, %v84
  %v86 = vsub.f32 1.5, %v85
  %v87 = vmul.f32 %v82, %v86
  %vm88 = vweird.f32 %v77
  %vm89 = vweird.f32 %v82
  %vm90 = vmor %vm88, %vm89
  %v91 = vsel %vm90, %v82, %v87
  %v92 = vrsqrt.pop %v78
  %v93 = vmul.f32 %v92, %v78
  %v94 = vmul.f32 %v93, %v92
  %v95 = vmul.f32 0.5, %v94
  %v96 = vsub.f32 1.5, %v95
  %v97 = vmul.f32 %v92, %v96
  %vm98 = vweird.f32 %v78
  %vm99 = vweird.f32 %v92
  %vm100 = vmor %vm98, %vm99
  %v101 = vsel %vm100, %v92, %v97
  %v102 = vrsqrt.pop %v79
  %v103 = vmul.f32 %v102, %v79
  %v104 = vmul.f32 %v103, %v102
  %v105 = vmul.f32 0.5, %v104
  %v106 = vsub.f32 1.5, %v105
  %v107 = vmul.f32 %v102, %v106
  %vm108 = vweird.f32 %v79
  %vm109 = vweird.f32 %v102
  %vm110 = vmor %vm108, %vm109
  %v111 = vsel %vm110, %v102, %v107
  %v112 = vrsqrt.pop %v80
  %v113 = vmul.f32 %v112, %v80
  %v114 = vmul.f32 %v113, %v112
  %v115 = vmul.f32 0.5, %v114
  %v116 = vsub.f32 1.5, %v115
  %v117 = vmul.f32 %v112, %v116
  %vm118 = vweird.f32 %v80
  %vm119 = vweird.f32 %v112
  %vm120 = vmor %vm118, %vm119
  %v121 = vsel %vm120, %v112, %v117
  %v122 = vrsqrt.pop %v81
  %v123 = vmul.f32 %v122, %v81
  %v124 = vmul.f32 %v123, %v122
  %v125 = vmul.f32 0.5, %v124
  %v126 = vsub.f32 1.5, %v125
  %v127 = vmul.f32 %v122, %v126
  %vm128 = vweird.f32 %v81
  %vm129 = vweird.f32 %v122
  %vm130 = vmor %vm128, %vm129
  %v131 = vsel %vm130, %v122, %v127
  %v132 = vmul.f32 %v47, %v91
  %v133 = vmul.f32 %v48, %v101
  %v134 = vmul.f32 %v49, %v111
  %v135 = vmul.f32 %v50, %v121
  %v136 = vmul.f32 %v51, %v131
  %v137 = vld [vmem:[%s1] sm:$0x1]
  %v139 = vperm.slane %v137, 0
  %v141 = vmul.f32 %v132, %v139
  %v142 = vmul.f32 %v133, %v139
  %v143 = vmul.f32 %v134, %v139
  %v144 = vmul.f32 %v135, %v139
  %v145 = vmul.f32 %v136, %v139
  %v146 = vld [vmem:[%s2] sm:$0x1]
  %v148 = vperm.slane %v146, 0
  %v150 = vadd.f32 %v141, %v148
  %v151 = vadd.f32 %v142, %v148
  %v152 = vadd.f32 %v143, %v148
  %v153 = vadd.f32 %v144, %v148
  %v154 = vadd.f32 %v145, %v148
  %155 = vst.msk [vmem:[%s3] sm:$0xff] %vm19, %v150
  %156 = vst.msk [vmem:[%s3 + $0x8] sm:$0xff] %vm19, %v151
  %157 = vst.msk [vmem:[%s3 + $0x10] sm:$0xff] %vm19, %v152
  %158 = vst.msk [vmem:[%s3 + $0x18] sm:$0xff] %vm19, %v153
  %159 = vst.msk [vmem:[%s3 + $0x20] sm:$0xff] %vm19, %v154
  // Predicated region
  $region14: #{_lambda_.29} parent=0 // pred_check
    _
  $region15: #{_lambda_.29} parent=0 // pred_check_branch
    %161 = sbr.rel (0) target = $region17
  $region16: #{_lambda_.29} parent=0 // pred_region
    _
  $region17: #{_lambda_.29} parent=0 // pred_fallthru
    _
  // Predicated region
  $region18: #{_lambda_.29} parent=0 // pred_check
    _
  $region19: #{_lambda_.29} parent=0 // pred_check_branch
    %163 = sbr.rel (0) target = $region21
  $region20: #{_lambda_.29} parent=0 // pred_region
    _
  $region21: #{_lambda_.29} parent=0 // pred_fallthru
    _

// kernel: _lambda_.31
$region0: #{_lambda_.31}
  #allocation0 [shape = 'u32[]', space=smem, size = 0x4, offset = 0x4, fixed_abs, tag = 'smem constant byte address 0x4 - core index']
  #allocation1 [shape = 'u32[72,128]{1,0:T(1,128)}', space=vmem, size = 0x9000, scoped, tag = 'internal scratch']
  %s0 = inlined_call_operand.vmem [shape: f32[2,5,96], index: 0, kind: input, shape index: {}]
  %s1 = inlined_call_operand.vmem [shape: f32[2,16,32], index: 1, kind: input, shape index: {}]
  %s2 = inlined_call_operand.vmem [shape: f32[1,32], index: 2, kind: input, shape index: {}]
  %s3 = inlined_call_operand.vmem [shape: f32[2,5,32], index: 3, kind: input, shape index: {}]
  %s4 = inlined_call_operand.vmem [shape: f32[2,5,32], index: 4, kind: output, shape index: {}]
  %s5 = sld [smem:[#allocation0]]
  $region49: #{_lambda_.31} parent=0
    _
  %s7 = ssub.s32 1, %s5
  %s8 = scalar_select 0, %s7, %s5
  loop: start=0, step=1, limit=4
  $region2: #{_lambda_.31} parent=0 // loop_pre_header
    _
  $region3: #{_lambda_.31} parent=0 // loop_header
    %s10 = sphi 0, %s14
    %p11 = scmp.ge.s32.totalorder %s10, 4
    %s20 = sphi 0, %s22
    %s23 = sphi 0, %s20
    %s24 = sphi 0, %s23
    %s40 = sphi 0, %s24
    %s44 = sphi 0, %s44
    %s46 = sphi 0, %s44
    %s47 = sphi 0, %s46
    %s61 = sphi 0, %s47
    %s65 = sphi 0, %s65
    %s67 = sphi 0, %s65
    %s68 = sphi 0, %s67
    %s82 = sphi 0, %s68
    %s88 = sphi 0, %s90
    %s91 = sphi 0, %s88
    %s92 = sphi 0, %s91
    %s108 = sphi 0, %s92
    %s114 = sphi 0, %s116
    %s117 = sphi 0, %s114
    %s118 = sphi 0, %s117
    %s134 = sphi 0, %s118
  $region4: #{_lambda_.31} parent=0 // loop_header_branch
    %13 = sbr.rel (%p11) target = $region8
  $region5: #{_lambda_.31} parent=0 // loop_body
    %s15 = ssub.s32 %s10, 1
    %s16 = ssub.s32 %s10, 2
    %s17 = sadd.s32 %s10, 1
    %s18 = ssub.s32 %s10, %s17
    %p19 = scmp.eq.s32.totalorder %s18, 0
    %s21 = sadd.s32 %s20, 1
    %s22 = scalar_select %p19, %s20, %s21
    %p25 = pneg %p19
    %p26 = scmp.eq.s32.totalorder %s10, 1
    %p27 = por %p25, %p26
    %p28 = scmp.ne.s32.totalorder %s20, %s23
    %p29 = scmp.eq.s32.totalorder %s10, 0
    %p30 = por %p28, %p29
    %p31 = scmp.ne.s32.totalorder %s20, %s23
    %p32 = scmp.eq.s32.totalorder %s15, 1
    %p33 = por %p31, %p32
    %p34 = scmp.ne.s32.totalorder %s23, %s24
    %p35 = scmp.eq.s32.totalorder %s15, 0
    %p36 = por %p34, %p35
    %p37 = scmp.ne.s32.totalorder %s23, %s24
    %p38 = scmp.eq.s32.totalorder %s16, 1
    %p39 = por %p37, %p38
    %p41 = scmp.ne.s32.totalorder %s24, %s40
    %p42 = scmp.eq.s32.totalorder %s16, 0
    %p43 = por %p41, %p42
    %s45 = sadd.s32 %s44, 1
    %p48 = scmp.eq.s32.totalorder %s10, 1
    %p49 = scmp.ne.s32.totalorder %s44, %s46
    %p50 = scmp.eq.s32.totalorder %s10, 0
    %p51 = por %p49, %p50
    %p52 = scmp.ne.s32.totalorder %s44, %s46
    %p53 = scmp.eq.s32.totalorder %s15, 1
    %p54 = por %p52, %p53
    %p55 = scmp.ne.s32.totalorder %s46, %s47
    %p56 = scmp.eq.s32.totalorder %s15, 0
    %p57 = por %p55, %p56
    %p58 = scmp.ne.s32.totalorder %s46, %s47
    %p59 = scmp.eq.s32.totalorder %s16, 1
    %p60 = por %p58, %p59
    %p62 = scmp.ne.s32.totalorder %s47, %s61
    %p63 = scmp.eq.s32.totalorder %s16, 0
    %p64 = por %p62, %p63
    %s66 = sadd.s32 %s65, 1
    %p69 = scmp.eq.s32.totalorder %s10, 1
    %p70 = scmp.ne.s32.totalorder %s65, %s67
    %p71 = scmp.eq.s32.totalorder %s10, 0
    %p72 = por %p70, %p71
    %p73 = scmp.ne.s32.totalorder %s65, %s67
    %p74 = scmp.eq.s32.totalorder %s15, 1
    %p75 = por %p73, %p74
    %p76 = scmp.ne.s32.totalorder %s67, %s68
    %p77 = scmp.eq.s32.totalorder %s15, 0
    %p78 = por %p76, %p77
    %p79 = scmp.ne.s32.totalorder %s67, %s68
    %p80 = scmp.eq.s32.totalorder %s16, 1
    %p81 = por %p79, %p80
    %p83 = scmp.ne.s32.totalorder %s68, %s82
    %p84 = scmp.eq.s32.totalorder %s16, 0
    %p85 = por %p83, %p84
    %s86 = ssub.s32 %s10, %s17
    %p87 = scmp.eq.s32.totalorder %s86, 0
    %s89 = sadd.s32 %s88, 1
    %s90 = scalar_select %p87, %s88, %s89
    %p93 = pneg %p87
    %p94 = scmp.eq.s32.totalorder %s10, 1
    %p95 = por %p93, %p94
    %p96 = scmp.ne.s32.totalorder %s88, %s91
    %p97 = scmp.eq.s32.totalorder %s10, 0
    %p98 = por %p96, %p97
    %p99 = scmp.ne.s32.totalorder %s88, %s91
    %p100 = scmp.eq.s32.totalorder %s15, 1
    %p101 = por %p99, %p100
    %p102 = scmp.ne.s32.totalorder %s91, %s92
    %p103 = scmp.eq.s32.totalorder %s15, 0
    %p104 = por %p102, %p103
    %p105 = scmp.ne.s32.totalorder %s91, %s92
    %p106 = scmp.eq.s32.totalorder %s16, 1
    %p107 = por %p105, %p106
    %p109 = scmp.ne.s32.totalorder %s92, %s108
    %p110 = scmp.eq.s32.totalorder %s16, 0
    %p111 = por %p109, %p110
    %s112 = ssub.s32 %s10, %s17
    %p113 = scmp.eq.s32.totalorder %s112, 0
    %s115 = sadd.s32 %s114, 1
    %s116 = scalar_select %p113, %s114, %s115
    %p119 = pneg %p113
    %p120 = scmp.eq.s32.totalorder %s10, 1
    %p121 = por %p119, %p120
    %p122 = scmp.ne.s32.totalorder %s114, %s117
    %p123 = scmp.eq.s32.totalorder %s10, 0
    %p124 = por %p122, %p123
    %p125 = scmp.ne.s32.totalorder %s114, %s117
    %p126 = scmp.eq.s32.totalorder %s15, 1
    %p127 = por %p125, %p126
    %p128 = scmp.ne.s32.totalorder %s117, %s118
    %p129 = scmp.eq.s32.totalorder %s15, 0
    %p130 = por %p128, %p129
    %p131 = scmp.ne.s32.totalorder %s117, %s118
    %p132 = scmp.eq.s32.totalorder %s16, 1
    %p133 = por %p131, %p132
    %p135 = scmp.ne.s32.totalorder %s118, %s134
    %p136 = scmp.eq.s32.totalorder %s16, 0
    %p137 = por %p135, %p136
    %p138 = scmp.le.s32.totalorder 1, %s10
    %p139 = scmp.lt.s32.totalorder %s10, 3
    %p140 = pnand %p138, %p139
    %p141 = pneg %p140
    // Predicated region
    $region9: #{_lambda_.31} parent=5 // pred_check
      _
    $region10: #{_lambda_.31} parent=5 // pred_check_branch
      %143 = sbr.rel (%p140) target = $region12
    $region11: #{_lambda_.31} parent=5 // pred_region
      %s144 = ssub.s32 %s10, 1
      // Predicated region
      $region13: #{_lambda_.31} parent=11 // pred_check
        %p145 = pneg %p57
      $region14: #{_lambda_.31} parent=11 // pred_check_branch
        %147 = sbr.rel (%p145) target = $region16
      $region15: #{_lambda_.31} parent=11 // pred_region
        _
      $region16: #{_lambda_.31} parent=11 // pred_fallthru
        _
      // Predicated region
      $region17: #{_lambda_.31} parent=11 // pred_check
        %p148 = pneg %p78
      $region18: #{_lambda_.31} parent=11 // pred_check_branch
        %150 = sbr.rel (%p148) target = $region20
      $region19: #{_lambda_.31} parent=11 // pred_region
        _
      $region20: #{_lambda_.31} parent=11 // pred_fallthru
        _
    $region12: #{_lambda_.31} parent=5 // pred_fallthru
      _
    %p151 = scmp.lt.s32.totalorder %s10, 2
    // Predicated region
    $region21: #{_lambda_.31} parent=5 // pred_check
      %p152 = pneg %p151
    $region22: #{_lambda_.31} parent=5 // pred_check_branch
      %154 = sbr.rel (%p152) target = $region24
    $region23: #{_lambda_.31} parent=5 // pred_region
      // Predicated region
      $region25: #{_lambda_.31} parent=23 // pred_check
        %p155 = pneg %p30
      $region26: #{_lambda_.31} parent=23 // pred_check_branch
        %157 = sbr.rel (%p155) target = $region28
      $region27: #{_lambda_.31} parent=23 // pred_region
        %p158 = scmp.lt.s32.totalorder %s10, 1
        %s159 = scalar_select %p158, %s10, 1
        %s160 = smul.addr %s159, 8
        %s161 = scalar_lea.vmem %s0, %s160
      $region28: #{_lambda_.31} parent=23 // pred_fallthru
        _
      // Predicated region
      $region29: #{_lambda_.31} parent=23 // pred_check
        %p162 = pneg %p98
      $region30: #{_lambda_.31} parent=23 // pred_check_branch
        %164 = sbr.rel (%p162) target = $region32
      $region31: #{_lambda_.31} parent=23 // pred_region
        %p165 = scmp.lt.s32.totalorder %s10, 1
        %s166 = scalar_select %p165, %s10, 1
        %s167 = smul.addr %s166, 8
        %s168 = scalar_lea.vmem %s3, %s167
      $region32: #{_lambda_.31} parent=23 // pred_fallthru
        _
    $region24: #{_lambda_.31} parent=5 // pred_fallthru
      _
    %p169 = scmp.le.s32.totalorder 1, %s10
    %p170 = scmp.lt.s32.totalorder %s10, 3
    %p171 = pnand %p169, %p170
    %p172 = pneg %p171
    // Predicated region
    $region33: #{_lambda_.31} parent=5 // pred_check
      _
    $region34: #{_lambda_.31} parent=5 // pred_check_branch
      %174 = sbr.rel (%p171) target = $region36
    $region35: #{_lambda_.31} parent=5 // pred_region
      %s175 = ssub.s32 %s10, 1
      %p176 = scmp.lt.s32.totalorder %s15, 1
      %s177 = scalar_select %p176, %s15, 1
      %s178 = smul.addr %s177, 8
      %s179 = scalar_lea.vmem %s0, %s178
      %p180 = pneg %p36
      %p181 = pneg %p33
      %p182 = pneg %p57
      %p183 = pneg %p54
      %p184 = pneg %p78
      %p185 = pneg %p75
      %p186 = scmp.lt.s32.totalorder %s15, 1
      %s187 = scalar_select %p186, %s15, 1
      %s188 = smul.addr %s187, 8
      %s189 = scalar_lea.vmem %s3, %s188
      %p190 = pneg %p104
      %p191 = pneg %p101
      %p192 = pneg %p130
      %p193 = pneg %p127
      %p194 = scmp.lt.s32.totalorder %s15, 1
      %s195 = scalar_select %p194, %s15, 1
      %s196 = smul.addr %s195, 8
      %s197 = scalar_lea.vmem %s4, %s196
      %p198 = scmp.lt.s32.totalorder %s15, 1
      %s199 = scalar_select %p198, %s15, 1
      %s200 = smul.addr %s199, 8
      %s201 = scalar_lea.vmem %s0, %s200
      %p202 = scmp.lt.s32.totalorder %s15, 1
      %s203 = scalar_select %p202, %s15, 1
      %s204 = smul.addr %s203, 8
      %s205 = scalar_lea.vmem %s3, %s204
      %p206 = scmp.lt.s32.totalorder %s15, 1
      %s207 = scalar_select %p206, %s15, 1
      %s208 = smul.addr %s207, 8
      %s209 = scalar_lea.vmem %s4, %s208
      %v211 = vld [vmem:[%s201] sm:$0x1f]
      %v212 = vld [vmem:[%s1] sm:$0xff]
      %v213 = vld [vmem:[%s1 + $0x8] sm:$0xff]
      %v214 = vld [vmem:[%s1 + $0x10] sm:$0xff]
      %v215 = vld [vmem:[%s1 + $0x18] sm:$0xff]
      %v216 = vld [vmem:[%s205] sm:$0x1f]
      %v217 = vld [vmem:[%s2] sm:$0x1]
      %v219 = vperm.slane %v217, 0
      %v221 = vadd.f32 %v216, %v219
      %v222 = vmul.f32 %v211, 0.25
      %v223 = vpack.c.bf16 %v222, %v222
      %v224 = vpack.c.bf16 %v211, %v211
      %226 = vrot.lane.b32.xlu0 %v224, 96
      %v227 = vpop.permute.xlu0 %226
      %vm228 = vcmask 130048
      %v230 = vsel %vm228, %v223, 0
      %v233 = vsel %vm228, %v227, 0
      %235 = vmatpush.bf16.xpose.msra.mxu0 0
      %236 = vmatpush.bf16.xpose.msra.mxu0 0
      %237 = vmatpush.bf16.xpose.msra.mxu0 0
      %238 = vmatpush.bf16.xpose.msra.mxu0 0
      %239 = vmatpush.bf16.xpose.msra.mxu0 0
      %240 = vmatpush.bf16.xpose.msra.mxu0 0
      %241 = vmatpush.bf16.xpose.msra.mxu0 0
      %242 = vmatpush.bf16.xpose.msra.mxu0 %v233
      %243 = vmatmul.bf16.gmra.mxu0 %v230
      %v244 = vpop.f32.mrf.mxu0
      %v245 = vadd.f32 0.0, %v244
      %v246 = vpop.f32.mrf.mxu0
      %247 = vdwg.mxu0
      %vm248 = vcmask 36864
      %v249 = vsel %vm248, %v245, -inf
      %250 = vmax.xlane.f32.xlu0 %v249
      %v251 = vpop.xlane.xlu0 %250
      %v252 = vsub.f32 %v245, %v251
      %v253 = vmul.f32 %v252, 1.442695
      %v254 = vpow.pop %v253
      %v255 = vsel %vm248, %v254, 0.0
      %256 = vadd.xlane.f32.xlu0 %v255
      %v257 = vpop.xlane.xlu0 %256
      %v258 = vrcp.pop %v257
      %v259 = vmul.f32 %v254, %v258
      %v260 = vpack.c.bf16 %v259, %v259
      %261 = vrot.lane.b32.xlu0 %v224, 64
      %v262 = vpop.permute.xlu0 %261
      %vm263 = vcmask 39936
      %v265 = vsel %vm263, %v260, 0
      %vm267 = vcmask 1041408
      %vm268 = vcmask 1042432
      %v269 = vsel %vm267, 4294967295, 65535
      %v270 = vsel %vm268, %v269, 0
      %v272 = vand.u32 %v262, %v270
      %274 = vmatpush.bf16.msra.mxu0 0
      %275 = vmatpush.bf16.msra.mxu0 0
      %276 = vmatpush.bf16.msra.mxu0 0
      %277 = vmatpush.bf16.msra.mxu0 0
      %278 = vmatpush.bf16.msra.mxu0 0
      %279 = vmatpush.bf16.msra.mxu0 0
      %280 = vmatpush.bf16.msra.mxu0 0
      %281 = vmatpush.bf16.msra.mxu0 %v272
      %282 = vmatmul.bf16.gmra.mxu0 %v265
      %v283 = vpop.f32.mrf.mxu0
      %v284 = vadd.f32 0.0, %v283
      %v285 = vpop.f32.mrf.mxu0
      %286 = vdwg.mxu0
      %v287 = vpack.c.bf16 %v284, %v284
      %v288 = vpack.c.bf16 %v213, %v212
      %v290 = vsel %vm228, %v287, 0
      %292 = vmatpush.bf16.msra.mxu0 0
      %293 = vmatpush.bf16.msra.mxu0 0
      %294 = vmatpush.bf16.msra.mxu0 0
      %295 = vmatpush.bf16.msra.mxu0 0
      %296 = vmatpush.bf16.msra.mxu0 0
      %297 = vmatpush.bf16.msra.mxu0 0
      %298 = vmatpush.bf16.msra.mxu0 0
      %299 = vmatpush.bf16.msra.mxu0 %v288
      %300 = vmatmul.bf16.gmra.mxu0 %v290
      %v301 = vpop.f32.mrf.mxu0
      %v302 = vadd.f32 0.0, %v301
      %v303 = vpop.f32.mrf.mxu0
      %304 = vdwg.mxu0
      %v305 = vadd.f32 %v221, %v302
      %307 = vrot.lane.b32.xlu0 %v223, 112
      %v308 = vpop.permute.xlu0 %307
      %309 = vrot.lane.b32.xlu0 %v224, 80
      %v310 = vpop.permute.xlu0 %309
      %v312 = vsel %vm228, %v308, 0
      %v315 = vsel %vm228, %v310, 0
      %317 = vmatpush.bf16.xpose.msra.mxu0 0
      %318 = vmatpush.bf16.xpose.msra.mxu0 0
      %319 = vmatpush.bf16.xpose.msra.mxu0 0
      %320 = vmatpush.bf16.xpose.msra.mxu0 0
      %321 = vmatpush.bf16.xpose.msra.mxu0 0
      %322 = vmatpush.bf16.xpose.msra.mxu0 0
      %323 = vmatpush.bf16.xpose.msra.mxu0 0
      %324 = vmatpush.bf16.xpose.msra.mxu0 %v315
      %325 = vmatmul.bf16.gmra.mxu0 %v312
      %v326 = vpop.f32.mrf.mxu0
      %v327 = vadd.f32 0.0, %v326
      %v328 = vpop.f32.mrf.mxu0
      %329 = vdwg.mxu0
      %v330 = vsel %vm248, %v327, -inf
      %331 = vmax.xlane.f32.xlu0 %v330
      %v332 = vpop.xlane.xlu0 %331
      %v333 = vsub.f32 %v327, %v332
      %v334 = vmul.f32 %v333, 1.442695
      %v335 = vpow.pop %v334
      %v336 = vsel %vm248, %v335, 0.0
      %337 = vadd.xlane.f32.xlu0 %v336
      %v338 = vpop.xlane.xlu0 %337
      %v339 = vrcp.pop %v338
      %v340 = vmul.f32 %v335, %v339
      %v341 = vpack.c.bf16 %v340, %v340
      %342 = vrot.lane.b32.xlu0 %v224, 48
      %v343 = vpop.permute.xlu0 %342
      %v345 = vsel %vm263, %v341, 0
      %v348 = vand.u32 %v343, %v270
      %350 = vmatpush.bf16.msra.mxu0 0
      %351 = vmatpush.bf16.msra.mxu0 0
      %352 = vmatpush.bf16.msra.mxu0 0
      %353 = vmatpush.bf16.msra.mxu0 0
      %354 = vmatpush.bf16.msra.mxu0 0
      %355 = vmatpush.bf16.msra.mxu0 0
      %356 = vmatpush.bf16.msra.mxu0 0
      %357 = vmatpush.bf16.msra.mxu0 %v348
      %358 = vmatmul.bf16.gmra.mxu0 %v345
      %v359 = vpop.f32.mrf.mxu0
      %v360 = vadd.f32 0.0, %v359
      %v361 = vpop.f32.mrf.mxu0
      %362 = vdwg.mxu0
      %v363 = vpack.c.bf16 %v360, %v360
      %v364 = vpack.c.bf16 %v215, %v214
      %v366 = vsel %vm228, %v363, 0
      %368 = vmatpush.bf16.msra.mxu0 0
      %369 = vmatpush.bf16.msra.mxu0 0
      %370 = vmatpush.bf16.msra.mxu0 0
      %371 = vmatpush.bf16.msra.mxu0 0
      %372 = vmatpush.bf16.msra.mxu0 0
      %373 = vmatpush.bf16.msra.mxu0 0
      %374 = vmatpush.bf16.msra.mxu0 0
      %375 = vmatpush.bf16.msra.mxu0 %v364
      %376 = vmatmul.bf16.gmra.mxu0 %v366
      %v377 = vpop.f32.mrf.mxu0
      %v378 = vadd.f32 0.0, %v377
      %v379 = vpop.f32.mrf.mxu0
      %380 = vdwg.mxu0
      %v381 = vadd.f32 %v305, %v378
      %vm382 = vcmask 258048
      %383 = vst.msk [vmem:[%s209] sm:$0x1f] %vm382, %v381
      %p384 = scmp.lt.s32.totalorder %s15, 1
      %s385 = scalar_select %p384, %s15, 1
      %s386 = smul.addr %s385, 8
      %s387 = scalar_lea.vmem %s4, %s386
      // Predicated region
      $region37: #{_lambda_.31} parent=35 // pred_check
        %p388 = pneg %p127
      $region38: #{_lambda_.31} parent=35 // pred_check_branch
        %390 = sbr.rel (%p388) target = $region40
      $region39: #{_lambda_.31} parent=35 // pred_region
        _
      $region40: #{_lambda_.31} parent=35 // pred_fallthru
        _
    $region36: #{_lambda_.31} parent=5 // pred_fallthru
      _
    %p391 = scmp.le.s32.totalorder 2, %s10
    // Predicated region
    $region41: #{_lambda_.31} parent=5 // pred_check
      %p392 = pneg %p391
    $region42: #{_lambda_.31} parent=5 // pred_check_branch
      %394 = sbr.rel (%p392) target = $region44
    $region43: #{_lambda_.31} parent=5 // pred_region
      %s395 = ssub.s32 %s10, 2
      // Predicated region
      $region45: #{_lambda_.31} parent=43 // pred_check
        %p396 = pneg %p133
      $region46: #{_lambda_.31} parent=43 // pred_check_branch
        %398 = sbr.rel (%p396) target = $region48
      $region47: #{_lambda_.31} parent=43 // pred_region
        %p399 = scmp.lt.s32.totalorder %s16, 1
        %s400 = scalar_select %p399, %s16, 1
        %s401 = smul.addr %s400, 8
        %s402 = scalar_lea.vmem %s4, %s401
      $region48: #{_lambda_.31} parent=43 // pred_fallthru
        _
    $region44: #{_lambda_.31} parent=5 // pred_fallthru
      _
  $region6: #{_lambda_.31} parent=0 // loop_footer
    %s14 = sadd.s32 1, %s10
  $region7: #{_lambda_.31} parent=0 // loop_footer_branch
    %9 = sbr.rel target = $region3
  $region8: #{_lambda_.31} parent=0 // loop_exit
    _

// kernel: _lambda_.30
$region0: #{_lambda_.30}
  #allocation0 [shape = 'u32[]', space=smem, size = 0x4, offset = 0x4, fixed_abs, tag = 'smem constant byte address 0x4 - core index']
  #allocation1 [shape = 'u32[72,128]{1,0:T(1,128)}', space=vmem, size = 0x9000, scoped, tag = 'internal scratch']
  %s0 = inlined_call_operand.vmem [shape: f32[10,32], index: 0, kind: input, shape index: {}]
  %s1 = inlined_call_operand.vmem [shape: f32[1,32], index: 1, kind: input, shape index: {}]
  %s2 = inlined_call_operand.vmem [shape: f32[1,32], index: 2, kind: input, shape index: {}]
  %s3 = inlined_call_operand.vmem [shape: f32[32,96], index: 3, kind: input, shape index: {}]
  %s4 = inlined_call_operand.vmem [shape: f32[1,96], index: 4, kind: input, shape index: {}]
  %s5 = inlined_call_operand.vmem [shape: f32[10,96], index: 5, kind: output, shape index: {}]
  %s6 = sld [smem:[#allocation0]]
  $region30: #{_lambda_.30} parent=0
    _
  %s8 = ssub.s32 1, %s6
  %s9 = scalar_select 0, %s8, %s6
  // Predicated region
  $region2: #{_lambda_.30} parent=0 // pred_check
    _
  $region3: #{_lambda_.30} parent=0 // pred_check_branch
    %11 = sbr.rel (0) target = $region5
  $region4: #{_lambda_.30} parent=0 // pred_region
    _
  $region5: #{_lambda_.30} parent=0 // pred_fallthru
    _
  // Predicated region
  $region6: #{_lambda_.30} parent=0 // pred_check
    _
  $region7: #{_lambda_.30} parent=0 // pred_check_branch
    %13 = sbr.rel (0) target = $region9
  $region8: #{_lambda_.30} parent=0 // pred_region
    _
  $region9: #{_lambda_.30} parent=0 // pred_fallthru
    _
  // Predicated region
  $region10: #{_lambda_.30} parent=0 // pred_check
    _
  $region11: #{_lambda_.30} parent=0 // pred_check_branch
    %15 = sbr.rel (0) target = $region13
  $region12: #{_lambda_.30} parent=0 // pred_region
    _
  $region13: #{_lambda_.30} parent=0 // pred_fallthru
    _
  // Predicated region
  $region14: #{_lambda_.30} parent=0 // pred_check
    _
  $region15: #{_lambda_.30} parent=0 // pred_check_branch
    %17 = sbr.rel (0) target = $region17
  $region16: #{_lambda_.30} parent=0 // pred_region
    _
  $region17: #{_lambda_.30} parent=0 // pred_fallthru
    _
  // Predicated region
  $region18: #{_lambda_.30} parent=0 // pred_check
    _
  $region19: #{_lambda_.30} parent=0 // pred_check_branch
    %19 = sbr.rel (0) target = $region21
  $region20: #{_lambda_.30} parent=0 // pred_region
    _
  $region21: #{_lambda_.30} parent=0 // pred_fallthru
    _
  %v21 = vld [vmem:[%s0] sm:$0xff]
  %v22 = vld [vmem:[%s0 + $0x8] sm:$0x3]
  %vm23 = vcmask 261120
  %v24 = vsel %vm23, %v21, 0.0
  %25 = vadd.xlane.f32.xlu0 %v24
  %v26 = vpop.xlane.xlu0 %25
  %vm27 = vcmask 254976
  %v28 = vsel %vm27, %v22, 0.0
  %29 = vadd.xlane.f32.xlu0 %v28
  %v30 = vpop.xlane.xlu0 %29
  %v31 = vrcp.pop 32.0
  %v32 = vmul.f32 32.0, %v31
  %v33 = vsub.f32 1.0, %v32
  %v34 = vmul.f32 %v31, %v33
  %v35 = vadd.f32 %v31, %v34
  %vm36 = vweird.f32 %v31
  %v37 = vsel %vm36, %v31, %v35
  %v38 = vmul.f32 %v26, %v37
  %v39 = vmul.f32 %v30, %v37
  %v40 = vsub.f32 %v21, %v38
  %v41 = vsub.f32 %v22, %v39
  %v42 = vmul.f32 %v40, %v40
  %v43 = vmul.f32 %v41, %v41
  %v44 = vsel %vm23, %v42, 0.0
  %45 = vadd.xlane.f32.xlu0 %v44
  %v46 = vpop.xlane.xlu0 %45
  %v47 = vsel %vm27, %v43, 0.0
  %48 = vadd.xlane.f32.xlu0 %v47
  %v49 = vpop.xlane.xlu0 %48
  %v50 = vmul.f32 %v46, %v37
  %v51 = vmul.f32 %v49, %v37
  %v52 = vadd.f32 %v50, 1e-05
  %v53 = vadd.f32 %v51, 1e-05
  %v54 = vrsqrt.pop %v52
  %v55 = vmul.f32 %v54, %v52
  %v56 = vmul.f32 %v55, %v54
  %v57 = vmul.f32 0.5, %v56
  %v58 = vsub.f32 1.5, %v57
  %v59 = vmul.f32 %v54, %v58
  %vm60 = vweird.f32 %v52
  %vm61 = vweird.f32 %v54
  %vm62 = vmor %vm60, %vm61
  %v63 = vsel %vm62, %v54, %v59
  %v64 = vrsqrt.pop %v53
  %v65 = vmul.f32 %v64, %v53
  %v66 = vmul.f32 %v65, %v64
  %v67 = vmul.f32 0.5, %v66
  %v68 = vsub.f32 1.5, %v67
  %v69 = vmul.f32 %v64, %v68
  %vm70 = vweird.f32 %v53
  %vm71 = vweird.f32 %v64
  %vm72 = vmor %vm70, %vm71
  %v73 = vsel %vm72, %v64, %v69
  %v74 = vmul.f32 %v40, %v63
  %v75 = vmul.f32 %v41, %v73
  %v76 = vld [vmem:[%s1] sm:$0x1]
  %v78 = vperm.slane %v76, 0
  %v80 = vmul.f32 %v74, %v78
  %v81 = vmul.f32 %v75, %v78
  %v82 = vld [vmem:[%s2] sm:$0x1]
  %v84 = vperm.slane %v82, 0
  %v86 = vadd.f32 %v80, %v84
  %v87 = vadd.f32 %v81, %v84
  %v88 = vpack.c.bf16 %v87, %v86
  %v89 = vld [vmem:[%s3] sm:$0xff]
  %v90 = vld [vmem:[%s3 + $0x8] sm:$0xff]
  %v91 = vld [vmem:[%s3 + $0x10] sm:$0xff]
  %v92 = vld [vmem:[%s3 + $0x18] sm:$0xff]
  %v93 = vpack.c.bf16 %v90, %v89
  %v94 = vpack.c.bf16 %v92, %v91
  %v95 = vld [vmem:[%s4] sm:$0x1]
  %v97 = vperm.slane %v95, 0
  %v100 = vsel %vm23, %v88, 0
  %102 = vmatpush.bf16.msra.mxu0 0
  %103 = vmatpush.bf16.msra.mxu0 0
  %104 = vmatpush.bf16.msra.mxu0 0
  %105 = vmatpush.bf16.msra.mxu0 0
  %106 = vmatpush.bf16.msra.mxu0 0
  %107 = vmatpush.bf16.msra.mxu0 0
  %108 = vmatpush.bf16.msra.mxu0 %v94
  %109 = vmatpush.bf16.msra.mxu0 %v93
  %110 = vmatmul.bf16.gmra.mxu0 %v100
  %v111 = vpop.f32.mrf.mxu0
  %v112 = vadd.f32 %v97, %v111
  %v113 = vpop.f32.mrf.mxu0
  %v114 = vadd.f32 %v97, %v113
  %115 = vdwg.mxu0
  %vm116 = vcmask 785408
  %117 = vst.msk [vmem:[%s5] sm:$0xff] %vm116, %v112
  %vm118 = vcmask 779264
  %119 = vst.msk [vmem:[%s5 + $0x8] sm:$0x3] %vm118, %v114
  // Predicated region
  $region22: #{_lambda_.30} parent=0 // pred_check
    _
  $region23: #{_lambda_.30} parent=0 // pred_check_branch
    %121 = sbr.rel (0) target = $region25
  $region24: #{_lambda_.30} parent=0 // pred_region
    _
  $region25: #{_lambda_.30} parent=0 // pred_fallthru
    _
  // Predicated region
  $region26: #{_lambda_.30} parent=0 // pred_check
    _
  $region27: #{_lambda_.30} parent=0 // pred_check_branch
    %123 = sbr.rel (0) target = $region29
  $region28: #{_lambda_.30} parent=0 // pred_region
    _
  $region29: #{_lambda_.30} parent=0 // pred_fallthru
    _

// kernel: _lambda_.33
$region0: #{_lambda_.33}
  #allocation0 [shape = 'u32[]', space=smem, size = 0x4, offset = 0x4, fixed_abs, tag = 'smem constant byte address 0x4 - core index']
  #allocation1 [shape = 'u32[72,128]{1,0:T(1,128)}', space=vmem, size = 0x9000, scoped, tag = 'internal scratch']
  #allocation2 [shape = 'f32[10,32]{1,0:T(8,128)}', space=vmem, size = 0x2000, scoped, tag = 'scratch operand']
  %s0 = inlined_call_operand.vmem [shape: f32[10,64], index: 0, kind: input, shape index: {}]
  %s1 = inlined_call_operand.vmem [shape: f32[64,32], index: 1, kind: input, shape index: {}]
  %s2 = inlined_call_operand.vmem [shape: f32[1,32], index: 2, kind: input, shape index: {}]
  %s3 = inlined_call_operand.vmem [shape: f32[10,32], index: 3, kind: input, shape index: {}]
  %s4 = inlined_call_operand.vmem [shape: f32[10,32], index: 4, kind: output, shape index: {}]
  %s5 = sld [smem:[#allocation0]]
  $region34: #{_lambda_.33} parent=0
    _
  %s7 = ssub.s32 1, %s5
  %s8 = scalar_select 0, %s7, %s5
  // Predicated region
  $region2: #{_lambda_.33} parent=0 // pred_check
    _
  $region3: #{_lambda_.33} parent=0 // pred_check_branch
    %10 = sbr.rel (0) target = $region5
  $region4: #{_lambda_.33} parent=0 // pred_region
    _
  $region5: #{_lambda_.33} parent=0 // pred_fallthru
    _
  // Predicated region
  $region6: #{_lambda_.33} parent=0 // pred_check
    _
  $region7: #{_lambda_.33} parent=0 // pred_check_branch
    %12 = sbr.rel (0) target = $region9
  $region8: #{_lambda_.33} parent=0 // pred_region
    _
  $region9: #{_lambda_.33} parent=0 // pred_fallthru
    _
  // Predicated region
  $region10: #{_lambda_.33} parent=0 // pred_check
    _
  $region11: #{_lambda_.33} parent=0 // pred_check_branch
    %14 = sbr.rel (0) target = $region13
  $region12: #{_lambda_.33} parent=0 // pred_region
    _
  $region13: #{_lambda_.33} parent=0 // pred_fallthru
    _
  // Predicated region
  $region14: #{_lambda_.33} parent=0 // pred_check
    _
  $region15: #{_lambda_.33} parent=0 // pred_check_branch
    %16 = sbr.rel (0) target = $region17
  $region16: #{_lambda_.33} parent=0 // pred_region
    _
  $region17: #{_lambda_.33} parent=0 // pred_fallthru
    _
  %p18 = scmp.eq.s32.totalorder 0, 0
  // Predicated region
  $region18: #{_lambda_.33} parent=0 // pred_check
    %p19 = pneg %p18
  $region19: #{_lambda_.33} parent=0 // pred_check_branch
    %21 = sbr.rel (%p19) target = $region21
  $region20: #{_lambda_.33} parent=0 // pred_region
    %vm22 = vcmask 261120
    %23 = vst.msk [vmem:[#allocation2] sm:$0xff] %vm22, 0.0
    %vm24 = vcmask 254976
    %25 = vst.msk [vmem:[#allocation2 + $0x8] sm:$0x3] %vm24, 0.0
  $region21: #{_lambda_.33} parent=0 // pred_fallthru
    _
  %v26 = vld [vmem:[#allocation2] sm:$0xff]
  %v27 = vld [vmem:[#allocation2 + $0x8] sm:$0x3]
  %v28 = vld [vmem:[%s0] sm:$0xff]
  %v29 = vld [vmem:[%s0 + $0x8] sm:$0x3]
  %v30 = vpack.c.bf16 %v29, %v28
  %v31 = vld [vmem:[%s1] sm:$0xff]
  %v32 = vld [vmem:[%s1 + $0x8] sm:$0xff]
  %v33 = vld [vmem:[%s1 + $0x10] sm:$0xff]
  %v34 = vld [vmem:[%s1 + $0x18] sm:$0xff]
  %v35 = vld [vmem:[%s1 + $0x20] sm:$0xff]
  %v36 = vld [vmem:[%s1 + $0x28] sm:$0xff]
  %v37 = vld [vmem:[%s1 + $0x30] sm:$0xff]
  %v38 = vld [vmem:[%s1 + $0x38] sm:$0xff]
  %v39 = vpack.c.bf16 %v32, %v31
  %v40 = vpack.c.bf16 %v34, %v33
  %v41 = vpack.c.bf16 %v36, %v35
  %v42 = vpack.c.bf16 %v38, %v37
  %vm43 = vcmask 523264
  %v45 = vsel %vm43, %v30, 0
  %47 = vmatpush.bf16.msra.mxu0 0
  %48 = vmatpush.bf16.msra.mxu0 0
  %49 = vmatpush.bf16.msra.mxu0 0
  %50 = vmatpush.bf16.msra.mxu0 0
  %51 = vmatpush.bf16.msra.mxu0 %v42
  %52 = vmatpush.bf16.msra.mxu0 %v41
  %53 = vmatpush.bf16.msra.mxu0 %v40
  %54 = vmatpush.bf16.msra.mxu0 %v39
  %55 = vmatmul.bf16.gmra.mxu0 %v45
  %v56 = vpop.f32.mrf.mxu0
  %v57 = vadd.f32 0.0, %v56
  %v58 = vpop.f32.mrf.mxu0
  %v59 = vadd.f32 0.0, %v58
  %60 = vdwg.mxu0
  %v61 = vadd.f32 %v26, %v57
  %v62 = vadd.f32 %v27, %v59
  %vm63 = vcmask 261120
  %64 = vst.msk [vmem:[#allocation2] sm:$0xff] %vm63, %v61
  %vm65 = vcmask 254976
  %66 = vst.msk [vmem:[#allocation2 + $0x8] sm:$0x3] %vm65, %v62
  // Predicated region
  $region22: #{_lambda_.33} parent=0 // pred_check
    %p67 = pneg %p18
  $region23: #{_lambda_.33} parent=0 // pred_check_branch
    %69 = sbr.rel (%p67) target = $region25
  $region24: #{_lambda_.33} parent=0 // pred_region
    %v70 = vld [vmem:[#allocation2] sm:$0xff]
    %v71 = vld [vmem:[#allocation2 + $0x8] sm:$0x3]
    %v72 = vld [vmem:[%s2] sm:$0x1]
    %v74 = vperm.slane %v72, 0
    %v76 = vadd.f32 %v70, %v74
    %v77 = vadd.f32 %v71, %v74
    %v78 = vld [vmem:[%s3] sm:$0xff]
    %v79 = vld [vmem:[%s3 + $0x8] sm:$0x3]
    %v80 = vadd.f32 %v76, %v78
    %v81 = vadd.f32 %v77, %v79
    %82 = vst.msk [vmem:[%s4] sm:$0xff] %vm63, %v80
    %83 = vst.msk [vmem:[%s4 + $0x8] sm:$0x3] %vm65, %v81
  $region25: #{_lambda_.33} parent=0 // pred_fallthru
    _
  // Predicated region
  $region26: #{_lambda_.33} parent=0 // pred_check
    _
  $region27: #{_lambda_.33} parent=0 // pred_check_branch
    %85 = sbr.rel (0) target = $region29
  $region28: #{_lambda_.33} parent=0 // pred_region
    _
  $region29: #{_lambda_.33} parent=0 // pred_fallthru
    _
  // Predicated region
  $region30: #{_lambda_.33} parent=0 // pred_check
    _
  $region31: #{_lambda_.33} parent=0 // pred_check_branch
    %87 = sbr.rel (0) target = $region33
  $region32: #{_lambda_.33} parent=0 // pred_region
    _
  $region33: #{_lambda_.33} parent=0 // pred_fallthru
    _

// kernel: _lambda_.38
$region0: #{_lambda_.38}
  #allocation0 [shape = 'u32[]', space=smem, size = 0x4, offset = 0x4, fixed_abs, tag = 'smem constant byte address 0x4 - core index']
  #allocation1 [shape = 'u32[72,128]{1,0:T(1,128)}', space=vmem, size = 0x9000, scoped, tag = 'internal scratch']
  %s0 = inlined_call_operand.vmem [shape: f32[10,32], index: 0, kind: input, shape index: {}]
  %s1 = inlined_call_operand.vmem [shape: f32[1,32], index: 1, kind: input, shape index: {}]
  %s2 = inlined_call_operand.vmem [shape: f32[1,32], index: 2, kind: input, shape index: {}]
  %s3 = inlined_call_operand.vmem [shape: f32[10,32], index: 3, kind: output, shape index: {}]
  %s4 = sld [smem:[#allocation0]]
  $region22: #{_lambda_.38} parent=0
    _
  %s6 = ssub.s32 1, %s4
  %s7 = scalar_select 0, %s6, %s4
  // Predicated region
  $region2: #{_lambda_.38} parent=0 // pred_check
    _
  $region3: #{_lambda_.38} parent=0 // pred_check_branch
    %9 = sbr.rel (0) target = $region5
  $region4: #{_lambda_.38} parent=0 // pred_region
    _
  $region5: #{_lambda_.38} parent=0 // pred_fallthru
    _
  // Predicated region
  $region6: #{_lambda_.38} parent=0 // pred_check
    _
  $region7: #{_lambda_.38} parent=0 // pred_check_branch
    %11 = sbr.rel (0) target = $region9
  $region8: #{_lambda_.38} parent=0 // pred_region
    _
  $region9: #{_lambda_.38} parent=0 // pred_fallthru
    _
  // Predicated region
  $region10: #{_lambda_.38} parent=0 // pred_check
    _
  $region11: #{_lambda_.38} parent=0 // pred_check_branch
    %13 = sbr.rel (0) target = $region13
  $region12: #{_lambda_.38} parent=0 // pred_region
    _
  $region13: #{_lambda_.38} parent=0 // pred_fallthru
    _
  %v14 = vld [vmem:[%s0] sm:$0xff]
  %v15 = vld [vmem:[%s0 + $0x8] sm:$0x3]
  %vm16 = vcmask 261120
  %v17 = vsel %vm16, %v14, 0.0
  %18 = vadd.xlane.f32.xlu0 %v17
  %v19 = vpop.xlane.xlu0 %18
  %vm20 = vcmask 254976
  %v21 = vsel %vm20, %v15, 0.0
  %22 = vadd.xlane.f32.xlu0 %v21
  %v23 = vpop.xlane.xlu0 %22
  %v24 = vrcp.pop 32.0
  %v25 = vmul.f32 32.0, %v24
  %v26 = vsub.f32 1.0, %v25
  %v27 = vmul.f32 %v24, %v26
  %v28 = vadd.f32 %v24, %v27
  %vm29 = vweird.f32 %v24
  %v30 = vsel %vm29, %v24, %v28
  %v31 = vmul.f32 %v19, %v30
  %v32 = vmul.f32 %v23, %v30
  %v33 = vsub.f32 %v14, %v31
  %v34 = vsub.f32 %v15, %v32
  %v35 = vmul.f32 %v33, %v33
  %v36 = vmul.f32 %v34, %v34
  %v37 = vsel %vm16, %v35, 0.0
  %38 = vadd.xlane.f32.xlu0 %v37
  %v39 = vpop.xlane.xlu0 %38
  %v40 = vsel %vm20, %v36, 0.0
  %41 = vadd.xlane.f32.xlu0 %v40
  %v42 = vpop.xlane.xlu0 %41
  %v43 = vmul.f32 %v39, %v30
  %v44 = vmul.f32 %v42, %v30
  %v45 = vadd.f32 %v43, 1e-05
  %v46 = vadd.f32 %v44, 1e-05
  %v47 = vrsqrt.pop %v45
  %v48 = vmul.f32 %v47, %v45
  %v49 = vmul.f32 %v48, %v47
  %v50 = vmul.f32 0.5, %v49
  %v51 = vsub.f32 1.5, %v50
  %v52 = vmul.f32 %v47, %v51
  %vm53 = vweird.f32 %v45
  %vm54 = vweird.f32 %v47
  %vm55 = vmor %vm53, %vm54
  %v56 = vsel %vm55, %v47, %v52
  %v57 = vrsqrt.pop %v46
  %v58 = vmul.f32 %v57, %v46
  %v59 = vmul.f32 %v58, %v57
  %v60 = vmul.f32 0.5, %v59
  %v61 = vsub.f32 1.5, %v60
  %v62 = vmul.f32 %v57, %v61
  %vm63 = vweird.f32 %v46
  %vm64 = vweird.f32 %v57
  %vm65 = vmor %vm63, %vm64
  %v66 = vsel %vm65, %v57, %v62
  %v67 = vmul.f32 %v33, %v56
  %v68 = vmul.f32 %v34, %v66
  %v69 = vld [vmem:[%s1] sm:$0x1]
  %v71 = vperm.slane %v69, 0
  %v73 = vmul.f32 %v67, %v71
  %v74 = vmul.f32 %v68, %v71
  %v75 = vld [vmem:[%s2] sm:$0x1]
  %v77 = vperm.slane %v75, 0
  %v79 = vadd.f32 %v73, %v77
  %v80 = vadd.f32 %v74, %v77
  %81 = vst.msk [vmem:[%s3] sm:$0xff] %vm16, %v79
  %82 = vst.msk [vmem:[%s3 + $0x8] sm:$0x3] %vm20, %v80
  // Predicated region
  $region14: #{_lambda_.38} parent=0 // pred_check
    _
  $region15: #{_lambda_.38} parent=0 // pred_check_branch
    %84 = sbr.rel (0) target = $region17
  $region16: #{_lambda_.38} parent=0 // pred_region
    _
  $region17: #{_lambda_.38} parent=0 // pred_fallthru
    _
  // Predicated region
  $region18: #{_lambda_.38} parent=0 // pred_check
    _
  $region19: #{_lambda_.38} parent=0 // pred_check_branch
    %86 = sbr.rel (0) target = $region21
  $region20: #{_lambda_.38} parent=0 // pred_region
    _
  $region21: #{_lambda_.38} parent=0 // pred_fallthru
    _

// kernel: _lambda_.32
$region0: #{_lambda_.32}
  #allocation0 [shape = 'u32[]', space=smem, size = 0x4, offset = 0x4, fixed_abs, tag = 'smem constant byte address 0x4 - core index']
  #allocation1 [shape = 'u32[72,128]{1,0:T(1,128)}', space=vmem, size = 0x9000, scoped, tag = 'internal scratch']
  %s0 = inlined_call_operand.vmem [shape: f32[10,32], index: 0, kind: input, shape index: {}]
  %s1 = inlined_call_operand.vmem [shape: f32[1,32], index: 1, kind: input, shape index: {}]
  %s2 = inlined_call_operand.vmem [shape: f32[1,32], index: 2, kind: input, shape index: {}]
  %s3 = inlined_call_operand.vmem [shape: f32[32,64], index: 3, kind: input, shape index: {}]
  %s4 = inlined_call_operand.vmem [shape: f32[1,64], index: 4, kind: input, shape index: {}]
  %s5 = inlined_call_operand.vmem [shape: f32[10,64], index: 5, kind: output, shape index: {}]
  %s6 = sld [smem:[#allocation0]]
  $region30: #{_lambda_.32} parent=0
    _
  %s8 = ssub.s32 1, %s6
  %s9 = scalar_select 0, %s8, %s6
  // Predicated region
  $region2: #{_lambda_.32} parent=0 // pred_check
    _
  $region3: #{_lambda_.32} parent=0 // pred_check_branch
    %11 = sbr.rel (0) target = $region5
  $region4: #{_lambda_.32} parent=0 // pred_region
    _
  $region5: #{_lambda_.32} parent=0 // pred_fallthru
    _
  // Predicated region
  $region6: #{_lambda_.32} parent=0 // pred_check
    _
  $region7: #{_lambda_.32} parent=0 // pred_check_branch
    %13 = sbr.rel (0) target = $region9
  $region8: #{_lambda_.32} parent=0 // pred_region
    _
  $region9: #{_lambda_.32} parent=0 // pred_fallthru
    _
  // Predicated region
  $region10: #{_lambda_.32} parent=0 // pred_check
    _
  $region11: #{_lambda_.32} parent=0 // pred_check_branch
    %15 = sbr.rel (0) target = $region13
  $region12: #{_lambda_.32} parent=0 // pred_region
    _
  $region13: #{_lambda_.32} parent=0 // pred_fallthru
    _
  // Predicated region
  $region14: #{_lambda_.32} parent=0 // pred_check
    _
  $region15: #{_lambda_.32} parent=0 // pred_check_branch
    %17 = sbr.rel (0) target = $region17
  $region16: #{_lambda_.32} parent=0 // pred_region
    _
  $region17: #{_lambda_.32} parent=0 // pred_fallthru
    _
  // Predicated region
  $region18: #{_lambda_.32} parent=0 // pred_check
    _
  $region19: #{_lambda_.32} parent=0 // pred_check_branch
    %19 = sbr.rel (0) target = $region21
  $region20: #{_lambda_.32} parent=0 // pred_region
    _
  $region21: #{_lambda_.32} parent=0 // pred_fallthru
    _
  %v21 = vld [vmem:[%s0] sm:$0xff]
  %v22 = vld [vmem:[%s0 + $0x8] sm:$0x3]
  %vm23 = vcmask 261120
  %v24 = vsel %vm23, %v21, 0.0
  %25 = vadd.xlane.f32.xlu0 %v24
  %v26 = vpop.xlane.xlu0 %25
  %vm27 = vcmask 254976
  %v28 = vsel %vm27, %v22, 0.0
  %29 = vadd.xlane.f32.xlu0 %v28
  %v30 = vpop.xlane.xlu0 %29
  %v31 = vrcp.pop 32.0
  %v32 = vmul.f32 32.0, %v31
  %v33 = vsub.f32 1.0, %v32
  %v34 = vmul.f32 %v31, %v33
  %v35 = vadd.f32 %v31, %v34
  %vm36 = vweird.f32 %v31
  %v37 = vsel %vm36, %v31, %v35
  %v38 = vmul.f32 %v26, %v37
  %v39 = vmul.f32 %v30, %v37
  %v40 = vsub.f32 %v21, %v38
  %v41 = vsub.f32 %v22, %v39
  %v42 = vmul.f32 %v40, %v40
  %v43 = vmul.f32 %v41, %v41
  %v44 = vsel %vm23, %v42, 0.0
  %45 = vadd.xlane.f32.xlu0 %v44
  %v46 = vpop.xlane.xlu0 %45
  %v47 = vsel %vm27, %v43, 0.0
  %48 = vadd.xlane.f32.xlu0 %v47
  %v49 = vpop.xlane.xlu0 %48
  %v50 = vmul.f32 %v46, %v37
  %v51 = vmul.f32 %v49, %v37
  %v52 = vadd.f32 %v50, 1e-05
  %v53 = vadd.f32 %v51, 1e-05
  %v54 = vrsqrt.pop %v52
  %v55 = vmul.f32 %v54, %v52
  %v56 = vmul.f32 %v55, %v54
  %v57 = vmul.f32 0.5, %v56
  %v58 = vsub.f32 1.5, %v57
  %v59 = vmul.f32 %v54, %v58
  %vm60 = vweird.f32 %v52
  %vm61 = vweird.f32 %v54
  %vm62 = vmor %vm60, %vm61
  %v63 = vsel %vm62, %v54, %v59
  %v64 = vrsqrt.pop %v53
  %v65 = vmul.f32 %v64, %v53
  %v66 = vmul.f32 %v65, %v64
  %v67 = vmul.f32 0.5, %v66
  %v68 = vsub.f32 1.5, %v67
  %v69 = vmul.f32 %v64, %v68
  %vm70 = vweird.f32 %v53
  %vm71 = vweird.f32 %v64
  %vm72 = vmor %vm70, %vm71
  %v73 = vsel %vm72, %v64, %v69
  %v74 = vmul.f32 %v40, %v63
  %v75 = vmul.f32 %v41, %v73
  %v76 = vld [vmem:[%s1] sm:$0x1]
  %v78 = vperm.slane %v76, 0
  %v80 = vmul.f32 %v74, %v78
  %v81 = vmul.f32 %v75, %v78
  %v82 = vld [vmem:[%s2] sm:$0x1]
  %v84 = vperm.slane %v82, 0
  %v86 = vadd.f32 %v80, %v84
  %v87 = vadd.f32 %v81, %v84
  %v88 = vpack.c.bf16 %v87, %v86
  %v89 = vld [vmem:[%s3] sm:$0xff]
  %v90 = vld [vmem:[%s3 + $0x8] sm:$0xff]
  %v91 = vld [vmem:[%s3 + $0x10] sm:$0xff]
  %v92 = vld [vmem:[%s3 + $0x18] sm:$0xff]
  %v93 = vpack.c.bf16 %v90, %v89
  %v94 = vpack.c.bf16 %v92, %v91
  %v95 = vld [vmem:[%s4] sm:$0x1]
  %v97 = vperm.slane %v95, 0
  %v100 = vsel %vm23, %v88, 0
  %102 = vmatpush.bf16.msra.mxu0 0
  %103 = vmatpush.bf16.msra.mxu0 0
  %104 = vmatpush.bf16.msra.mxu0 0
  %105 = vmatpush.bf16.msra.mxu0 0
  %106 = vmatpush.bf16.msra.mxu0 0
  %107 = vmatpush.bf16.msra.mxu0 0
  %108 = vmatpush.bf16.msra.mxu0 %v94
  %109 = vmatpush.bf16.msra.mxu0 %v93
  %110 = vmatmul.bf16.gmra.mxu0 %v100
  %v111 = vpop.f32.mrf.mxu0
  %v112 = vadd.f32 %v97, %v111
  %v113 = vpop.f32.mrf.mxu0
  %v114 = vadd.f32 %v97, %v113
  %115 = vdwg.mxu0
  %v116 = vmul.f32 %v112, 0.5
  %v117 = vmul.f32 %v114, 0.5
  %v118 = vmul.f32 %v112, 0.70710677
  %v119 = vmul.f32 %v114, 0.70710677
  %v120 = vmul.f32 %v118, %v118
  %v121 = vmin.f32 16.0, %v120
  %v122 = vmul.f32 %v121, 2.1237322e-06
  %v123 = vadd.f32 %v122, 0.00028619796
  %v124 = vmul.f32 %v121, %v123
  %v125 = vadd.f32 %v124, 0.0036580483
  %v126 = vmul.f32 %v121, %v125
  %v127 = vadd.f32 %v126, 0.05243302
  %v128 = vmul.f32 %v121, %v127
  %v129 = vadd.f32 %v128, 0.18741608
  %v130 = vmul.f32 %v121, %v129
  %v131 = vadd.f32 %v130, 1.1283791
  %v132 = vmul.f32 %v118, %v131
  %v133 = vmul.f32 %v121, 3.8918573e-05
  %v134 = vadd.f32 %v133, 0.001143296
  %v135 = vmul.f32 %v121, %v134
  %v136 = vadd.f32 %v135, 0.014752088
  %v137 = vmul.f32 %v121, %v136
  %v138 = vadd.f32 %v137, 0.112945676
  %v139 = vmul.f32 %v121, %v138
  %v140 = vadd.f32 %v139, 0.4994258
  %v141 = vmul.f32 %v121, %v140
  %v142 = vadd.f32 %v141, 1.0
  %v143 = vrcp.pop %v142
  %v144 = vmul.f32 %v142, %v143
  %v145 = vsub.f32 1.0, %v144
  %v146 = vmul.f32 %v143, %v145
  %v147 = vadd.f32 %v143, %v146
  %vm148 = vweird.f32 %v142
  %vm149 = vweird.f32 %v143
  %vm150 = vmor %vm148, %vm149
  %v151 = vsel %vm150, %v143, %v147
  %v152 = vand.u32 2147483647, %v142
  %vm153 = vcmp.eq.f32.partialorder %v152, 8.507059e+37
  %v154 = vand.u32 %v142, 2147483648
  %v155 = vor.u32 1.1754944e-38, %v154
  %v156 = vsel %vm153, %v155, %v151
  %v157 = vmul.f32 %v132, %v156
  %v158 = vmin.f32 %v157, 1.0
  %v159 = vmax.f32 %v158, -1.0
  %v160 = vmul.f32 %v119, %v119
  %v161 = vmin.f32 16.0, %v160
  %v162 = vmul.f32 %v161, 2.1237322e-06
  %v163 = vadd.f32 %v162, 0.00028619796
  %v164 = vmul.f32 %v161, %v163
  %v165 = vadd.f32 %v164, 0.0036580483
  %v166 = vmul.f32 %v161, %v165
  %v167 = vadd.f32 %v166, 0.05243302
  %v168 = vmul.f32 %v161, %v167
  %v169 = vadd.f32 %v168, 0.18741608
  %v170 = vmul.f32 %v161, %v169
  %v171 = vadd.f32 %v170, 1.1283791
  %v172 = vmul.f32 %v119, %v171
  %v173 = vmul.f32 %v161, 3.8918573e-05
  %v174 = vadd.f32 %v173, 0.001143296
  %v175 = vmul.f32 %v161, %v174
  %v176 = vadd.f32 %v175, 0.014752088
  %v177 = vmul.f32 %v161, %v176
  %v178 = vadd.f32 %v177, 0.112945676
  %v179 = vmul.f32 %v161, %v178
  %v180 = vadd.f32 %v179, 0.4994258
  %v181 = vmul.f32 %v161, %v180
  %v182 = vadd.f32 %v181, 1.0
  %v183 = vrcp.pop %v182
  %v184 = vmul.f32 %v182, %v183
  %v185 = vsub.f32 1.0, %v184
  %v186 = vmul.f32 %v183, %v185
  %v187 = vadd.f32 %v183, %v186
  %vm188 = vweird.f32 %v182
  %vm189 = vweird.f32 %v183
  %vm190 = vmor %vm188, %vm189
  %v191 = vsel %vm190, %v183, %v187
  %v192 = vand.u32 2147483647, %v182
  %vm193 = vcmp.eq.f32.partialorder %v192, 8.507059e+37
  %v194 = vand.u32 %v182, 2147483648
  %v195 = vor.u32 1.1754944e-38, %v194
  %v196 = vsel %vm193, %v195, %v191
  %v197 = vmul.f32 %v172, %v196
  %v198 = vmin.f32 %v197, 1.0
  %v199 = vmax.f32 %v198, -1.0
  %v200 = vadd.f32 %v159, 1.0
  %v201 = vadd.f32 %v199, 1.0
  %v202 = vmul.f32 %v116, %v200
  %v203 = vmul.f32 %v117, %v201
  %vm204 = vcmask 523264
  %205 = vst.msk [vmem:[%s5] sm:$0xff] %vm204, %v202
  %vm206 = vcmask 517120
  %207 = vst.msk [vmem:[%s5 + $0x8] sm:$0x3] %vm206, %v203
  // Predicated region
  $region22: #{_lambda_.32} parent=0 // pred_check
    _
  $region23: #{_lambda_.32} parent=0 // pred_check_branch
    %209 = sbr.rel (0) target = $region25
  $region24: #{_lambda_.32} parent=0 // pred_region
    _
  $region25: #{_lambda_.32} parent=0 // pred_fallthru
    _
  // Predicated region
  $region26: #{_lambda_.32} parent=0 // pred_check
    _
  $region27: #{_lambda_.32} parent=0 // pred_check_branch
    %211 = sbr.rel (0) target = $region29
  $region28: #{_lambda_.32} parent=0 // pred_region
    _
  $region29: #{_lambda_.32} parent=0 // pred_fallthru
    _

// kernel: _lambda_.39
$region0: #{_lambda_.39}
  #allocation0 [shape = 'u32[]', space=smem, size = 0x4, offset = 0x4, fixed_abs, tag = 'smem constant byte address 0x4 - core index']
  #allocation1 [shape = 'u32[72,128]{1,0:T(1,128)}', space=vmem, size = 0x9000, scoped, tag = 'internal scratch']
  %s0 = inlined_call_operand.vmem [shape: f32[2,32], index: 0, kind: input, shape index: {}]
  %s1 = inlined_call_operand.vmem [shape: f32[1,32], index: 1, kind: input, shape index: {}]
  %s2 = inlined_call_operand.vmem [shape: f32[1,32], index: 2, kind: input, shape index: {}]
  %s3 = inlined_call_operand.vmem [shape: f32[32,5], index: 3, kind: input, shape index: {}]
  %s4 = inlined_call_operand.vmem [shape: f32[1,5], index: 4, kind: input, shape index: {}]
  %s5 = inlined_call_operand.hbm [shape: f32[2,5], index: 5, kind: output, shape index: {}]
  %s6 = sld [smem:[#allocation0]]
  $region30: #{_lambda_.39} parent=0
    _
  %s8 = ssub.s32 1, %s6
  %s9 = scalar_select 0, %s8, %s6
  $region1: #{_lambda_.39} parent=0
    #allocation2 [shape = 'u8[1024]{0}', space=vmem, size = 0x400, scoped, tag = 'output window, operand 0, single buffered']
    #allocation3 [shape = 's32[1]{0}', space=sflag, size = 0x4, scoped, tag = 'scoped memory for _lambda_.39']
    %10 = vsyncpa [#allocation3], 0
    // Predicated region
    $region2: #{_lambda_.39} parent=1 // pred_check
      _
    $region3: #{_lambda_.39} parent=1 // pred_check_branch
      %12 = sbr.rel (0) target = $region5
    $region4: #{_lambda_.39} parent=1 // pred_region
      _
    $region5: #{_lambda_.39} parent=1 // pred_fallthru
      _
    // Predicated region
    $region6: #{_lambda_.39} parent=1 // pred_check
      _
    $region7: #{_lambda_.39} parent=1 // pred_check_branch
      %14 = sbr.rel (0) target = $region9
    $region8: #{_lambda_.39} parent=1 // pred_region
      _
    $region9: #{_lambda_.39} parent=1 // pred_fallthru
      _
    // Predicated region
    $region10: #{_lambda_.39} parent=1 // pred_check
      _
    $region11: #{_lambda_.39} parent=1 // pred_check_branch
      %16 = sbr.rel (0) target = $region13
    $region12: #{_lambda_.39} parent=1 // pred_region
      _
    $region13: #{_lambda_.39} parent=1 // pred_fallthru
      _
    // Predicated region
    $region14: #{_lambda_.39} parent=1 // pred_check
      _
    $region15: #{_lambda_.39} parent=1 // pred_check_branch
      %18 = sbr.rel (0) target = $region17
    $region16: #{_lambda_.39} parent=1 // pred_region
      _
    $region17: #{_lambda_.39} parent=1 // pred_fallthru
      _
    // Predicated region
    $region18: #{_lambda_.39} parent=1 // pred_check
      _
    $region19: #{_lambda_.39} parent=1 // pred_check_branch
      %20 = sbr.rel (0) target = $region21
    $region20: #{_lambda_.39} parent=1 // pred_region
      _
    $region21: #{_lambda_.39} parent=1 // pred_fallthru
      _
    %v22 = vld [vmem:[%s0] sm:$0x3]
    %vm23 = vcmask 254976
    %v24 = vsel %vm23, %v22, 0.0
    %25 = vadd.xlane.f32.xlu0 %v24
    %v26 = vpop.xlane.xlu0 %25
    %v27 = vrcp.pop 32.0
    %v28 = vmul.f32 32.0, %v27
    %v29 = vsub.f32 1.0, %v28
    %v30 = vmul.f32 %v27, %v29
    %v31 = vadd.f32 %v27, %v30
    %vm32 = vweird.f32 %v27
    %v33 = vsel %vm32, %v27, %v31
    %v34 = vmul.f32 %v26, %v33
    %v35 = vsub.f32 %v22, %v34
    %v36 = vmul.f32 %v35, %v35
    %v37 = vsel %vm23, %v36, 0.0
    %38 = vadd.xlane.f32.xlu0 %v37
    %v39 = vpop.xlane.xlu0 %38
    %v40 = vmul.f32 %v39, %v33
    %v41 = vadd.f32 %v40, 1e-05
    %v42 = vrsqrt.pop %v41
    %v43 = vmul.f32 %v42, %v41
    %v44 = vmul.f32 %v43, %v42
    %v45 = vmul.f32 0.5, %v44
    %v46 = vsub.f32 1.5, %v45
    %v47 = vmul.f32 %v42, %v46
    %vm48 = vweird.f32 %v41
    %vm49 = vweird.f32 %v42
    %vm50 = vmor %vm48, %vm49
    %v51 = vsel %vm50, %v42, %v47
    %v52 = vmul.f32 %v35, %v51
    %v53 = vld [vmem:[%s1] sm:$0x1]
    %v55 = vperm.slane %v53, 0
    %v57 = vmul.f32 %v52, %v55
    %v58 = vld [vmem:[%s2] sm:$0x1]
    %v60 = vperm.slane %v58, 0
    %v62 = vadd.f32 %v57, %v60
    %v63 = vpack.c.bf16 %v62, %v62
    %v64 = vld [vmem:[%s3] sm:$0xff]
    %v65 = vld [vmem:[%s3 + $0x8] sm:$0xff]
    %v66 = vld [vmem:[%s3 + $0x10] sm:$0xff]
    %v67 = vld [vmem:[%s3 + $0x18] sm:$0xff]
    %v68 = vpack.c.bf16 %v65, %v64
    %v69 = vpack.c.bf16 %v67, %v66
    %v70 = vld [vmem:[%s4] sm:$0x1]
    %v72 = vperm.slane %v70, 0
    %vm74 = vcmask 261120
    %v76 = vsel %vm74, %v63, 0
    %78 = vmatpush.bf16.msra.mxu0 0
    %79 = vmatpush.bf16.msra.mxu0 0
    %80 = vmatpush.bf16.msra.mxu0 0
    %81 = vmatpush.bf16.msra.mxu0 0
    %82 = vmatpush.bf16.msra.mxu0 0
    %83 = vmatpush.bf16.msra.mxu0 0
    %84 = vmatpush.bf16.msra.mxu0 %v69
    %85 = vmatpush.bf16.msra.mxu0 %v68
    %86 = vmatmul.bf16.gmra.mxu0 %v76
    %v87 = vpop.f32.mrf.mxu0
    %v88 = vadd.f32 %v72, %v87
    %v89 = vpop.f32.mrf.mxu0
    %90 = vdwg.mxu0
    %vm91 = vcmask 33792
    %92 = vst.msk [vmem:[#allocation2] sm:$0x3] %vm91, %v88
    // Predicated region
    $region22: #{_lambda_.39} parent=1 // pred_check
      _
    $region23: #{_lambda_.39} parent=1 // pred_check_branch
      %94 = sbr.rel (0) target = $region25
    $region24: #{_lambda_.39} parent=1 // pred_region
      %96 = vsyncadd [#allocation3], 0
      %s98 = sshll.u32 [#allocation2], 4
      %s99 = int_to_ptr.vmem [resolvable:$true] %s98
      %s100 = sshll.u32 %s5, 4
      %s101 = int_to_ptr.hbm [resolvable:$true] %s100
      %103 = dma.vmem_to_hbm [thread:$0]  %s99, 32, %s101, [#allocation3]
    $region25: #{_lambda_.39} parent=1 // pred_fallthru
      _
    // Predicated region
    $region26: #{_lambda_.39} parent=1 // pred_check
      _
    $region27: #{_lambda_.39} parent=1 // pred_check_branch
      %105 = sbr.rel (0) target = $region29
    $region28: #{_lambda_.39} parent=1 // pred_region
      %107 = dma.done [#allocation3], 32
    $region29: #{_lambda_.39} parent=1 // pred_fallthru
      _
    %108 = vsyncpa [#allocation3], 1

</llo_original>
